<compile_context>
chip_gen: v6e
topology: v6e:2x2x1
jax: 0.10.0
libtpu: 0.0.40
codegen_flags: <defaults>
</compile_context>

<pallas_src>
import functools

import jax
import jax.numpy as jnp
from jax.experimental import pallas as pl
from jax.experimental.pallas import tpu as pltpu

IN_DIM = 3247      # node feature dim (conv1 input)
EXP_DIM = 7993     # expression vector dim (encoder input)
HID = 512          # GATv2 out_channels
HEADS = 3          # GATv2 heads
NEG_SLOPE = 0.2    # GATv2 default leaky_relu slope

TN_CAP = 1024                    # max output-tile width for streamed linears
W_TILE_BUDGET = 6 * 1024 * 1024  # int8 W tile bytes (x2 buffers + bf16 dequant temp fits VMEM)
VMEM_LIMIT = 32 * 1024 * 1024    # scoped VMEM request (safe on v5e/v6e/v7x)
DC_ATTN = 128                    # D-chunk width inside the attention kernel


def _round_up(x, m):
    return (x + m - 1) // m * m


def _pad_dim(d):
    # 128-aligned padding for both K and N: padded dims of consecutive layers
    # line up (same rule everywhere) so activations stay padded end-to-end,
    # and we stream ~7% fewer conv1 weight bytes than 512-aligned padding.
    return _round_up(d, 128)


def _largest_tile(dim_p, cap):
    """Largest multiple of 128 that divides dim_p and is <= cap."""
    best = 128
    t = 128
    while t <= min(cap, dim_p):
        if dim_p % t == 0:
            best = t
        t += 128
    return best


def _choose_tn(Kp, Np):
    # Cap the int8 weight tile so (2 x int8 buffers + 1 x bf16 dequant temp +
    # resident x) stays well inside the 32 MiB scoped-VMEM request.
    # No even-grid halving: fewer, larger weight DMAs win on the single-TC
    # chips (v5e/v6e); on v7x the "parallel" axis still shards across cores.
    cap = TN_CAP
    while cap > 128 and Kp * cap > W_TILE_BUDGET:
        cap //= 2
    return _largest_tile(Np, cap)


# ----------------------------------------------------------------------------
# Streamed Linear kernel:  Y_tile = relu?( (X @ dequant(W_tile)) * scale + b )
#   * x is the FULL padded bf16 activation (constant index map -> resident in
#     VMEM, one DMA per layer); only the int8 weight column-tile streams.
#   * Full-K tiles -> no reduction grid axis, no accumulator scratch.
# ----------------------------------------------------------------------------
def _linear_kernel(x_ref, w_ref, s_ref, b_ref, o_ref, *, relu):
    x = x_ref[...]                                            # (Mp, Kp) bf16, resident
    w = w_ref[...].astype(jnp.bfloat16)                       # int8 -> bf16 dequant (unit scale)
    y = jnp.dot(x, w, preferred_element_type=jnp.float32)     # (Mp, tn) f32 accumulation
    y = y * s_ref[...] + b_ref[...]                           # per-output-column scale + bias
    if relu:
        y = jnp.maximum(y, 0.0)
    o_ref[...] = y.astype(o_ref.dtype)


def _quantize_int8(w):
    """Symmetric per-output-column int8 quantisation."""
    absmax = jnp.max(jnp.abs(w), axis=0)                      # (No,)
    scale = jnp.where(absmax > 0.0, absmax / 127.0, 1.0)
    w_q = jnp.clip(jnp.round(w / scale[None, :]), -127.0, 127.0).astype(jnp.int8)
    return w_q, scale.astype(jnp.float32)


def _prep_linear(w, b):
    """Pad + int8-quantise a (K, No) weight once at init time (hoisted)."""
    K, No = w.shape
    Kp, Np = _pad_dim(K), _pad_dim(No)
    tn = _choose_tn(Kp, Np)
    w_q, scale = _quantize_int8(w.astype(jnp.float32))
    w_p = jnp.zeros((Kp, Np), jnp.int8).at[:K, :No].set(w_q)
    s_p = jnp.zeros((1, Np), jnp.float32).at[0, :No].set(scale)
    b_p = jnp.zeros((1, Np), jnp.float32).at[0, :No].set(b.astype(jnp.float32))
    return {"w": w_p, "scale": s_p, "b": b_p,
            "K": K, "No": No, "Kp": Kp, "Np": Np, "tn": tn}


def linear_padded(x_p, layer, *, relu=False):
    """x_p: [Mp, Kp] bf16 (padded) -> [Mp, Np] bf16 (padded)."""
    Mp, Kp = x_p.shape
    assert Kp == layer["Kp"], (Kp, layer["Kp"])
    tn, Np = layer["tn"], layer["Np"]

    return pl.pallas_call(
        functools.partial(_linear_kernel, relu=relu),
        out_shape=jax.ShapeDtypeStruct((Mp, Np), jnp.bfloat16),
        grid_spec=pltpu.PrefetchScalarGridSpec(
            num_scalar_prefetch=0,
            grid=(Np // tn,),
            in_specs=[
                pl.BlockSpec((Mp, Kp), lambda j: (0, 0)),    # x: resident, one DMA
                pl.BlockSpec((Kp, tn), lambda j: (0, j)),    # W: streamed (int8)
                pl.BlockSpec((1, tn), lambda j: (0, j)),     # per-column scale
                pl.BlockSpec((1, tn), lambda j: (0, j)),     # bias
            ],
            out_specs=pl.BlockSpec((Mp, tn), lambda j: (0, j)),
        ),
        compiler_params=pltpu.CompilerParams(
            dimension_semantics=("parallel",),
            vmem_limit_bytes=VMEM_LIMIT),
    )(x_p, layer["w"], layer["scale"], layer["b"])


# ----------------------------------------------------------------------------
# GATv2 attention kernel. Grid = (head, target_block), heads outermost.
#   e_ij   = att_h . LeakyReLU(xl[j] + xr[i])        (j = source, i = target)
#   alpha  = softmax_j(e_ij)  over neighbors of i (dense mask, self-loops)
#   out_i  = relu( sum_j alpha_ij * xl[j] + bias_h )
# ----------------------------------------------------------------------------
def _gatv2_attn_kernel(xl_ref, xr_ref, att_ref, bias_ref, adj_ref, o_ref):
    xl = xl_ref[...]                       # (N, D)  bf16: lin_l features, all nodes
    xr = xr_ref[...]                       # (TM, D) bf16: lin_r features, target rows
    att = att_ref[0]                       # (1, D)  f32
    mask = adj_ref[...]                    # (TM, N) f32: mask[i, j]==1 iff edge j->i

    tm, d = xr.shape
    n = xl.shape[0]

    # Build the pairwise tensor one 128-lane D-chunk at a time (bf16) so it
    # never blows the vreg file, and fold the D-reduction into a VPU mul +
    # lane-reduce per chunk (f32 accumulation of the logits).
    logits = jnp.zeros((tm, n), jnp.float32)
    for c in range(0, d, DC_ATTN):
        xl_c = xl[:, c:c + DC_ATTN]                             # (N, DC)
        xr_c = xr[:, c:c + DC_ATTN]                             # (TM, DC)
        att_c = att[:, c:c + DC_ATTN].astype(jnp.bfloat16)      # (1, DC)
        s = xr_c[:, None, :] + xl_c[None, :, :]                 # (TM, N, DC) bf16
        s = jnp.where(s >= 0, s, NEG_SLOPE * s)                 # LeakyReLU(0.2)
        prod = (s * att_c[None, :, :]).astype(jnp.float32)
        logits = logits + jnp.sum(prod, axis=-1)

    logits = jnp.where(mask > 0.0, logits, -1e30)               # dense neighbor mask
    logits = logits - jnp.max(logits, axis=-1, keepdims=True)
    p = jnp.exp(logits)
    alpha = p * pl.reciprocal(jnp.sum(p, axis=-1, keepdims=True), approx=True)

    out = jnp.dot(alpha.astype(jnp.bfloat16), xl,
                  preferred_element_type=jnp.float32)           # (TM, D)
    out = out + bias_ref[0]                                     # per-head GATv2 bias
    o_ref[...] = jnp.maximum(out, 0.0).astype(o_ref.dtype)      # outer torch.relu


def gatv2_layer(x_p, adj, layer, tm):
    """x_p: [n_p, Kp] bf16 -> [n_p, HEADS*HID] bf16 (relu applied)."""
    n_p = x_p.shape[0]
    d = HID

    # Fused lin_l | lin_r projection: (n_p, 2*HEADS*HID) bf16.  The attention
    # kernel slices per-head column blocks straight out of this array via its
    # BlockSpecs, so no [H, N, D] transposes / relayouts are needed.
    lr = linear_padded(x_p, layer["lin_lr"])

    out = pl.pallas_call(
        _gatv2_attn_kernel,
        out_shape=jax.ShapeDtypeStruct((n_p, HEADS * d), jnp.bfloat16),
        grid_spec=pltpu.PrefetchScalarGridSpec(
            num_scalar_prefetch=0,
            # heads outermost: the per-head xl / att / bias blocks stay resident
            # across all target tiles (no per-step re-DMA of xl).
            grid=(HEADS, n_p // tm),
            in_specs=[
                # lin_l head-h column block, all rows (source features)
                pl.BlockSpec((n_p, d), lambda h, t: (0, h)),
                # lin_r head-h column block, target rows
                pl.BlockSpec((tm, d), lambda h, t: (t, HEADS + h)),
                pl.BlockSpec((1, 1, d), lambda h, t: (h, 0, 0)),   # att
                pl.BlockSpec((1, 1, d), lambda h, t: (h, 0, 0)),   # bias
                pl.BlockSpec((tm, n_p), lambda h, t: (t, 0)),      # adj target rows
            ],
            out_specs=pl.BlockSpec((tm, d), lambda h, t: (t, h)),
        ),
        compiler_params=pltpu.CompilerParams(
            dimension_semantics=("parallel", "arbitrary"),
            vmem_limit_bytes=VMEM_LIMIT),
    )(lr, lr, layer["att"], layer["bias"], adj)
    return out


# ----------------------------------------------------------------------------
# Fused tail head: relu(lin1) -> relu(lin2) -> lin3 in ONE pallas_call.
# All int8 weights (~2.7 MiB) + the tiny activations stay resident in VMEM.
# ----------------------------------------------------------------------------
def _tail_kernel(x_ref, w1_ref, s1_ref, b1_ref, w2_ref, s2_ref, b2_ref,
                 w3_ref, s3_ref, b3_ref, o_ref):
    def dense(h, w_ref, s_ref, b_ref):
        y = jnp.dot(h, w_ref[...].astype(jnp.bfloat16),
                    preferred_element_type=jnp.float32)
        return y * s_ref[...] + b_ref[...]

    h = jnp.maximum(dense(x_ref[...], w1_ref, s1_ref, b1_ref), 0.0)               # lin1+relu
    h = jnp.maximum(dense(h.astype(jnp.bfloat16), w2_ref, s2_ref, b2_ref), 0.0)   # lin2+relu
    o_ref[...] = dense(h.astype(jnp.bfloat16), w3_ref, s3_ref, b3_ref)            # lin3


def tail_heads(x_p, l1, l2, l3):
    Mp, Kp = x_p.shape
    assert Kp == l1["Kp"], (Kp, l1["Kp"])
    return pl.pallas_call(
        _tail_kernel,
        out_shape=jax.ShapeDtypeStruct((Mp, l3["Np"]), jnp.float32),
        compiler_params=pltpu.CompilerParams(vmem_limit_bytes=VMEM_LIMIT),
    )(x_p, l1["w"], l1["scale"], l1["b"],
      l2["w"], l2["scale"], l2["b"],
      l3["w"], l3["scale"], l3["b"])


# ----------------------------------------------------------------------------
# Full forward pass of `Net` (single padded bf16 node layout end-to-end)
# ----------------------------------------------------------------------------
def _node_tiles(n):
    """Padded node count and target-tile size for the attention grid."""
    if n <= 128:
        n_p = _round_up(n, 8)
        return n_p, n_p                    # one target block
    n_p = _round_up(n, 128)
    tm = 128
    # Cap the per-chunk (tm, n_p, DC) bf16 pairwise tensor at ~4 MiB.
    # TODO(synk): for very large graphs also chunk the source axis (online softmax).
    while tm > 8 and tm * n_p * DC_ATTN * 2 > (4 << 20):
        tm //= 2
    return n_p, tm


def build_adj(edge_index, n_p):
    """Dense adjacency mask adj[i, j] = 1 iff edge j->i; self-loops added."""
    # TODO(synk): parallel (duplicate) edges are deduplicated here; PyG GATv2Conv
    # would count each duplicate separately in the softmax.
    adj = jnp.zeros((n_p, n_p), jnp.float32)
    adj = adj.at[edge_index[1], edge_index[0]].set(1.0)
    diag = jnp.arange(n_p)
    adj = adj.at[diag, diag].set(1.0)
    return adj


def net_forward(x, edge_index, exp, prep):
    n = x.shape[0]
    n_p, tm = _node_tiles(n)
    adj = build_adj(edge_index, n_p)

    # Pad + cast inputs once; activations stay bf16 and padded end-to-end.
    x_p = jnp.zeros((n_p, prep["conv1"]["lin_lr"]["Kp"]), jnp.bfloat16)
    x_p = x_p.at[:n, :x.shape[1]].set(x.astype(jnp.bfloat16))
    e_p = jnp.zeros((n_p, prep["enc1"]["Kp"]), jnp.bfloat16)
    e_p = e_p.at[:n, :exp.shape[1]].set(exp.astype(jnp.bfloat16))

    h = gatv2_layer(x_p, adj, prep["conv1"], tm)            # relu(conv1)
    h = gatv2_layer(h, adj, prep["conv2"], tm)              # relu(conv2)
    h = gatv2_layer(h, adj, prep["conv3"], tm)              # relu(conv3)

    # encoder: Linear(7993,4000)->ReLU->Linear(4000,1500)->ReLU->Linear(1500,512)
    c = linear_padded(e_p, prep["enc1"], relu=True)
    c = linear_padded(c, prep["enc2"], relu=True)
    cell_end = linear_padded(c, prep["enc3"], relu=False)

    h = jnp.concatenate([h, cell_end], axis=1)              # (n_p, 3*512 + 512)
    out = tail_heads(h, prep["lin1"], prep["lin2"], prep["lin3"])   # fused tail
    return out[:n, :1]                                      # (N, 1) f32


# ----------------------------------------------------------------------------
# Parameter init (torch-like shapes) + one-time padding / int8 quantisation
# ----------------------------------------------------------------------------
def init_params(key):
    keys = iter(jax.random.split(key, 32))

    def dense(din, dout):
        w = jax.random.normal(next(keys), (din, dout), jnp.float32) / jnp.sqrt(float(din))
        return {"w": w, "b": jnp.zeros((dout,), jnp.float32)}

    def gat(din, dout, heads):
        scale = 1.0 / jnp.sqrt(float(din))
        return {
            "wl": jax.random.normal(next(keys), (din, heads * dout), jnp.float32) * scale,
            "bl": jnp.zeros((heads * dout,), jnp.float32),
            "wr": jax.random.normal(next(keys), (din, heads * dout), jnp.float32) * scale,
            "br": jnp.zeros((heads * dout,), jnp.float32),
            "att": jax.random.normal(next(keys), (heads, dout), jnp.float32)
            / jnp.sqrt(float(dout)),
            "bias": jnp.zeros((heads * dout,), jnp.float32),
        }

    return {
        "conv1": gat(IN_DIM, HID, HEADS),
        "conv2": gat(HEADS * HID, HID, HEADS),
        "conv3": gat(HEADS * HID, HID, HEADS),
        "enc1": dense(EXP_DIM, 4000),
        "enc2": dense(4000, 1500),
        "enc3": dense(1500, 512),
        "lin1": dense(HEADS * HID + 512, 1024),
        "lin2": dense(1024, 512),
        "lin3": dense(512, 1),
    }


def prepare_params(params):
    """Pad + int8-quantise every weight once (hoisted out of the forward)."""
    prep = {}
    for name in ("conv1", "conv2", "conv3"):
        p = params[name]
        w_lr = jnp.concatenate([p["wl"], p["wr"]], axis=1)   # fuse lin_l | lin_r
        b_lr = jnp.concatenate([p["bl"], p["br"]], axis=0)
        prep[name] = {
            "lin_lr": _prep_linear(w_lr, b_lr),
            "att": p["att"].reshape(HEADS, 1, HID).astype(jnp.float32),
            "bias": p["bias"].reshape(HEADS, 1, HID).astype(jnp.float32),
        }
    for name in ("enc1", "enc2", "enc3", "lin1", "lin2", "lin3"):
        prep[name] = _prep_linear(params[name]["w"], params[name]["b"])
    return prep


if __name__ == "__main__":
    N_NODES = 16      # small node count (graph size is the "batch" here)
    N_EDGES = 48

    key = jax.random.PRNGKey(0)
    k_x, k_exp, k_src, k_dst, k_par = jax.random.split(key, 5)

    x = jax.random.normal(k_x, (N_NODES, IN_DIM), jnp.float32)
    exp = jax.random.normal(k_exp, (N_NODES, EXP_DIM), jnp.float32)
    src = jax.random.randint(k_src, (N_EDGES,), 0, N_NODES)
    dst = jax.random.randint(k_dst, (N_EDGES,), 0, N_NODES)
    edge_index = jnp.stack([src, dst])                      # [2, E], row0=src, row1=dst

    params = init_params(k_par)
    prep = prepare_params(params)                           # one-time pad + int8 quant

    out = net_forward(x, edge_index, exp, prep)
    out = jax.block_until_ready(out)
    assert out.shape == (N_NODES, 1) and out.dtype == jnp.float32
    assert bool(jnp.all(jnp.isfinite(out)))
    print("KERNEL_OK")
</pallas_src>

<mosaic_0001>
module attributes {stable_mosaic.version = 11 : i64} {
  func.func @_linear_kernel(%arg0: i32, %arg1: memref<16x3328xbf16, #tpu.memory_space<vmem>>, %arg2: memref<3328x1024xi8, #tpu.memory_space<vmem>>, %arg3: memref<1x1024xf32, #tpu.memory_space<vmem>>, %arg4: memref<1x1024xf32, #tpu.memory_space<vmem>>, %arg5: memref<16x1024xbf16, #tpu.memory_space<vmem>>) attributes {dimension_semantics = [#tpu.dimension_semantics<parallel>], iteration_bounds = array<i64: 3>, scalar_prefetch = 0 : i64, scratch_operands = 0 : i64, tpu.core_type = #tpu.core_type<tc>, window_params = [{pipeline_mode = #tpu.pipeline_mode<synchronous>, transform_indices = @transform_0, window_bounds = array<i64: 16, 3328>}, {transform_indices = @transform_1, window_bounds = array<i64: 3328, 1024>}, {transform_indices = @transform_2, window_bounds = array<i64: 1, 1024>}, {transform_indices = @transform_3, window_bounds = array<i64: 1, 1024>}, {transform_indices = @transform_4, window_bounds = array<i64: 16, 1024>}]} {
    %c0 = arith.constant 0 : index
    %c0_0 = arith.constant 0 : index
    %0 = vector.load %arg1[%c0, %c0_0] : memref<16x3328xbf16, #tpu.memory_space<vmem>>, vector<16x3328xbf16>
    %c0_1 = arith.constant 0 : index
    %c0_2 = arith.constant 0 : index
    %1 = vector.load %arg2[%c0_1, %c0_2] : memref<3328x1024xi8, #tpu.memory_space<vmem>>, vector<3328x1024xi8>
    %2 = arith.sitofp %1 : vector<3328x1024xi8> to vector<3328x1024xbf16>
    %cst = arith.constant dense<0.000000e+00> : vector<16x1024xf32>
    %3 = tpu.matmul %0, %2, %cst {dimension_numbers = #tpu.dot_dimension_numbers<[1], [0], [0], [1], [0, 0, 1, 1], [], []>} : vector<16x3328xbf16>, vector<3328x1024xbf16>, vector<16x1024xf32> -> vector<16x1024xf32>
    %c0_3 = arith.constant 0 : index
    %c0_4 = arith.constant 0 : index
    %4 = vector.load %arg3[%c0_3, %c0_4] : memref<1x1024xf32, #tpu.memory_space<vmem>>, vector<1x1024xf32>
    %5 = vector.broadcast %4 : vector<1x1024xf32> to vector<16x1024xf32>
    %6 = arith.mulf %3, %5 : vector<16x1024xf32>
    %c0_5 = arith.constant 0 : index
    %c0_6 = arith.constant 0 : index
    %7 = vector.load %arg4[%c0_5, %c0_6] : memref<1x1024xf32, #tpu.memory_space<vmem>>, vector<1x1024xf32>
    %8 = vector.broadcast %7 : vector<1x1024xf32> to vector<16x1024xf32>
    %9 = arith.addf %6, %8 : vector<16x1024xf32>
    %10 = arith.truncf %9 : vector<16x1024xf32> to vector<16x1024xbf16>
    %c0_7 = arith.constant 0 : index
    %c0_8 = arith.constant 0 : index
    %11 = vector.load %arg5[%c0_7, %c0_8] : memref<16x1024xbf16, #tpu.memory_space<vmem>>, vector<16x1024xbf16>
    tpu.vector_store %arg5[%c0_7, %c0_8], %10 {strides = array<i32>} : memref<16x1024xbf16, #tpu.memory_space<vmem>>, vector<16x1024xbf16>,
    return
  }
  func.func @transform_0(%arg0: i32) -> (i32, i32) {
    %c0_i32 = arith.constant 0 : i32
    %c0_i32_0 = arith.constant 0 : i32
    %c0_i32_1 = arith.constant 0 : i32
    return %c0_i32, %c0_i32_0 : i32, i32
  }
  func.func @transform_1(%arg0: i32) -> (i32, i32) {
    %c0_i32 = arith.constant 0 : i32
    %c0_i32_0 = arith.constant 0 : i32
    return %c0_i32, %arg0 : i32, i32
  }
  func.func @transform_2(%arg0: i32) -> (i32, i32) {
    %c0_i32 = arith.constant 0 : i32
    %c0_i32_0 = arith.constant 0 : i32
    return %c0_i32, %arg0 : i32, i32
  }
  func.func @transform_3(%arg0: i32) -> (i32, i32) {
    %c0_i32 = arith.constant 0 : i32
    %c0_i32_0 = arith.constant 0 : i32
    return %c0_i32, %arg0 : i32, i32
  }
  func.func @transform_4(%arg0: i32) -> (i32, i32) {
    %c0_i32 = arith.constant 0 : i32
    %c0_i32_0 = arith.constant 0 : i32
    return %c0_i32, %arg0 : i32, i32
  }
}

</mosaic_0001>

<llo_original>
// kernel: tpu_custom_call.1
$region0: #{tpu_custom_call.1}
  #allocation0 [shape = 'u32[]', space=smem, size = 0x4, offset = 0x4, fixed_abs, tag = 'smem constant byte address 0x4 - core index']
  #allocation1 [shape = 'u32[144,128]{1,0:T(1,128)}', space=vmem, size = 0x12000, scoped, tag = 'internal scratch']
  %s0 = inlined_call_operand.hbm [shape: bf16[16,3328], index: 0, kind: input, shape index: {}]
  %s1 = inlined_call_operand.hbm [shape: s8[3328,3072], index: 1, kind: input, shape index: {}]
  %s2 = inlined_call_operand.hbm [shape: f32[1,3072], index: 2, kind: input, shape index: {}]
  %s3 = inlined_call_operand.hbm [shape: f32[1,3072], index: 3, kind: input, shape index: {}]
  %s4 = inlined_call_operand.hbm [shape: bf16[16,3072], index: 4, kind: output, shape index: {}]
  %s5 = sld [smem:[#allocation0]]
  $region65: #{tpu_custom_call.1} parent=0
    _
  %s7 = ssub.s32 1, %s5
  %s8 = scalar_select 0, %s7, %s5
  $region1: #{tpu_custom_call.1} parent=0
    #allocation2 [shape = 'u8[106496]{0}', space=vmem, size = 0x1a000, scoped, tag = 'input window, operand 0, single buffered']
    #allocation3 [shape = 's32[2]{0}', space=sflag, size = 0x8, scoped, tag = 'scoped memory for tpu_custom_call.1']
    #allocation4 [shape = 's32[2]{0}', space=sflag, size = 0x8, scoped, tag = 'scoped memory for tpu_custom_call.1']
    #allocation5 [shape = 'u8[6815744]{0}', space=vmem, size = 0x680000, scoped, tag = 'input window, operand 1']
    #allocation6 [shape = 's32[2]{0}', space=sflag, size = 0x8, scoped, tag = 'scoped memory for tpu_custom_call.1']
    #allocation7 [shape = 'u8[8192]{0}', space=vmem, size = 0x2000, scoped, tag = 'input window, operand 2']
    #allocation8 [shape = 'u8[8192]{0}', space=vmem, size = 0x2000, scoped, tag = 'input window, operand 3']
    #allocation9 [shape = 's32[2]{0}', space=sflag, size = 0x8, scoped, tag = 'scoped memory for tpu_custom_call.1']
    #allocation10 [shape = 'u8[65536]{0}', space=vmem, size = 0x10000, scoped, tag = 'output window, operand 0']
    %9 = vsyncpa [#allocation3], 0
    %10 = vsyncpa [#allocation6], 0
    %s11 = scalar_lea.sflag [#allocation6], 1
    %12 = vsyncpa %s11, 0
    %13 = vsyncpa [#allocation9], 0
    %s14 = scalar_lea.sflag [#allocation9], 1
    %15 = vsyncpa %s14, 0
    %16 = vsyncpa [#allocation4], 0
    %s17 = scalar_lea.sflag [#allocation4], 1
    %18 = vsyncpa %s17, 0
    loop: start=0, step=1, limit=5
    $region2: #{tpu_custom_call.1} parent=1 // loop_pre_header
      _
    $region3: #{tpu_custom_call.1} parent=1 // loop_header
      %s20 = sphi 0, %s24
      %p21 = scmp.ge.s32.totalorder %s20, 5
      %s28 = sphi 0, %s28
      %s30 = sphi 0, %s28
      %s31 = sphi 0, %s30
      %s45 = sphi 0, %s31
      %s51 = sphi 0, %s53
      %s54 = sphi 0, %s51
      %s55 = sphi 0, %s54
      %s71 = sphi 0, %s55
      %s77 = sphi 0, %s79
      %s80 = sphi 0, %s77
      %s81 = sphi 0, %s80
      %s97 = sphi 0, %s81
      %s103 = sphi 0, %s105
      %s106 = sphi 0, %s103
      %s107 = sphi 0, %s106
      %s123 = sphi 0, %s107
      %s129 = sphi 0, %s131
      %s132 = sphi 0, %s129
      %s133 = sphi 0, %s132
      %s149 = sphi 0, %s133
    $region4: #{tpu_custom_call.1} parent=1 // loop_header_branch
      %23 = sbr.rel (%p21) target = $region8
    $region5: #{tpu_custom_call.1} parent=1 // loop_body
      %s25 = ssub.s32 %s20, 1
      %s26 = ssub.s32 %s20, 2
      %s27 = sadd.s32 %s20, 1
      %s29 = sadd.s32 %s28, 1
      %p32 = scmp.eq.s32.totalorder %s20, 2
      %p33 = scmp.ne.s32.totalorder %s28, %s30
      %p34 = scmp.eq.s32.totalorder %s20, 0
      %p35 = por %p33, %p34
      %p36 = scmp.ne.s32.totalorder %s28, %s30
      %p37 = scmp.eq.s32.totalorder %s25, 2
      %p38 = por %p36, %p37
      %p39 = scmp.ne.s32.totalorder %s30, %s31
      %p40 = scmp.eq.s32.totalorder %s25, 0
      %p41 = por %p39, %p40
      %p42 = scmp.ne.s32.totalorder %s30, %s31
      %p43 = scmp.eq.s32.totalorder %s26, 2
      %p44 = por %p42, %p43
      %p46 = scmp.ne.s32.totalorder %s31, %s45
      %p47 = scmp.eq.s32.totalorder %s26, 0
      %p48 = por %p46, %p47
      %s49 = ssub.s32 %s20, %s27
      %p50 = scmp.eq.s32.totalorder %s49, 0
      %s52 = sadd.s32 %s51, 1
      %s53 = scalar_select %p50, %s51, %s52
      %p56 = pneg %p50
      %p57 = scmp.eq.s32.totalorder %s20, 2
      %p58 = por %p56, %p57
      %p59 = scmp.ne.s32.totalorder %s51, %s54
      %p60 = scmp.eq.s32.totalorder %s20, 0
      %p61 = por %p59, %p60
      %p62 = scmp.ne.s32.totalorder %s51, %s54
      %p63 = scmp.eq.s32.totalorder %s25, 2
      %p64 = por %p62, %p63
      %p65 = scmp.ne.s32.totalorder %s54, %s55
      %p66 = scmp.eq.s32.totalorder %s25, 0
      %p67 = por %p65, %p66
      %p68 = scmp.ne.s32.totalorder %s54, %s55
      %p69 = scmp.eq.s32.totalorder %s26, 2
      %p70 = por %p68, %p69
      %p72 = scmp.ne.s32.totalorder %s55, %s71
      %p73 = scmp.eq.s32.totalorder %s26, 0
      %p74 = por %p72, %p73
      %s75 = ssub.s32 %s20, %s27
      %p76 = scmp.eq.s32.totalorder %s75, 0
      %s78 = sadd.s32 %s77, 1
      %s79 = scalar_select %p76, %s77, %s78
      %p82 = pneg %p76
      %p83 = scmp.eq.s32.totalorder %s20, 2
      %p84 = por %p82, %p83
      %p85 = scmp.ne.s32.totalorder %s77, %s80
      %p86 = scmp.eq.s32.totalorder %s20, 0
      %p87 = por %p85, %p86
      %p88 = scmp.ne.s32.totalorder %s77, %s80
      %p89 = scmp.eq.s32.totalorder %s25, 2
      %p90 = por %p88, %p89
      %p91 = scmp.ne.s32.totalorder %s80, %s81
      %p92 = scmp.eq.s32.totalorder %s25, 0
      %p93 = por %p91, %p92
      %p94 = scmp.ne.s32.totalorder %s80, %s81
      %p95 = scmp.eq.s32.totalorder %s26, 2
      %p96 = por %p94, %p95
      %p98 = scmp.ne.s32.totalorder %s81, %s97
      %p99 = scmp.eq.s32.totalorder %s26, 0
      %p100 = por %p98, %p99
      %s101 = ssub.s32 %s20, %s27
      %p102 = scmp.eq.s32.totalorder %s101, 0
      %s104 = sadd.s32 %s103, 1
      %s105 = scalar_select %p102, %s103, %s104
      %p108 = pneg %p102
      %p109 = scmp.eq.s32.totalorder %s20, 2
      %p110 = por %p108, %p109
      %p111 = scmp.ne.s32.totalorder %s103, %s106
      %p112 = scmp.eq.s32.totalorder %s20, 0
      %p113 = por %p111, %p112
      %p114 = scmp.ne.s32.totalorder %s103, %s106
      %p115 = scmp.eq.s32.totalorder %s25, 2
      %p116 = por %p114, %p115
      %p117 = scmp.ne.s32.totalorder %s106, %s107
      %p118 = scmp.eq.s32.totalorder %s25, 0
      %p119 = por %p117, %p118
      %p120 = scmp.ne.s32.totalorder %s106, %s107
      %p121 = scmp.eq.s32.totalorder %s26, 2
      %p122 = por %p120, %p121
      %p124 = scmp.ne.s32.totalorder %s107, %s123
      %p125 = scmp.eq.s32.totalorder %s26, 0
      %p126 = por %p124, %p125
      %s127 = ssub.s32 %s20, %s27
      %p128 = scmp.eq.s32.totalorder %s127, 0
      %s130 = sadd.s32 %s129, 1
      %s131 = scalar_select %p128, %s129, %s130
      %p134 = pneg %p128
      %p135 = scmp.eq.s32.totalorder %s20, 2
      %p136 = por %p134, %p135
      %p137 = scmp.ne.s32.totalorder %s129, %s132
      %p138 = scmp.eq.s32.totalorder %s20, 0
      %p139 = por %p137, %p138
      %p140 = scmp.ne.s32.totalorder %s129, %s132
      %p141 = scmp.eq.s32.totalorder %s25, 2
      %p142 = por %p140, %p141
      %p143 = scmp.ne.s32.totalorder %s132, %s133
      %p144 = scmp.eq.s32.totalorder %s25, 0
      %p145 = por %p143, %p144
      %p146 = scmp.ne.s32.totalorder %s132, %s133
      %p147 = scmp.eq.s32.totalorder %s26, 2
      %p148 = por %p146, %p147
      %p150 = scmp.ne.s32.totalorder %s133, %s149
      %p151 = scmp.eq.s32.totalorder %s26, 0
      %p152 = por %p150, %p151
      %p153 = scmp.le.s32.totalorder 1, %s20
      %p154 = scmp.lt.s32.totalorder %s20, 4
      %p155 = pnand %p153, %p154
      %p156 = pneg %p155
      // Predicated region
      $region9: #{tpu_custom_call.1} parent=5 // pred_check
        _
      $region10: #{tpu_custom_call.1} parent=5 // pred_check_branch
        %158 = sbr.rel (%p155) target = $region12
      $region11: #{tpu_custom_call.1} parent=5 // pred_region
        %s159 = ssub.s32 %s20, 1
        // Predicated region
        $region13: #{tpu_custom_call.1} parent=11 // pred_check
          %p160 = pneg %p41
        $region14: #{tpu_custom_call.1} parent=11 // pred_check_branch
          %162 = sbr.rel (%p160) target = $region16
        $region15: #{tpu_custom_call.1} parent=11 // pred_region
          %s164 = ssub.s32 3328, 3328
          %165 = vsyncadd [#allocation3], %s164
          %s166 = sshll.u32 [#allocation2], 4
          %s167 = int_to_ptr.vmem [resolvable:$true] %s166
          %172 = dma.hbm_to_vmem [thread:$0]  %s0, 3328, %s167, [#allocation3], 1664, 1664, 104
        $region16: #{tpu_custom_call.1} parent=11 // pred_fallthru
          _
      $region12: #{tpu_custom_call.1} parent=5 // pred_fallthru
        _
      %p173 = scmp.lt.s32.totalorder %s20, 3
      // Predicated region
      $region17: #{tpu_custom_call.1} parent=5 // pred_check
        %p174 = pneg %p173
      $region18: #{tpu_custom_call.1} parent=5 // pred_check_branch
        %176 = sbr.rel (%p174) target = $region20
      $region19: #{tpu_custom_call.1} parent=5 // pred_region
        // Predicated region
        $region21: #{tpu_custom_call.1} parent=19 // pred_check
          %p177 = pneg %p61
        $region22: #{tpu_custom_call.1} parent=19 // pred_check_branch
          %179 = sbr.rel (%p177) target = $region24
        $region23: #{tpu_custom_call.1} parent=19 // pred_region
          %s180 = sand.u32 %s20, 1
          %s181 = scalar_lea.sflag [#allocation6], %s180
          %s182 = sand.u32 %s51, 1
          %s183 = smul.addr %s182, 6656
          %s184 = scalar_lea.vmem [#allocation5], %s183
          %s185 = smul.u32 8, %s20
          %s187 = ssub.s32 106496, 106496
          %188 = vsyncadd %s181, %s187
          %s189 = smul.addr %s185, 128
          %s190 = scalar_lea.hbm %s1, %s189
          %s191 = sshll.u32 %s184, 4
          %s192 = int_to_ptr.vmem [resolvable:$true] %s191
          %197 = dma.hbm_to_vmem [thread:$0]  %s190, 106496, %s192, %s181, 3072, 1024, 64
        $region24: #{tpu_custom_call.1} parent=19 // pred_fallthru
          _
        // Predicated region
        $region25: #{tpu_custom_call.1} parent=19 // pred_check
          %p198 = pneg %p87
        $region26: #{tpu_custom_call.1} parent=19 // pred_check_branch
          %200 = sbr.rel (%p198) target = $region28
        $region27: #{tpu_custom_call.1} parent=19 // pred_region
          %s201 = sand.u32 %s20, 1
          %s202 = scalar_lea.sflag [#allocation6], %s201
          %s203 = sand.u32 %s77, 1
          %s204 = smul.addr %s203, 8
          %s205 = scalar_lea.vmem [#allocation7], %s204
          %s206 = smul.u32 8, %s20
          %s208 = ssub.s32 128, 128
          %209 = vsyncadd %s202, %s208
          %s210 = smul.addr %s206, 16
          %s211 = scalar_lea.hbm %s2, %s210
          %s213 = sshll.u32 %s205, 4
          %s214 = int_to_ptr.vmem [resolvable:$true] %s213
          %216 = dma.hbm_to_vmem [thread:$0]  %s211, 128, %s214, %s202
        $region28: #{tpu_custom_call.1} parent=19 // pred_fallthru
          _
        // Predicated region
        $region29: #{tpu_custom_call.1} parent=19 // pred_check
          %p217 = pneg %p113
        $region30: #{tpu_custom_call.1} parent=19 // pred_check_branch
          %219 = sbr.rel (%p217) target = $region32
        $region31: #{tpu_custom_call.1} parent=19 // pred_region
          %s220 = sand.u32 %s103, 1
          %s221 = scalar_lea.sflag [#allocation9], %s220
          %s222 = sand.u32 %s103, 1
          %s223 = smul.addr %s222, 8
          %s224 = scalar_lea.vmem [#allocation8], %s223
          %s225 = smul.u32 8, %s20
          %s227 = ssub.s32 128, 128
          %228 = vsyncadd %s221, %s227
          %s229 = smul.addr %s225, 16
          %s230 = scalar_lea.hbm %s3, %s229
          %s232 = sshll.u32 %s224, 4
          %s233 = int_to_ptr.vmem [resolvable:$true] %s232
          %235 = dma.hbm_to_vmem [thread:$0]  %s230, 128, %s233, %s221
        $region32: #{tpu_custom_call.1} parent=19 // pred_fallthru
          _
      $region20: #{tpu_custom_call.1} parent=5 // pred_fallthru
        _
      %p236 = scmp.le.s32.totalorder 1, %s20
      %p237 = scmp.lt.s32.totalorder %s20, 4
      %p238 = pnand %p236, %p237
      %p239 = pneg %p238
      // Predicated region
      $region33: #{tpu_custom_call.1} parent=5 // pred_check
        _
      $region34: #{tpu_custom_call.1} parent=5 // pred_check_branch
        %241 = sbr.rel (%p238) target = $region36
      $region35: #{tpu_custom_call.1} parent=5 // pred_region
        %s242 = ssub.s32 %s20, 1
        // Predicated region
        $region37: #{tpu_custom_call.1} parent=35 // pred_check
          %p243 = pneg %p41
        $region38: #{tpu_custom_call.1} parent=35 // pred_check_branch
          %245 = sbr.rel (%p243) target = $region40
        $region39: #{tpu_custom_call.1} parent=35 // pred_region
          %246 = dma.done [#allocation3], 3328
        $region40: #{tpu_custom_call.1} parent=35 // pred_fallthru
          _
        %s247 = sand.u32 %s25, 1
        %s248 = scalar_lea.sflag [#allocation6], %s247
        %s249 = sand.u32 %s54, 1
        %s250 = smul.addr %s249, 6656
        %s251 = scalar_lea.vmem [#allocation5], %s250
        // Predicated region
        $region41: #{tpu_custom_call.1} parent=35 // pred_check
          %p252 = pneg %p67
        $region42: #{tpu_custom_call.1} parent=35 // pred_check_branch
          %254 = sbr.rel (%p252) target = $region44
        $region43: #{tpu_custom_call.1} parent=35 // pred_region
          %255 = dma.done %s248, 106496
        $region44: #{tpu_custom_call.1} parent=35 // pred_fallthru
          _
        %s256 = sand.u32 %s25, 1
        %s257 = scalar_lea.sflag [#allocation6], %s256
        %s258 = sand.u32 %s80, 1
        %s259 = smul.addr %s258, 8
        %s260 = scalar_lea.vmem [#allocation7], %s259
        // Predicated region
        $region45: #{tpu_custom_call.1} parent=35 // pred_check
          %p261 = pneg %p93
        $region46: #{tpu_custom_call.1} parent=35 // pred_check_branch
          %263 = sbr.rel (%p261) target = $region48
        $region47: #{tpu_custom_call.1} parent=35 // pred_region
          %264 = dma.done %s257, 128
        $region48: #{tpu_custom_call.1} parent=35 // pred_fallthru
          _
        %s265 = sand.u32 %s106, 1
        %s266 = scalar_lea.sflag [#allocation9], %s265
        %s267 = sand.u32 %s106, 1
        %s268 = smul.addr %s267, 8
        %s269 = scalar_lea.vmem [#allocation8], %s268
        // Predicated region
        $region49: #{tpu_custom_call.1} parent=35 // pred_check
          %p270 = pneg %p119
        $region50: #{tpu_custom_call.1} parent=35 // pred_check_branch
          %272 = sbr.rel (%p270) target = $region52
        $region51: #{tpu_custom_call.1} parent=35 // pred_region
          %273 = dma.done %s266, 128
        $region52: #{tpu_custom_call.1} parent=35 // pred_fallthru
          _
        %p274 = pneg %p41
        %p275 = pneg %p38
        %s276 = sand.u32 %s25, 1
        %s277 = scalar_lea.sflag [#allocation6], %s276
        %s278 = sand.u32 %s54, 1
        %s279 = smul.addr %s278, 6656
        %s280 = scalar_lea.vmem [#allocation5], %s279
        %p281 = pneg %p67
        %p282 = pneg %p64
        %s283 = sand.u32 %s25, 1
        %s284 = scalar_lea.sflag [#allocation6], %s283
        %s285 = sand.u32 %s80, 1
        %s286 = smul.addr %s285, 8
        %s287 = scalar_lea.vmem [#allocation7], %s286
        %p288 = pneg %p93
        %p289 = pneg %p90
        %s290 = sand.u32 %s106, 1
        %s291 = scalar_lea.sflag [#allocation9], %s290
        %s292 = sand.u32 %s106, 1
        %s293 = smul.addr %s292, 8
        %s294 = scalar_lea.vmem [#allocation8], %s293
        %p295 = pneg %p119
        %p296 = pneg %p116
        %p297 = pneg %p145
        %p298 = pneg %p142
        %s299 = sand.u32 %s132, 1
        %s300 = scalar_lea.sflag [#allocation4], %s299
        %s301 = sand.u32 %s132, 1
        %s302 = smul.addr %s301, 64
        %s303 = scalar_lea.vmem [#allocation10], %s302
        %s304 = smul.u32 8, %s25
        %s305 = smul.u32 8, %s25
        %s306 = smul.u32 8, %s25
        %s307 = smul.u32 8, %s25
        %v308 = vld [vmem:[#allocation2] sm:$0xff]
        %v309 = vld [vmem:[#allocation2 + $0x8] sm:$0xff]
        %v310 = vld [vmem:[#allocation2 + $0x10] sm:$0xff]
        %v311 = vld [vmem:[#allocation2 + $0x18] sm:$0xff]
        %v312 = vld [vmem:[#allocation2 + $0x20] sm:$0xff]
        %v313 = vld [vmem:[#allocation2 + $0x28] sm:$0xff]
        %v314 = vld [vmem:[#allocation2 + $0x30] sm:$0xff]
        %v315 = vld [vmem:[#allocation2 + $0x38] sm:$0xff]
        %v316 = vld [vmem:[#allocation2 + $0x40] sm:$0xff]
        %v317 = vld [vmem:[#allocation2 + $0x48] sm:$0xff]
        %v318 = vld [vmem:[#allocation2 + $0x50] sm:$0xff]
        %v319 = vld [vmem:[#allocation2 + $0x58] sm:$0xff]
        %v320 = vld [vmem:[#allocation2 + $0x60] sm:$0xff]
        %v321 = vld [vmem:[#allocation2 + $0x68] sm:$0xff]
        %v322 = vld [vmem:[#allocation2 + $0x70] sm:$0xff]
        %v323 = vld [vmem:[#allocation2 + $0x78] sm:$0xff]
        %v324 = vld [vmem:[#allocation2 + $0x80] sm:$0xff]
        %v325 = vld [vmem:[#allocation2 + $0x88] sm:$0xff]
        %v326 = vld [vmem:[#allocation2 + $0x90] sm:$0xff]
        %v327 = vld [vmem:[#allocation2 + $0x98] sm:$0xff]
        %v328 = vld [vmem:[#allocation2 + $0xa0] sm:$0xff]
        %v329 = vld [vmem:[#allocation2 + $0xa8] sm:$0xff]
        %v330 = vld [vmem:[#allocation2 + $0xb0] sm:$0xff]
        %v331 = vld [vmem:[#allocation2 + $0xb8] sm:$0xff]
        %v332 = vld [vmem:[#allocation2 + $0xc0] sm:$0xff]
        %v333 = vld [vmem:[#allocation2 + $0xc8] sm:$0xff]
        %v334 = vld [vmem:[%s251] sm:$0xff]
        %v335 = vld [vmem:[%s251 + $0x8] sm:$0xff]
        %v336 = vld [vmem:[%s251 + $0x10] sm:$0xff]
        %v337 = vld [vmem:[%s251 + $0x18] sm:$0xff]
        %v338 = vld [vmem:[%s251 + $0x20] sm:$0xff]
        %v339 = vld [vmem:[%s251 + $0x28] sm:$0xff]
        %v340 = vld [vmem:[%s251 + $0x30] sm:$0xff]
        %v341 = vld [vmem:[%s251 + $0x38] sm:$0xff]
        %v342 = vld [vmem:[%s251 + $0x40] sm:$0xff]
        %v343 = vld [vmem:[%s251 + $0x48] sm:$0xff]
        %v344 = vld [vmem:[%s251 + $0x50] sm:$0xff]
        %v345 = vld [vmem:[%s251 + $0x58] sm:$0xff]
        %v346 = vld [vmem:[%s251 + $0x60] sm:$0xff]
        %v347 = vld [vmem:[%s251 + $0x68] sm:$0xff]
        %v348 = vld [vmem:[%s251 + $0x70] sm:$0xff]
        %v349 = vld [vmem:[%s251 + $0x78] sm:$0xff]
        %v350 = vld [vmem:[%s251 + $0x80] sm:$0xff]
        %v351 = vld [vmem:[%s251 + $0x88] sm:$0xff]
        %v352 = vld [vmem:[%s251 + $0x90] sm:$0xff]
        %v353 = vld [vmem:[%s251 + $0x98] sm:$0xff]
        %v354 = vld [vmem:[%s251 + $0xa0] sm:$0xff]
        %v355 = vld [vmem:[%s251 + $0xa8] sm:$0xff]
        %v356 = vld [vmem:[%s251 + $0xb0] sm:$0xff]
        %v357 = vld [vmem:[%s251 + $0xb8] sm:$0xff]
        %v358 = vld [vmem:[%s251 + $0xc0] sm:$0xff]
        %v359 = vld [vmem:[%s251 + $0xc8] sm:$0xff]
        %v360 = vld [vmem:[%s251 + $0xd0] sm:$0xff]
        %v361 = vld [vmem:[%s251 + $0xd8] sm:$0xff]
        %v362 = vld [vmem:[%s251 + $0xe0] sm:$0xff]
        %v363 = vld [vmem:[%s251 + $0xe8] sm:$0xff]
        %v364 = vld [vmem:[%s251 + $0xf0] sm:$0xff]
        %v365 = vld [vmem:[%s251 + $0xf8] sm:$0xff]
        %v366 = vld [vmem:[%s251 + $0x100] sm:$0xff]
        %v367 = vld [vmem:[%s251 + $0x108] sm:$0xff]
        %v368 = vld [vmem:[%s251 + $0x110] sm:$0xff]
        %v369 = vld [vmem:[%s251 + $0x118] sm:$0xff]
        %v370 = vld [vmem:[%s251 + $0x120] sm:$0xff]
        %v371 = vld [vmem:[%s251 + $0x128] sm:$0xff]
        %v372 = vld [vmem:[%s251 + $0x130] sm:$0xff]
        %v373 = vld [vmem:[%s251 + $0x138] sm:$0xff]
        %v374 = vld [vmem:[%s251 + $0x140] sm:$0xff]
        %v375 = vld [vmem:[%s251 + $0x148] sm:$0xff]
        %v376 = vld [vmem:[%s251 + $0x150] sm:$0xff]
        %v377 = vld [vmem:[%s251 + $0x158] sm:$0xff]
        %v378 = vld [vmem:[%s251 + $0x160] sm:$0xff]
        %v379 = vld [vmem:[%s251 + $0x168] sm:$0xff]
        %v380 = vld [vmem:[%s251 + $0x170] sm:$0xff]
        %v381 = vld [vmem:[%s251 + $0x178] sm:$0xff]
        %v382 = vld [vmem:[%s251 + $0x180] sm:$0xff]
        %v383 = vld [vmem:[%s251 + $0x188] sm:$0xff]
        %v384 = vld [vmem:[%s251 + $0x190] sm:$0xff]
        %v385 = vld [vmem:[%s251 + $0x198] sm:$0xff]
        %v386 = vld [vmem:[%s251 + $0x1a0] sm:$0xff]
        %v387 = vld [vmem:[%s251 + $0x1a8] sm:$0xff]
        %v388 = vld [vmem:[%s251 + $0x1b0] sm:$0xff]
        %v389 = vld [vmem:[%s251 + $0x1b8] sm:$0xff]
        %v390 = vld [vmem:[%s251 + $0x1c0] sm:$0xff]
        %v391 = vld [vmem:[%s251 + $0x1c8] sm:$0xff]
        %v392 = vld [vmem:[%s251 + $0x1d0] sm:$0xff]
        %v393 = vld [vmem:[%s251 + $0x1d8] sm:$0xff]
        %v394 = vld [vmem:[%s251 + $0x1e0] sm:$0xff]
        %v395 = vld [vmem:[%s251 + $0x1e8] sm:$0xff]
        %v396 = vld [vmem:[%s251 + $0x1f0] sm:$0xff]
        %v397 = vld [vmem:[%s251 + $0x1f8] sm:$0xff]
        %v398 = vld [vmem:[%s251 + $0x200] sm:$0xff]
        %v399 = vld [vmem:[%s251 + $0x208] sm:$0xff]
        %v400 = vld [vmem:[%s251 + $0x210] sm:$0xff]
        %v401 = vld [vmem:[%s251 + $0x218] sm:$0xff]
        %v402 = vld [vmem:[%s251 + $0x220] sm:$0xff]
        %v403 = vld [vmem:[%s251 + $0x228] sm:$0xff]
        %v404 = vld [vmem:[%s251 + $0x230] sm:$0xff]
        %v405 = vld [vmem:[%s251 + $0x238] sm:$0xff]
        %v406 = vld [vmem:[%s251 + $0x240] sm:$0xff]
        %v407 = vld [vmem:[%s251 + $0x248] sm:$0xff]
        %v408 = vld [vmem:[%s251 + $0x250] sm:$0xff]
        %v409 = vld [vmem:[%s251 + $0x258] sm:$0xff]
        %v410 = vld [vmem:[%s251 + $0x260] sm:$0xff]
        %v411 = vld [vmem:[%s251 + $0x268] sm:$0xff]
        %v412 = vld [vmem:[%s251 + $0x270] sm:$0xff]
        %v413 = vld [vmem:[%s251 + $0x278] sm:$0xff]
        %v414 = vld [vmem:[%s251 + $0x280] sm:$0xff]
        %v415 = vld [vmem:[%s251 + $0x288] sm:$0xff]
        %v416 = vld [vmem:[%s251 + $0x290] sm:$0xff]
        %v417 = vld [vmem:[%s251 + $0x298] sm:$0xff]
        %v418 = vld [vmem:[%s251 + $0x2a0] sm:$0xff]
        %v419 = vld [vmem:[%s251 + $0x2a8] sm:$0xff]
        %v420 = vld [vmem:[%s251 + $0x2b0] sm:$0xff]
        %v421 = vld [vmem:[%s251 + $0x2b8] sm:$0xff]
        %v422 = vld [vmem:[%s251 + $0x2c0] sm:$0xff]
        %v423 = vld [vmem:[%s251 + $0x2c8] sm:$0xff]
        %v424 = vld [vmem:[%s251 + $0x2d0] sm:$0xff]
        %v425 = vld [vmem:[%s251 + $0x2d8] sm:$0xff]
        %v426 = vld [vmem:[%s251 + $0x2e0] sm:$0xff]
        %v427 = vld [vmem:[%s251 + $0x2e8] sm:$0xff]
        %v428 = vld [vmem:[%s251 + $0x2f0] sm:$0xff]
        %v429 = vld [vmem:[%s251 + $0x2f8] sm:$0xff]
        %v430 = vld [vmem:[%s251 + $0x300] sm:$0xff]
        %v431 = vld [vmem:[%s251 + $0x308] sm:$0xff]
        %v432 = vld [vmem:[%s251 + $0x310] sm:$0xff]
        %v433 = vld [vmem:[%s251 + $0x318] sm:$0xff]
        %v434 = vld [vmem:[%s251 + $0x320] sm:$0xff]
        %v435 = vld [vmem:[%s251 + $0x328] sm:$0xff]
        %v436 = vld [vmem:[%s251 + $0x330] sm:$0xff]
        %v437 = vld [vmem:[%s251 + $0x338] sm:$0xff]
        %v438 = vld [vmem:[%s251 + $0x340] sm:$0xff]
        %v439 = vld [vmem:[%s251 + $0x348] sm:$0xff]
        %v440 = vld [vmem:[%s251 + $0x350] sm:$0xff]
        %v441 = vld [vmem:[%s251 + $0x358] sm:$0xff]
        %v442 = vld [vmem:[%s251 + $0x360] sm:$0xff]
        %v443 = vld [vmem:[%s251 + $0x368] sm:$0xff]
        %v444 = vld [vmem:[%s251 + $0x370] sm:$0xff]
        %v445 = vld [vmem:[%s251 + $0x378] sm:$0xff]
        %v446 = vld [vmem:[%s251 + $0x380] sm:$0xff]
        %v447 = vld [vmem:[%s251 + $0x388] sm:$0xff]
        %v448 = vld [vmem:[%s251 + $0x390] sm:$0xff]
        %v449 = vld [vmem:[%s251 + $0x398] sm:$0xff]
        %v450 = vld [vmem:[%s251 + $0x3a0] sm:$0xff]
        %v451 = vld [vmem:[%s251 + $0x3a8] sm:$0xff]
        %v452 = vld [vmem:[%s251 + $0x3b0] sm:$0xff]
        %v453 = vld [vmem:[%s251 + $0x3b8] sm:$0xff]
        %v454 = vld [vmem:[%s251 + $0x3c0] sm:$0xff]
        %v455 = vld [vmem:[%s251 + $0x3c8] sm:$0xff]
        %v456 = vld [vmem:[%s251 + $0x3d0] sm:$0xff]
        %v457 = vld [vmem:[%s251 + $0x3d8] sm:$0xff]
        %v458 = vld [vmem:[%s251 + $0x3e0] sm:$0xff]
        %v459 = vld [vmem:[%s251 + $0x3e8] sm:$0xff]
        %v460 = vld [vmem:[%s251 + $0x3f0] sm:$0xff]
        %v461 = vld [vmem:[%s251 + $0x3f8] sm:$0xff]
        %v462 = vld [vmem:[%s251 + $0x400] sm:$0xff]
        %v463 = vld [vmem:[%s251 + $0x408] sm:$0xff]
        %v464 = vld [vmem:[%s251 + $0x410] sm:$0xff]
        %v465 = vld [vmem:[%s251 + $0x418] sm:$0xff]
        %v466 = vld [vmem:[%s251 + $0x420] sm:$0xff]
        %v467 = vld [vmem:[%s251 + $0x428] sm:$0xff]
        %v468 = vld [vmem:[%s251 + $0x430] sm:$0xff]
        %v469 = vld [vmem:[%s251 + $0x438] sm:$0xff]
        %v470 = vld [vmem:[%s251 + $0x440] sm:$0xff]
        %v471 = vld [vmem:[%s251 + $0x448] sm:$0xff]
        %v472 = vld [vmem:[%s251 + $0x450] sm:$0xff]
        %v473 = vld [vmem:[%s251 + $0x458] sm:$0xff]
        %v474 = vld [vmem:[%s251 + $0x460] sm:$0xff]
        %v475 = vld [vmem:[%s251 + $0x468] sm:$0xff]
        %v476 = vld [vmem:[%s251 + $0x470] sm:$0xff]
        %v477 = vld [vmem:[%s251 + $0x478] sm:$0xff]
        %v478 = vld [vmem:[%s251 + $0x480] sm:$0xff]
        %v479 = vld [vmem:[%s251 + $0x488] sm:$0xff]
        %v480 = vld [vmem:[%s251 + $0x490] sm:$0xff]
        %v481 = vld [vmem:[%s251 + $0x498] sm:$0xff]
        %v482 = vld [vmem:[%s251 + $0x4a0] sm:$0xff]
        %v483 = vld [vmem:[%s251 + $0x4a8] sm:$0xff]
        %v484 = vld [vmem:[%s251 + $0x4b0] sm:$0xff]
        %v485 = vld [vmem:[%s251 + $0x4b8] sm:$0xff]
        %v486 = vld [vmem:[%s251 + $0x4c0] sm:$0xff]
        %v487 = vld [vmem:[%s251 + $0x4c8] sm:$0xff]
        %v488 = vld [vmem:[%s251 + $0x4d0] sm:$0xff]
        %v489 = vld [vmem:[%s251 + $0x4d8] sm:$0xff]
        %v490 = vld [vmem:[%s251 + $0x4e0] sm:$0xff]
        %v491 = vld [vmem:[%s251 + $0x4e8] sm:$0xff]
        %v492 = vld [vmem:[%s251 + $0x4f0] sm:$0xff]
        %v493 = vld [vmem:[%s251 + $0x4f8] sm:$0xff]
        %v494 = vld [vmem:[%s251 + $0x500] sm:$0xff]
        %v495 = vld [vmem:[%s251 + $0x508] sm:$0xff]
        %v496 = vld [vmem:[%s251 + $0x510] sm:$0xff]
        %v497 = vld [vmem:[%s251 + $0x518] sm:$0xff]
        %v498 = vld [vmem:[%s251 + $0x520] sm:$0xff]
        %v499 = vld [vmem:[%s251 + $0x528] sm:$0xff]
        %v500 = vld [vmem:[%s251 + $0x530] sm:$0xff]
        %v501 = vld [vmem:[%s251 + $0x538] sm:$0xff]
        %v502 = vld [vmem:[%s251 + $0x540] sm:$0xff]
        %v503 = vld [vmem:[%s251 + $0x548] sm:$0xff]
        %v504 = vld [vmem:[%s251 + $0x550] sm:$0xff]
        %v505 = vld [vmem:[%s251 + $0x558] sm:$0xff]
        %v506 = vld [vmem:[%s251 + $0x560] sm:$0xff]
        %v507 = vld [vmem:[%s251 + $0x568] sm:$0xff]
        %v508 = vld [vmem:[%s251 + $0x570] sm:$0xff]
        %v509 = vld [vmem:[%s251 + $0x578] sm:$0xff]
        %v510 = vld [vmem:[%s251 + $0x580] sm:$0xff]
        %v511 = vld [vmem:[%s251 + $0x588] sm:$0xff]
        %v512 = vld [vmem:[%s251 + $0x590] sm:$0xff]
        %v513 = vld [vmem:[%s251 + $0x598] sm:$0xff]
        %v514 = vld [vmem:[%s251 + $0x5a0] sm:$0xff]
        %v515 = vld [vmem:[%s251 + $0x5a8] sm:$0xff]
        %v516 = vld [vmem:[%s251 + $0x5b0] sm:$0xff]
        %v517 = vld [vmem:[%s251 + $0x5b8] sm:$0xff]
        %v518 = vld [vmem:[%s251 + $0x5c0] sm:$0xff]
        %v519 = vld [vmem:[%s251 + $0x5c8] sm:$0xff]
        %v520 = vld [vmem:[%s251 + $0x5d0] sm:$0xff]
        %v521 = vld [vmem:[%s251 + $0x5d8] sm:$0xff]
        %v522 = vld [vmem:[%s251 + $0x5e0] sm:$0xff]
        %v523 = vld [vmem:[%s251 + $0x5e8] sm:$0xff]
        %v524 = vld [vmem:[%s251 + $0x5f0] sm:$0xff]
        %v525 = vld [vmem:[%s251 + $0x5f8] sm:$0xff]
        %v526 = vld [vmem:[%s251 + $0x600] sm:$0xff]
        %v527 = vld [vmem:[%s251 + $0x608] sm:$0xff]
        %v528 = vld [vmem:[%s251 + $0x610] sm:$0xff]
        %v529 = vld [vmem:[%s251 + $0x618] sm:$0xff]
        %v530 = vld [vmem:[%s251 + $0x620] sm:$0xff]
        %v531 = vld [vmem:[%s251 + $0x628] sm:$0xff]
        %v532 = vld [vmem:[%s251 + $0x630] sm:$0xff]
        %v533 = vld [vmem:[%s251 + $0x638] sm:$0xff]
        %v534 = vld [vmem:[%s251 + $0x640] sm:$0xff]
        %v535 = vld [vmem:[%s251 + $0x648] sm:$0xff]
        %v536 = vld [vmem:[%s251 + $0x650] sm:$0xff]
        %v537 = vld [vmem:[%s251 + $0x658] sm:$0xff]
        %v538 = vld [vmem:[%s251 + $0x660] sm:$0xff]
        %v539 = vld [vmem:[%s251 + $0x668] sm:$0xff]
        %v540 = vld [vmem:[%s251 + $0x670] sm:$0xff]
        %v541 = vld [vmem:[%s251 + $0x678] sm:$0xff]
        %v542 = vld [vmem:[%s251 + $0x680] sm:$0xff]
        %v543 = vld [vmem:[%s251 + $0x688] sm:$0xff]
        %v544 = vld [vmem:[%s251 + $0x690] sm:$0xff]
        %v545 = vld [vmem:[%s251 + $0x698] sm:$0xff]
        %v546 = vld [vmem:[%s251 + $0x6a0] sm:$0xff]
        %v547 = vld [vmem:[%s251 + $0x6a8] sm:$0xff]
        %v548 = vld [vmem:[%s251 + $0x6b0] sm:$0xff]
        %v549 = vld [vmem:[%s251 + $0x6b8] sm:$0xff]
        %v550 = vld [vmem:[%s251 + $0x6c0] sm:$0xff]
        %v551 = vld [vmem:[%s251 + $0x6c8] sm:$0xff]
        %v552 = vld [vmem:[%s251 + $0x6d0] sm:$0xff]
        %v553 = vld [vmem:[%s251 + $0x6d8] sm:$0xff]
        %v554 = vld [vmem:[%s251 + $0x6e0] sm:$0xff]
        %v555 = vld [vmem:[%s251 + $0x6e8] sm:$0xff]
        %v556 = vld [vmem:[%s251 + $0x6f0] sm:$0xff]
        %v557 = vld [vmem:[%s251 + $0x6f8] sm:$0xff]
        %v558 = vld [vmem:[%s251 + $0x700] sm:$0xff]
        %v559 = vld [vmem:[%s251 + $0x708] sm:$0xff]
        %v560 = vld [vmem:[%s251 + $0x710] sm:$0xff]
        %v561 = vld [vmem:[%s251 + $0x718] sm:$0xff]
        %v562 = vld [vmem:[%s251 + $0x720] sm:$0xff]
        %v563 = vld [vmem:[%s251 + $0x728] sm:$0xff]
        %v564 = vld [vmem:[%s251 + $0x730] sm:$0xff]
        %v565 = vld [vmem:[%s251 + $0x738] sm:$0xff]
        %v566 = vld [vmem:[%s251 + $0x740] sm:$0xff]
        %v567 = vld [vmem:[%s251 + $0x748] sm:$0xff]
        %v568 = vld [vmem:[%s251 + $0x750] sm:$0xff]
        %v569 = vld [vmem:[%s251 + $0x758] sm:$0xff]
        %v570 = vld [vmem:[%s251 + $0x760] sm:$0xff]
        %v571 = vld [vmem:[%s251 + $0x768] sm:$0xff]
        %v572 = vld [vmem:[%s251 + $0x770] sm:$0xff]
        %v573 = vld [vmem:[%s251 + $0x778] sm:$0xff]
        %v574 = vld [vmem:[%s251 + $0x780] sm:$0xff]
        %v575 = vld [vmem:[%s251 + $0x788] sm:$0xff]
        %v576 = vld [vmem:[%s251 + $0x790] sm:$0xff]
        %v577 = vld [vmem:[%s251 + $0x798] sm:$0xff]
        %v578 = vld [vmem:[%s251 + $0x7a0] sm:$0xff]
        %v579 = vld [vmem:[%s251 + $0x7a8] sm:$0xff]
        %v580 = vld [vmem:[%s251 + $0x7b0] sm:$0xff]
        %v581 = vld [vmem:[%s251 + $0x7b8] sm:$0xff]
        %v582 = vld [vmem:[%s251 + $0x7c0] sm:$0xff]
        %v583 = vld [vmem:[%s251 + $0x7c8] sm:$0xff]
        %v584 = vld [vmem:[%s251 + $0x7d0] sm:$0xff]
        %v585 = vld [vmem:[%s251 + $0x7d8] sm:$0xff]
        %v586 = vld [vmem:[%s251 + $0x7e0] sm:$0xff]
        %v587 = vld [vmem:[%s251 + $0x7e8] sm:$0xff]
        %v588 = vld [vmem:[%s251 + $0x7f0] sm:$0xff]
        %v589 = vld [vmem:[%s251 + $0x7f8] sm:$0xff]
        %v590 = vld [vmem:[%s251 + $0x800] sm:$0xff]
        %v591 = vld [vmem:[%s251 + $0x808] sm:$0xff]
        %v592 = vld [vmem:[%s251 + $0x810] sm:$0xff]
        %v593 = vld [vmem:[%s251 + $0x818] sm:$0xff]
        %v594 = vld [vmem:[%s251 + $0x820] sm:$0xff]
        %v595 = vld [vmem:[%s251 + $0x828] sm:$0xff]
        %v596 = vld [vmem:[%s251 + $0x830] sm:$0xff]
        %v597 = vld [vmem:[%s251 + $0x838] sm:$0xff]
        %v598 = vld [vmem:[%s251 + $0x840] sm:$0xff]
        %v599 = vld [vmem:[%s251 + $0x848] sm:$0xff]
        %v600 = vld [vmem:[%s251 + $0x850] sm:$0xff]
        %v601 = vld [vmem:[%s251 + $0x858] sm:$0xff]
        %v602 = vld [vmem:[%s251 + $0x860] sm:$0xff]
        %v603 = vld [vmem:[%s251 + $0x868] sm:$0xff]
        %v604 = vld [vmem:[%s251 + $0x870] sm:$0xff]
        %v605 = vld [vmem:[%s251 + $0x878] sm:$0xff]
        %v606 = vld [vmem:[%s251 + $0x880] sm:$0xff]
        %v607 = vld [vmem:[%s251 + $0x888] sm:$0xff]
        %v608 = vld [vmem:[%s251 + $0x890] sm:$0xff]
        %v609 = vld [vmem:[%s251 + $0x898] sm:$0xff]
        %v610 = vld [vmem:[%s251 + $0x8a0] sm:$0xff]
        %v611 = vld [vmem:[%s251 + $0x8a8] sm:$0xff]
        %v612 = vld [vmem:[%s251 + $0x8b0] sm:$0xff]
        %v613 = vld [vmem:[%s251 + $0x8b8] sm:$0xff]
        %v614 = vld [vmem:[%s251 + $0x8c0] sm:$0xff]
        %v615 = vld [vmem:[%s251 + $0x8c8] sm:$0xff]
        %v616 = vld [vmem:[%s251 + $0x8d0] sm:$0xff]
        %v617 = vld [vmem:[%s251 + $0x8d8] sm:$0xff]
        %v618 = vld [vmem:[%s251 + $0x8e0] sm:$0xff]
        %v619 = vld [vmem:[%s251 + $0x8e8] sm:$0xff]
        %v620 = vld [vmem:[%s251 + $0x8f0] sm:$0xff]
        %v621 = vld [vmem:[%s251 + $0x8f8] sm:$0xff]
        %v622 = vld [vmem:[%s251 + $0x900] sm:$0xff]
        %v623 = vld [vmem:[%s251 + $0x908] sm:$0xff]
        %v624 = vld [vmem:[%s251 + $0x910] sm:$0xff]
        %v625 = vld [vmem:[%s251 + $0x918] sm:$0xff]
        %v626 = vld [vmem:[%s251 + $0x920] sm:$0xff]
        %v627 = vld [vmem:[%s251 + $0x928] sm:$0xff]
        %v628 = vld [vmem:[%s251 + $0x930] sm:$0xff]
        %v629 = vld [vmem:[%s251 + $0x938] sm:$0xff]
        %v630 = vld [vmem:[%s251 + $0x940] sm:$0xff]
        %v631 = vld [vmem:[%s251 + $0x948] sm:$0xff]
        %v632 = vld [vmem:[%s251 + $0x950] sm:$0xff]
        %v633 = vld [vmem:[%s251 + $0x958] sm:$0xff]
        %v634 = vld [vmem:[%s251 + $0x960] sm:$0xff]
        %v635 = vld [vmem:[%s251 + $0x968] sm:$0xff]
        %v636 = vld [vmem:[%s251 + $0x970] sm:$0xff]
        %v637 = vld [vmem:[%s251 + $0x978] sm:$0xff]
        %v638 = vld [vmem:[%s251 + $0x980] sm:$0xff]
        %v639 = vld [vmem:[%s251 + $0x988] sm:$0xff]
        %v640 = vld [vmem:[%s251 + $0x990] sm:$0xff]
        %v641 = vld [vmem:[%s251 + $0x998] sm:$0xff]
        %v642 = vld [vmem:[%s251 + $0x9a0] sm:$0xff]
        %v643 = vld [vmem:[%s251 + $0x9a8] sm:$0xff]
        %v644 = vld [vmem:[%s251 + $0x9b0] sm:$0xff]
        %v645 = vld [vmem:[%s251 + $0x9b8] sm:$0xff]
        %v646 = vld [vmem:[%s251 + $0x9c0] sm:$0xff]
        %v647 = vld [vmem:[%s251 + $0x9c8] sm:$0xff]
        %v648 = vld [vmem:[%s251 + $0x9d0] sm:$0xff]
        %v649 = vld [vmem:[%s251 + $0x9d8] sm:$0xff]
        %v650 = vld [vmem:[%s251 + $0x9e0] sm:$0xff]
        %v651 = vld [vmem:[%s251 + $0x9e8] sm:$0xff]
        %v652 = vld [vmem:[%s251 + $0x9f0] sm:$0xff]
        %v653 = vld [vmem:[%s251 + $0x9f8] sm:$0xff]
        %v654 = vld [vmem:[%s251 + $0xa00] sm:$0xff]
        %v655 = vld [vmem:[%s251 + $0xa08] sm:$0xff]
        %v656 = vld [vmem:[%s251 + $0xa10] sm:$0xff]
        %v657 = vld [vmem:[%s251 + $0xa18] sm:$0xff]
        %v658 = vld [vmem:[%s251 + $0xa20] sm:$0xff]
        %v659 = vld [vmem:[%s251 + $0xa28] sm:$0xff]
        %v660 = vld [vmem:[%s251 + $0xa30] sm:$0xff]
        %v661 = vld [vmem:[%s251 + $0xa38] sm:$0xff]
        %v662 = vld [vmem:[%s251 + $0xa40] sm:$0xff]
        %v663 = vld [vmem:[%s251 + $0xa48] sm:$0xff]
        %v664 = vld [vmem:[%s251 + $0xa50] sm:$0xff]
        %v665 = vld [vmem:[%s251 + $0xa58] sm:$0xff]
        %v666 = vld [vmem:[%s251 + $0xa60] sm:$0xff]
        %v667 = vld [vmem:[%s251 + $0xa68] sm:$0xff]
        %v668 = vld [vmem:[%s251 + $0xa70] sm:$0xff]
        %v669 = vld [vmem:[%s251 + $0xa78] sm:$0xff]
        %v670 = vld [vmem:[%s251 + $0xa80] sm:$0xff]
        %v671 = vld [vmem:[%s251 + $0xa88] sm:$0xff]
        %v672 = vld [vmem:[%s251 + $0xa90] sm:$0xff]
        %v673 = vld [vmem:[%s251 + $0xa98] sm:$0xff]
        %v674 = vld [vmem:[%s251 + $0xaa0] sm:$0xff]
        %v675 = vld [vmem:[%s251 + $0xaa8] sm:$0xff]
        %v676 = vld [vmem:[%s251 + $0xab0] sm:$0xff]
        %v677 = vld [vmem:[%s251 + $0xab8] sm:$0xff]
        %v678 = vld [vmem:[%s251 + $0xac0] sm:$0xff]
        %v679 = vld [vmem:[%s251 + $0xac8] sm:$0xff]
        %v680 = vld [vmem:[%s251 + $0xad0] sm:$0xff]
        %v681 = vld [vmem:[%s251 + $0xad8] sm:$0xff]
        %v682 = vld [vmem:[%s251 + $0xae0] sm:$0xff]
        %v683 = vld [vmem:[%s251 + $0xae8] sm:$0xff]
        %v684 = vld [vmem:[%s251 + $0xaf0] sm:$0xff]
        %v685 = vld [vmem:[%s251 + $0xaf8] sm:$0xff]
        %v686 = vld [vmem:[%s251 + $0xb00] sm:$0xff]
        %v687 = vld [vmem:[%s251 + $0xb08] sm:$0xff]
        %v688 = vld [vmem:[%s251 + $0xb10] sm:$0xff]
        %v689 = vld [vmem:[%s251 + $0xb18] sm:$0xff]
        %v690 = vld [vmem:[%s251 + $0xb20] sm:$0xff]
        %v691 = vld [vmem:[%s251 + $0xb28] sm:$0xff]
        %v692 = vld [vmem:[%s251 + $0xb30] sm:$0xff]
        %v693 = vld [vmem:[%s251 + $0xb38] sm:$0xff]
        %v694 = vld [vmem:[%s251 + $0xb40] sm:$0xff]
        %v695 = vld [vmem:[%s251 + $0xb48] sm:$0xff]
        %v696 = vld [vmem:[%s251 + $0xb50] sm:$0xff]
        %v697 = vld [vmem:[%s251 + $0xb58] sm:$0xff]
        %v698 = vld [vmem:[%s251 + $0xb60] sm:$0xff]
        %v699 = vld [vmem:[%s251 + $0xb68] sm:$0xff]
        %v700 = vld [vmem:[%s251 + $0xb70] sm:$0xff]
        %v701 = vld [vmem:[%s251 + $0xb78] sm:$0xff]
        %v702 = vld [vmem:[%s251 + $0xb80] sm:$0xff]
        %v703 = vld [vmem:[%s251 + $0xb88] sm:$0xff]
        %v704 = vld [vmem:[%s251 + $0xb90] sm:$0xff]
        %v705 = vld [vmem:[%s251 + $0xb98] sm:$0xff]
        %v706 = vld [vmem:[%s251 + $0xba0] sm:$0xff]
        %v707 = vld [vmem:[%s251 + $0xba8] sm:$0xff]
        %v708 = vld [vmem:[%s251 + $0xbb0] sm:$0xff]
        %v709 = vld [vmem:[%s251 + $0xbb8] sm:$0xff]
        %v710 = vld [vmem:[%s251 + $0xbc0] sm:$0xff]
        %v711 = vld [vmem:[%s251 + $0xbc8] sm:$0xff]
        %v712 = vld [vmem:[%s251 + $0xbd0] sm:$0xff]
        %v713 = vld [vmem:[%s251 + $0xbd8] sm:$0xff]
        %v714 = vld [vmem:[%s251 + $0xbe0] sm:$0xff]
        %v715 = vld [vmem:[%s251 + $0xbe8] sm:$0xff]
        %v716 = vld [vmem:[%s251 + $0xbf0] sm:$0xff]
        %v717 = vld [vmem:[%s251 + $0xbf8] sm:$0xff]
        %v718 = vld [vmem:[%s251 + $0xc00] sm:$0xff]
        %v719 = vld [vmem:[%s251 + $0xc08] sm:$0xff]
        %v720 = vld [vmem:[%s251 + $0xc10] sm:$0xff]
        %v721 = vld [vmem:[%s251 + $0xc18] sm:$0xff]
        %v722 = vld [vmem:[%s251 + $0xc20] sm:$0xff]
        %v723 = vld [vmem:[%s251 + $0xc28] sm:$0xff]
        %v724 = vld [vmem:[%s251 + $0xc30] sm:$0xff]
        %v725 = vld [vmem:[%s251 + $0xc38] sm:$0xff]
        %v726 = vld [vmem:[%s251 + $0xc40] sm:$0xff]
        %v727 = vld [vmem:[%s251 + $0xc48] sm:$0xff]
        %v728 = vld [vmem:[%s251 + $0xc50] sm:$0xff]
        %v729 = vld [vmem:[%s251 + $0xc58] sm:$0xff]
        %v730 = vld [vmem:[%s251 + $0xc60] sm:$0xff]
        %v731 = vld [vmem:[%s251 + $0xc68] sm:$0xff]
        %v732 = vld [vmem:[%s251 + $0xc70] sm:$0xff]
        %v733 = vld [vmem:[%s251 + $0xc78] sm:$0xff]
        %v734 = vld [vmem:[%s251 + $0xc80] sm:$0xff]
        %v735 = vld [vmem:[%s251 + $0xc88] sm:$0xff]
        %v736 = vld [vmem:[%s251 + $0xc90] sm:$0xff]
        %v737 = vld [vmem:[%s251 + $0xc98] sm:$0xff]
        %v738 = vld [vmem:[%s251 + $0xca0] sm:$0xff]
        %v739 = vld [vmem:[%s251 + $0xca8] sm:$0xff]
        %v740 = vld [vmem:[%s251 + $0xcb0] sm:$0xff]
        %v741 = vld [vmem:[%s251 + $0xcb8] sm:$0xff]
        %v742 = vld [vmem:[%s251 + $0xcc0] sm:$0xff]
        %v743 = vld [vmem:[%s251 + $0xcc8] sm:$0xff]
        %v744 = vld [vmem:[%s251 + $0xcd0] sm:$0xff]
        %v745 = vld [vmem:[%s251 + $0xcd8] sm:$0xff]
        %v746 = vld [vmem:[%s251 + $0xce0] sm:$0xff]
        %v747 = vld [vmem:[%s251 + $0xce8] sm:$0xff]
        %v748 = vld [vmem:[%s251 + $0xcf0] sm:$0xff]
        %v749 = vld [vmem:[%s251 + $0xcf8] sm:$0xff]
        %v750 = vld [vmem:[%s251 + $0xd00] sm:$0xff]
        %v751 = vld [vmem:[%s251 + $0xd08] sm:$0xff]
        %v752 = vld [vmem:[%s251 + $0xd10] sm:$0xff]
        %v753 = vld [vmem:[%s251 + $0xd18] sm:$0xff]
        %v754 = vld [vmem:[%s251 + $0xd20] sm:$0xff]
        %v755 = vld [vmem:[%s251 + $0xd28] sm:$0xff]
        %v756 = vld [vmem:[%s251 + $0xd30] sm:$0xff]
        %v757 = vld [vmem:[%s251 + $0xd38] sm:$0xff]
        %v758 = vld [vmem:[%s251 + $0xd40] sm:$0xff]
        %v759 = vld [vmem:[%s251 + $0xd48] sm:$0xff]
        %v760 = vld [vmem:[%s251 + $0xd50] sm:$0xff]
        %v761 = vld [vmem:[%s251 + $0xd58] sm:$0xff]
        %v762 = vld [vmem:[%s251 + $0xd60] sm:$0xff]
        %v763 = vld [vmem:[%s251 + $0xd68] sm:$0xff]
        %v764 = vld [vmem:[%s251 + $0xd70] sm:$0xff]
        %v765 = vld [vmem:[%s251 + $0xd78] sm:$0xff]
        %v766 = vld [vmem:[%s251 + $0xd80] sm:$0xff]
        %v767 = vld [vmem:[%s251 + $0xd88] sm:$0xff]
        %v768 = vld [vmem:[%s251 + $0xd90] sm:$0xff]
        %v769 = vld [vmem:[%s251 + $0xd98] sm:$0xff]
        %v770 = vld [vmem:[%s251 + $0xda0] sm:$0xff]
        %v771 = vld [vmem:[%s251 + $0xda8] sm:$0xff]
        %v772 = vld [vmem:[%s251 + $0xdb0] sm:$0xff]
        %v773 = vld [vmem:[%s251 + $0xdb8] sm:$0xff]
        %v774 = vld [vmem:[%s251 + $0xdc0] sm:$0xff]
        %v775 = vld [vmem:[%s251 + $0xdc8] sm:$0xff]
        %v776 = vld [vmem:[%s251 + $0xdd0] sm:$0xff]
        %v777 = vld [vmem:[%s251 + $0xdd8] sm:$0xff]
        %v778 = vld [vmem:[%s251 + $0xde0] sm:$0xff]
        %v779 = vld [vmem:[%s251 + $0xde8] sm:$0xff]
        %v780 = vld [vmem:[%s251 + $0xdf0] sm:$0xff]
        %v781 = vld [vmem:[%s251 + $0xdf8] sm:$0xff]
        %v782 = vld [vmem:[%s251 + $0xe00] sm:$0xff]
        %v783 = vld [vmem:[%s251 + $0xe08] sm:$0xff]
        %v784 = vld [vmem:[%s251 + $0xe10] sm:$0xff]
        %v785 = vld [vmem:[%s251 + $0xe18] sm:$0xff]
        %v786 = vld [vmem:[%s251 + $0xe20] sm:$0xff]
        %v787 = vld [vmem:[%s251 + $0xe28] sm:$0xff]
        %v788 = vld [vmem:[%s251 + $0xe30] sm:$0xff]
        %v789 = vld [vmem:[%s251 + $0xe38] sm:$0xff]
        %v790 = vld [vmem:[%s251 + $0xe40] sm:$0xff]
        %v791 = vld [vmem:[%s251 + $0xe48] sm:$0xff]
        %v792 = vld [vmem:[%s251 + $0xe50] sm:$0xff]
        %v793 = vld [vmem:[%s251 + $0xe58] sm:$0xff]
        %v794 = vld [vmem:[%s251 + $0xe60] sm:$0xff]
        %v795 = vld [vmem:[%s251 + $0xe68] sm:$0xff]
        %v796 = vld [vmem:[%s251 + $0xe70] sm:$0xff]
        %v797 = vld [vmem:[%s251 + $0xe78] sm:$0xff]
        %v798 = vld [vmem:[%s251 + $0xe80] sm:$0xff]
        %v799 = vld [vmem:[%s251 + $0xe88] sm:$0xff]
        %v800 = vld [vmem:[%s251 + $0xe90] sm:$0xff]
        %v801 = vld [vmem:[%s251 + $0xe98] sm:$0xff]
        %v802 = vld [vmem:[%s251 + $0xea0] sm:$0xff]
        %v803 = vld [vmem:[%s251 + $0xea8] sm:$0xff]
        %v804 = vld [vmem:[%s251 + $0xeb0] sm:$0xff]
        %v805 = vld [vmem:[%s251 + $0xeb8] sm:$0xff]
        %v806 = vld [vmem:[%s251 + $0xec0] sm:$0xff]
        %v807 = vld [vmem:[%s251 + $0xec8] sm:$0xff]
        %v808 = vld [vmem:[%s251 + $0xed0] sm:$0xff]
        %v809 = vld [vmem:[%s251 + $0xed8] sm:$0xff]
        %v810 = vld [vmem:[%s251 + $0xee0] sm:$0xff]
        %v811 = vld [vmem:[%s251 + $0xee8] sm:$0xff]
        %v812 = vld [vmem:[%s251 + $0xef0] sm:$0xff]
        %v813 = vld [vmem:[%s251 + $0xef8] sm:$0xff]
        %v814 = vld [vmem:[%s251 + $0xf00] sm:$0xff]
        %v815 = vld [vmem:[%s251 + $0xf08] sm:$0xff]
        %v816 = vld [vmem:[%s251 + $0xf10] sm:$0xff]
        %v817 = vld [vmem:[%s251 + $0xf18] sm:$0xff]
        %v818 = vld [vmem:[%s251 + $0xf20] sm:$0xff]
        %v819 = vld [vmem:[%s251 + $0xf28] sm:$0xff]
        %v820 = vld [vmem:[%s251 + $0xf30] sm:$0xff]
        %v821 = vld [vmem:[%s251 + $0xf38] sm:$0xff]
        %v822 = vld [vmem:[%s251 + $0xf40] sm:$0xff]
        %v823 = vld [vmem:[%s251 + $0xf48] sm:$0xff]
        %v824 = vld [vmem:[%s251 + $0xf50] sm:$0xff]
        %v825 = vld [vmem:[%s251 + $0xf58] sm:$0xff]
        %v826 = vld [vmem:[%s251 + $0xf60] sm:$0xff]
        %v827 = vld [vmem:[%s251 + $0xf68] sm:$0xff]
        %v828 = vld [vmem:[%s251 + $0xf70] sm:$0xff]
        %v829 = vld [vmem:[%s251 + $0xf78] sm:$0xff]
        %v830 = vld [vmem:[%s251 + $0xf80] sm:$0xff]
        %v831 = vld [vmem:[%s251 + $0xf88] sm:$0xff]
        %v832 = vld [vmem:[%s251 + $0xf90] sm:$0xff]
        %v833 = vld [vmem:[%s251 + $0xf98] sm:$0xff]
        %v834 = vld [vmem:[%s251 + $0xfa0] sm:$0xff]
        %v835 = vld [vmem:[%s251 + $0xfa8] sm:$0xff]
        %v836 = vld [vmem:[%s251 + $0xfb0] sm:$0xff]
        %v837 = vld [vmem:[%s251 + $0xfb8] sm:$0xff]
        %v838 = vld [vmem:[%s251 + $0xfc0] sm:$0xff]
        %v839 = vld [vmem:[%s251 + $0xfc8] sm:$0xff]
        %v840 = vld [vmem:[%s251 + $0xfd0] sm:$0xff]
        %v841 = vld [vmem:[%s251 + $0xfd8] sm:$0xff]
        %v842 = vld [vmem:[%s251 + $0xfe0] sm:$0xff]
        %v843 = vld [vmem:[%s251 + $0xfe8] sm:$0xff]
        %v844 = vld [vmem:[%s251 + $0xff0] sm:$0xff]
        %v845 = vld [vmem:[%s251 + $0xff8] sm:$0xff]
        %v846 = vld [vmem:[%s251 + $0x1000] sm:$0xff]
        %v847 = vld [vmem:[%s251 + $0x1008] sm:$0xff]
        %v848 = vld [vmem:[%s251 + $0x1010] sm:$0xff]
        %v849 = vld [vmem:[%s251 + $0x1018] sm:$0xff]
        %v850 = vld [vmem:[%s251 + $0x1020] sm:$0xff]
        %v851 = vld [vmem:[%s251 + $0x1028] sm:$0xff]
        %v852 = vld [vmem:[%s251 + $0x1030] sm:$0xff]
        %v853 = vld [vmem:[%s251 + $0x1038] sm:$0xff]
        %v854 = vld [vmem:[%s251 + $0x1040] sm:$0xff]
        %v855 = vld [vmem:[%s251 + $0x1048] sm:$0xff]
        %v856 = vld [vmem:[%s251 + $0x1050] sm:$0xff]
        %v857 = vld [vmem:[%s251 + $0x1058] sm:$0xff]
        %v858 = vld [vmem:[%s251 + $0x1060] sm:$0xff]
        %v859 = vld [vmem:[%s251 + $0x1068] sm:$0xff]
        %v860 = vld [vmem:[%s251 + $0x1070] sm:$0xff]
        %v861 = vld [vmem:[%s251 + $0x1078] sm:$0xff]
        %v862 = vld [vmem:[%s251 + $0x1080] sm:$0xff]
        %v863 = vld [vmem:[%s251 + $0x1088] sm:$0xff]
        %v864 = vld [vmem:[%s251 + $0x1090] sm:$0xff]
        %v865 = vld [vmem:[%s251 + $0x1098] sm:$0xff]
        %v866 = vld [vmem:[%s251 + $0x10a0] sm:$0xff]
        %v867 = vld [vmem:[%s251 + $0x10a8] sm:$0xff]
        %v868 = vld [vmem:[%s251 + $0x10b0] sm:$0xff]
        %v869 = vld [vmem:[%s251 + $0x10b8] sm:$0xff]
        %v870 = vld [vmem:[%s251 + $0x10c0] sm:$0xff]
        %v871 = vld [vmem:[%s251 + $0x10c8] sm:$0xff]
        %v872 = vld [vmem:[%s251 + $0x10d0] sm:$0xff]
        %v873 = vld [vmem:[%s251 + $0x10d8] sm:$0xff]
        %v874 = vld [vmem:[%s251 + $0x10e0] sm:$0xff]
        %v875 = vld [vmem:[%s251 + $0x10e8] sm:$0xff]
        %v876 = vld [vmem:[%s251 + $0x10f0] sm:$0xff]
        %v877 = vld [vmem:[%s251 + $0x10f8] sm:$0xff]
        %v878 = vld [vmem:[%s251 + $0x1100] sm:$0xff]
        %v879 = vld [vmem:[%s251 + $0x1108] sm:$0xff]
        %v880 = vld [vmem:[%s251 + $0x1110] sm:$0xff]
        %v881 = vld [vmem:[%s251 + $0x1118] sm:$0xff]
        %v882 = vld [vmem:[%s251 + $0x1120] sm:$0xff]
        %v883 = vld [vmem:[%s251 + $0x1128] sm:$0xff]
        %v884 = vld [vmem:[%s251 + $0x1130] sm:$0xff]
        %v885 = vld [vmem:[%s251 + $0x1138] sm:$0xff]
        %v886 = vld [vmem:[%s251 + $0x1140] sm:$0xff]
        %v887 = vld [vmem:[%s251 + $0x1148] sm:$0xff]
        %v888 = vld [vmem:[%s251 + $0x1150] sm:$0xff]
        %v889 = vld [vmem:[%s251 + $0x1158] sm:$0xff]
        %v890 = vld [vmem:[%s251 + $0x1160] sm:$0xff]
        %v891 = vld [vmem:[%s251 + $0x1168] sm:$0xff]
        %v892 = vld [vmem:[%s251 + $0x1170] sm:$0xff]
        %v893 = vld [vmem:[%s251 + $0x1178] sm:$0xff]
        %v894 = vld [vmem:[%s251 + $0x1180] sm:$0xff]
        %v895 = vld [vmem:[%s251 + $0x1188] sm:$0xff]
        %v896 = vld [vmem:[%s251 + $0x1190] sm:$0xff]
        %v897 = vld [vmem:[%s251 + $0x1198] sm:$0xff]
        %v898 = vld [vmem:[%s251 + $0x11a0] sm:$0xff]
        %v899 = vld [vmem:[%s251 + $0x11a8] sm:$0xff]
        %v900 = vld [vmem:[%s251 + $0x11b0] sm:$0xff]
        %v901 = vld [vmem:[%s251 + $0x11b8] sm:$0xff]
        %v902 = vld [vmem:[%s251 + $0x11c0] sm:$0xff]
        %v903 = vld [vmem:[%s251 + $0x11c8] sm:$0xff]
        %v904 = vld [vmem:[%s251 + $0x11d0] sm:$0xff]
        %v905 = vld [vmem:[%s251 + $0x11d8] sm:$0xff]
        %v906 = vld [vmem:[%s251 + $0x11e0] sm:$0xff]
        %v907 = vld [vmem:[%s251 + $0x11e8] sm:$0xff]
        %v908 = vld [vmem:[%s251 + $0x11f0] sm:$0xff]
        %v909 = vld [vmem:[%s251 + $0x11f8] sm:$0xff]
        %v910 = vld [vmem:[%s251 + $0x1200] sm:$0xff]
        %v911 = vld [vmem:[%s251 + $0x1208] sm:$0xff]
        %v912 = vld [vmem:[%s251 + $0x1210] sm:$0xff]
        %v913 = vld [vmem:[%s251 + $0x1218] sm:$0xff]
        %v914 = vld [vmem:[%s251 + $0x1220] sm:$0xff]
        %v915 = vld [vmem:[%s251 + $0x1228] sm:$0xff]
        %v916 = vld [vmem:[%s251 + $0x1230] sm:$0xff]
        %v917 = vld [vmem:[%s251 + $0x1238] sm:$0xff]
        %v918 = vld [vmem:[%s251 + $0x1240] sm:$0xff]
        %v919 = vld [vmem:[%s251 + $0x1248] sm:$0xff]
        %v920 = vld [vmem:[%s251 + $0x1250] sm:$0xff]
        %v921 = vld [vmem:[%s251 + $0x1258] sm:$0xff]
        %v922 = vld [vmem:[%s251 + $0x1260] sm:$0xff]
        %v923 = vld [vmem:[%s251 + $0x1268] sm:$0xff]
        %v924 = vld [vmem:[%s251 + $0x1270] sm:$0xff]
        %v925 = vld [vmem:[%s251 + $0x1278] sm:$0xff]
        %v926 = vld [vmem:[%s251 + $0x1280] sm:$0xff]
        %v927 = vld [vmem:[%s251 + $0x1288] sm:$0xff]
        %v928 = vld [vmem:[%s251 + $0x1290] sm:$0xff]
        %v929 = vld [vmem:[%s251 + $0x1298] sm:$0xff]
        %v930 = vld [vmem:[%s251 + $0x12a0] sm:$0xff]
        %v931 = vld [vmem:[%s251 + $0x12a8] sm:$0xff]
        %v932 = vld [vmem:[%s251 + $0x12b0] sm:$0xff]
        %v933 = vld [vmem:[%s251 + $0x12b8] sm:$0xff]
        %v934 = vld [vmem:[%s251 + $0x12c0] sm:$0xff]
        %v935 = vld [vmem:[%s251 + $0x12c8] sm:$0xff]
        %v936 = vld [vmem:[%s251 + $0x12d0] sm:$0xff]
        %v937 = vld [vmem:[%s251 + $0x12d8] sm:$0xff]
        %v938 = vld [vmem:[%s251 + $0x12e0] sm:$0xff]
        %v939 = vld [vmem:[%s251 + $0x12e8] sm:$0xff]
        %v940 = vld [vmem:[%s251 + $0x12f0] sm:$0xff]
        %v941 = vld [vmem:[%s251 + $0x12f8] sm:$0xff]
        %v942 = vld [vmem:[%s251 + $0x1300] sm:$0xff]
        %v943 = vld [vmem:[%s251 + $0x1308] sm:$0xff]
        %v944 = vld [vmem:[%s251 + $0x1310] sm:$0xff]
        %v945 = vld [vmem:[%s251 + $0x1318] sm:$0xff]
        %v946 = vld [vmem:[%s251 + $0x1320] sm:$0xff]
        %v947 = vld [vmem:[%s251 + $0x1328] sm:$0xff]
        %v948 = vld [vmem:[%s251 + $0x1330] sm:$0xff]
        %v949 = vld [vmem:[%s251 + $0x1338] sm:$0xff]
        %v950 = vld [vmem:[%s251 + $0x1340] sm:$0xff]
        %v951 = vld [vmem:[%s251 + $0x1348] sm:$0xff]
        %v952 = vld [vmem:[%s251 + $0x1350] sm:$0xff]
        %v953 = vld [vmem:[%s251 + $0x1358] sm:$0xff]
        %v954 = vld [vmem:[%s251 + $0x1360] sm:$0xff]
        %v955 = vld [vmem:[%s251 + $0x1368] sm:$0xff]
        %v956 = vld [vmem:[%s251 + $0x1370] sm:$0xff]
        %v957 = vld [vmem:[%s251 + $0x1378] sm:$0xff]
        %v958 = vld [vmem:[%s251 + $0x1380] sm:$0xff]
        %v959 = vld [vmem:[%s251 + $0x1388] sm:$0xff]
        %v960 = vld [vmem:[%s251 + $0x1390] sm:$0xff]
        %v961 = vld [vmem:[%s251 + $0x1398] sm:$0xff]
        %v962 = vld [vmem:[%s251 + $0x13a0] sm:$0xff]
        %v963 = vld [vmem:[%s251 + $0x13a8] sm:$0xff]
        %v964 = vld [vmem:[%s251 + $0x13b0] sm:$0xff]
        %v965 = vld [vmem:[%s251 + $0x13b8] sm:$0xff]
        %v966 = vld [vmem:[%s251 + $0x13c0] sm:$0xff]
        %v967 = vld [vmem:[%s251 + $0x13c8] sm:$0xff]
        %v968 = vld [vmem:[%s251 + $0x13d0] sm:$0xff]
        %v969 = vld [vmem:[%s251 + $0x13d8] sm:$0xff]
        %v970 = vld [vmem:[%s251 + $0x13e0] sm:$0xff]
        %v971 = vld [vmem:[%s251 + $0x13e8] sm:$0xff]
        %v972 = vld [vmem:[%s251 + $0x13f0] sm:$0xff]
        %v973 = vld [vmem:[%s251 + $0x13f8] sm:$0xff]
        %v974 = vld [vmem:[%s251 + $0x1400] sm:$0xff]
        %v975 = vld [vmem:[%s251 + $0x1408] sm:$0xff]
        %v976 = vld [vmem:[%s251 + $0x1410] sm:$0xff]
        %v977 = vld [vmem:[%s251 + $0x1418] sm:$0xff]
        %v978 = vld [vmem:[%s251 + $0x1420] sm:$0xff]
        %v979 = vld [vmem:[%s251 + $0x1428] sm:$0xff]
        %v980 = vld [vmem:[%s251 + $0x1430] sm:$0xff]
        %v981 = vld [vmem:[%s251 + $0x1438] sm:$0xff]
        %v982 = vld [vmem:[%s251 + $0x1440] sm:$0xff]
        %v983 = vld [vmem:[%s251 + $0x1448] sm:$0xff]
        %v984 = vld [vmem:[%s251 + $0x1450] sm:$0xff]
        %v985 = vld [vmem:[%s251 + $0x1458] sm:$0xff]
        %v986 = vld [vmem:[%s251 + $0x1460] sm:$0xff]
        %v987 = vld [vmem:[%s251 + $0x1468] sm:$0xff]
        %v988 = vld [vmem:[%s251 + $0x1470] sm:$0xff]
        %v989 = vld [vmem:[%s251 + $0x1478] sm:$0xff]
        %v990 = vld [vmem:[%s251 + $0x1480] sm:$0xff]
        %v991 = vld [vmem:[%s251 + $0x1488] sm:$0xff]
        %v992 = vld [vmem:[%s251 + $0x1490] sm:$0xff]
        %v993 = vld [vmem:[%s251 + $0x1498] sm:$0xff]
        %v994 = vld [vmem:[%s251 + $0x14a0] sm:$0xff]
        %v995 = vld [vmem:[%s251 + $0x14a8] sm:$0xff]
        %v996 = vld [vmem:[%s251 + $0x14b0] sm:$0xff]
        %v997 = vld [vmem:[%s251 + $0x14b8] sm:$0xff]
        %v998 = vld [vmem:[%s251 + $0x14c0] sm:$0xff]
        %v999 = vld [vmem:[%s251 + $0x14c8] sm:$0xff]
        %v1000 = vld [vmem:[%s251 + $0x14d0] sm:$0xff]
        %v1001 = vld [vmem:[%s251 + $0x14d8] sm:$0xff]
        %v1002 = vld [vmem:[%s251 + $0x14e0] sm:$0xff]
        %v1003 = vld [vmem:[%s251 + $0x14e8] sm:$0xff]
        %v1004 = vld [vmem:[%s251 + $0x14f0] sm:$0xff]
        %v1005 = vld [vmem:[%s251 + $0x14f8] sm:$0xff]
        %v1006 = vld [vmem:[%s251 + $0x1500] sm:$0xff]
        %v1007 = vld [vmem:[%s251 + $0x1508] sm:$0xff]
        %v1008 = vld [vmem:[%s251 + $0x1510] sm:$0xff]
        %v1009 = vld [vmem:[%s251 + $0x1518] sm:$0xff]
        %v1010 = vld [vmem:[%s251 + $0x1520] sm:$0xff]
        %v1011 = vld [vmem:[%s251 + $0x1528] sm:$0xff]
        %v1012 = vld [vmem:[%s251 + $0x1530] sm:$0xff]
        %v1013 = vld [vmem:[%s251 + $0x1538] sm:$0xff]
        %v1014 = vld [vmem:[%s251 + $0x1540] sm:$0xff]
        %v1015 = vld [vmem:[%s251 + $0x1548] sm:$0xff]
        %v1016 = vld [vmem:[%s251 + $0x1550] sm:$0xff]
        %v1017 = vld [vmem:[%s251 + $0x1558] sm:$0xff]
        %v1018 = vld [vmem:[%s251 + $0x1560] sm:$0xff]
        %v1019 = vld [vmem:[%s251 + $0x1568] sm:$0xff]
        %v1020 = vld [vmem:[%s251 + $0x1570] sm:$0xff]
        %v1021 = vld [vmem:[%s251 + $0x1578] sm:$0xff]
        %v1022 = vld [vmem:[%s251 + $0x1580] sm:$0xff]
        %v1023 = vld [vmem:[%s251 + $0x1588] sm:$0xff]
        %v1024 = vld [vmem:[%s251 + $0x1590] sm:$0xff]
        %v1025 = vld [vmem:[%s251 + $0x1598] sm:$0xff]
        %v1026 = vld [vmem:[%s251 + $0x15a0] sm:$0xff]
        %v1027 = vld [vmem:[%s251 + $0x15a8] sm:$0xff]
        %v1028 = vld [vmem:[%s251 + $0x15b0] sm:$0xff]
        %v1029 = vld [vmem:[%s251 + $0x15b8] sm:$0xff]
        %v1030 = vld [vmem:[%s251 + $0x15c0] sm:$0xff]
        %v1031 = vld [vmem:[%s251 + $0x15c8] sm:$0xff]
        %v1032 = vld [vmem:[%s251 + $0x15d0] sm:$0xff]
        %v1033 = vld [vmem:[%s251 + $0x15d8] sm:$0xff]
        %v1034 = vld [vmem:[%s251 + $0x15e0] sm:$0xff]
        %v1035 = vld [vmem:[%s251 + $0x15e8] sm:$0xff]
        %v1036 = vld [vmem:[%s251 + $0x15f0] sm:$0xff]
        %v1037 = vld [vmem:[%s251 + $0x15f8] sm:$0xff]
        %v1038 = vld [vmem:[%s251 + $0x1600] sm:$0xff]
        %v1039 = vld [vmem:[%s251 + $0x1608] sm:$0xff]
        %v1040 = vld [vmem:[%s251 + $0x1610] sm:$0xff]
        %v1041 = vld [vmem:[%s251 + $0x1618] sm:$0xff]
        %v1042 = vld [vmem:[%s251 + $0x1620] sm:$0xff]
        %v1043 = vld [vmem:[%s251 + $0x1628] sm:$0xff]
        %v1044 = vld [vmem:[%s251 + $0x1630] sm:$0xff]
        %v1045 = vld [vmem:[%s251 + $0x1638] sm:$0xff]
        %v1046 = vld [vmem:[%s251 + $0x1640] sm:$0xff]
        %v1047 = vld [vmem:[%s251 + $0x1648] sm:$0xff]
        %v1048 = vld [vmem:[%s251 + $0x1650] sm:$0xff]
        %v1049 = vld [vmem:[%s251 + $0x1658] sm:$0xff]
        %v1050 = vld [vmem:[%s251 + $0x1660] sm:$0xff]
        %v1051 = vld [vmem:[%s251 + $0x1668] sm:$0xff]
        %v1052 = vld [vmem:[%s251 + $0x1670] sm:$0xff]
        %v1053 = vld [vmem:[%s251 + $0x1678] sm:$0xff]
        %v1054 = vld [vmem:[%s251 + $0x1680] sm:$0xff]
        %v1055 = vld [vmem:[%s251 + $0x1688] sm:$0xff]
        %v1056 = vld [vmem:[%s251 + $0x1690] sm:$0xff]
        %v1057 = vld [vmem:[%s251 + $0x1698] sm:$0xff]
        %v1058 = vld [vmem:[%s251 + $0x16a0] sm:$0xff]
        %v1059 = vld [vmem:[%s251 + $0x16a8] sm:$0xff]
        %v1060 = vld [vmem:[%s251 + $0x16b0] sm:$0xff]
        %v1061 = vld [vmem:[%s251 + $0x16b8] sm:$0xff]
        %v1062 = vld [vmem:[%s251 + $0x16c0] sm:$0xff]
        %v1063 = vld [vmem:[%s251 + $0x16c8] sm:$0xff]
        %v1064 = vld [vmem:[%s251 + $0x16d0] sm:$0xff]
        %v1065 = vld [vmem:[%s251 + $0x16d8] sm:$0xff]
        %v1066 = vld [vmem:[%s251 + $0x16e0] sm:$0xff]
        %v1067 = vld [vmem:[%s251 + $0x16e8] sm:$0xff]
        %v1068 = vld [vmem:[%s251 + $0x16f0] sm:$0xff]
        %v1069 = vld [vmem:[%s251 + $0x16f8] sm:$0xff]
        %v1070 = vld [vmem:[%s251 + $0x1700] sm:$0xff]
        %v1071 = vld [vmem:[%s251 + $0x1708] sm:$0xff]
        %v1072 = vld [vmem:[%s251 + $0x1710] sm:$0xff]
        %v1073 = vld [vmem:[%s251 + $0x1718] sm:$0xff]
        %v1074 = vld [vmem:[%s251 + $0x1720] sm:$0xff]
        %v1075 = vld [vmem:[%s251 + $0x1728] sm:$0xff]
        %v1076 = vld [vmem:[%s251 + $0x1730] sm:$0xff]
        %v1077 = vld [vmem:[%s251 + $0x1738] sm:$0xff]
        %v1078 = vld [vmem:[%s251 + $0x1740] sm:$0xff]
        %v1079 = vld [vmem:[%s251 + $0x1748] sm:$0xff]
        %v1080 = vld [vmem:[%s251 + $0x1750] sm:$0xff]
        %v1081 = vld [vmem:[%s251 + $0x1758] sm:$0xff]
        %v1082 = vld [vmem:[%s251 + $0x1760] sm:$0xff]
        %v1083 = vld [vmem:[%s251 + $0x1768] sm:$0xff]
        %v1084 = vld [vmem:[%s251 + $0x1770] sm:$0xff]
        %v1085 = vld [vmem:[%s251 + $0x1778] sm:$0xff]
        %v1086 = vld [vmem:[%s251 + $0x1780] sm:$0xff]
        %v1087 = vld [vmem:[%s251 + $0x1788] sm:$0xff]
        %v1088 = vld [vmem:[%s251 + $0x1790] sm:$0xff]
        %v1089 = vld [vmem:[%s251 + $0x1798] sm:$0xff]
        %v1090 = vld [vmem:[%s251 + $0x17a0] sm:$0xff]
        %v1091 = vld [vmem:[%s251 + $0x17a8] sm:$0xff]
        %v1092 = vld [vmem:[%s251 + $0x17b0] sm:$0xff]
        %v1093 = vld [vmem:[%s251 + $0x17b8] sm:$0xff]
        %v1094 = vld [vmem:[%s251 + $0x17c0] sm:$0xff]
        %v1095 = vld [vmem:[%s251 + $0x17c8] sm:$0xff]
        %v1096 = vld [vmem:[%s251 + $0x17d0] sm:$0xff]
        %v1097 = vld [vmem:[%s251 + $0x17d8] sm:$0xff]
        %v1098 = vld [vmem:[%s251 + $0x17e0] sm:$0xff]
        %v1099 = vld [vmem:[%s251 + $0x17e8] sm:$0xff]
        %v1100 = vld [vmem:[%s251 + $0x17f0] sm:$0xff]
        %v1101 = vld [vmem:[%s251 + $0x17f8] sm:$0xff]
        %v1102 = vld [vmem:[%s251 + $0x1800] sm:$0xff]
        %v1103 = vld [vmem:[%s251 + $0x1808] sm:$0xff]
        %v1104 = vld [vmem:[%s251 + $0x1810] sm:$0xff]
        %v1105 = vld [vmem:[%s251 + $0x1818] sm:$0xff]
        %v1106 = vld [vmem:[%s251 + $0x1820] sm:$0xff]
        %v1107 = vld [vmem:[%s251 + $0x1828] sm:$0xff]
        %v1108 = vld [vmem:[%s251 + $0x1830] sm:$0xff]
        %v1109 = vld [vmem:[%s251 + $0x1838] sm:$0xff]
        %v1110 = vld [vmem:[%s251 + $0x1840] sm:$0xff]
        %v1111 = vld [vmem:[%s251 + $0x1848] sm:$0xff]
        %v1112 = vld [vmem:[%s251 + $0x1850] sm:$0xff]
        %v1113 = vld [vmem:[%s251 + $0x1858] sm:$0xff]
        %v1114 = vld [vmem:[%s251 + $0x1860] sm:$0xff]
        %v1115 = vld [vmem:[%s251 + $0x1868] sm:$0xff]
        %v1116 = vld [vmem:[%s251 + $0x1870] sm:$0xff]
        %v1117 = vld [vmem:[%s251 + $0x1878] sm:$0xff]
        %v1118 = vld [vmem:[%s251 + $0x1880] sm:$0xff]
        %v1119 = vld [vmem:[%s251 + $0x1888] sm:$0xff]
        %v1120 = vld [vmem:[%s251 + $0x1890] sm:$0xff]
        %v1121 = vld [vmem:[%s251 + $0x1898] sm:$0xff]
        %v1122 = vld [vmem:[%s251 + $0x18a0] sm:$0xff]
        %v1123 = vld [vmem:[%s251 + $0x18a8] sm:$0xff]
        %v1124 = vld [vmem:[%s251 + $0x18b0] sm:$0xff]
        %v1125 = vld [vmem:[%s251 + $0x18b8] sm:$0xff]
        %v1126 = vld [vmem:[%s251 + $0x18c0] sm:$0xff]
        %v1127 = vld [vmem:[%s251 + $0x18c8] sm:$0xff]
        %v1128 = vld [vmem:[%s251 + $0x18d0] sm:$0xff]
        %v1129 = vld [vmem:[%s251 + $0x18d8] sm:$0xff]
        %v1130 = vld [vmem:[%s251 + $0x18e0] sm:$0xff]
        %v1131 = vld [vmem:[%s251 + $0x18e8] sm:$0xff]
        %v1132 = vld [vmem:[%s251 + $0x18f0] sm:$0xff]
        %v1133 = vld [vmem:[%s251 + $0x18f8] sm:$0xff]
        %v1134 = vld [vmem:[%s251 + $0x1900] sm:$0xff]
        %v1135 = vld [vmem:[%s251 + $0x1908] sm:$0xff]
        %v1136 = vld [vmem:[%s251 + $0x1910] sm:$0xff]
        %v1137 = vld [vmem:[%s251 + $0x1918] sm:$0xff]
        %v1138 = vld [vmem:[%s251 + $0x1920] sm:$0xff]
        %v1139 = vld [vmem:[%s251 + $0x1928] sm:$0xff]
        %v1140 = vld [vmem:[%s251 + $0x1930] sm:$0xff]
        %v1141 = vld [vmem:[%s251 + $0x1938] sm:$0xff]
        %v1142 = vld [vmem:[%s251 + $0x1940] sm:$0xff]
        %v1143 = vld [vmem:[%s251 + $0x1948] sm:$0xff]
        %v1144 = vld [vmem:[%s251 + $0x1950] sm:$0xff]
        %v1145 = vld [vmem:[%s251 + $0x1958] sm:$0xff]
        %v1146 = vld [vmem:[%s251 + $0x1960] sm:$0xff]
        %v1147 = vld [vmem:[%s251 + $0x1968] sm:$0xff]
        %v1148 = vld [vmem:[%s251 + $0x1970] sm:$0xff]
        %v1149 = vld [vmem:[%s251 + $0x1978] sm:$0xff]
        %v1150 = vld [vmem:[%s251 + $0x1980] sm:$0xff]
        %v1151 = vld [vmem:[%s251 + $0x1988] sm:$0xff]
        %v1152 = vld [vmem:[%s251 + $0x1990] sm:$0xff]
        %v1153 = vld [vmem:[%s251 + $0x1998] sm:$0xff]
        %v1154 = vld [vmem:[%s251 + $0x19a0] sm:$0xff]
        %v1155 = vld [vmem:[%s251 + $0x19a8] sm:$0xff]
        %v1156 = vld [vmem:[%s251 + $0x19b0] sm:$0xff]
        %v1157 = vld [vmem:[%s251 + $0x19b8] sm:$0xff]
        %v1158 = vld [vmem:[%s251 + $0x19c0] sm:$0xff]
        %v1159 = vld [vmem:[%s251 + $0x19c8] sm:$0xff]
        %v1160 = vld [vmem:[%s251 + $0x19d0] sm:$0xff]
        %v1161 = vld [vmem:[%s251 + $0x19d8] sm:$0xff]
        %v1162 = vld [vmem:[%s251 + $0x19e0] sm:$0xff]
        %v1163 = vld [vmem:[%s251 + $0x19e8] sm:$0xff]
        %v1164 = vld [vmem:[%s251 + $0x19f0] sm:$0xff]
        %v1165 = vld [vmem:[%s251 + $0x19f8] sm:$0xff]
        %v1166 = vunpack.c.l.s8.bf16 %v334
        %v1167 = vunpack.c.l.s8.bf16 %v335
        %v1168 = vunpack.c.l.s8.bf16 %v336
        %v1169 = vunpack.c.l.s8.bf16 %v337
        %v1170 = vunpack.c.l.s8.bf16 %v338
        %v1171 = vunpack.c.l.s8.bf16 %v339
        %v1172 = vunpack.c.l.s8.bf16 %v340
        %v1173 = vunpack.c.l.s8.bf16 %v341
        %v1174 = vunpack.c.h.s8.bf16 %v334
        %v1175 = vunpack.c.h.s8.bf16 %v335
        %v1176 = vunpack.c.h.s8.bf16 %v336
        %v1177 = vunpack.c.h.s8.bf16 %v337
        %v1178 = vunpack.c.h.s8.bf16 %v338
        %v1179 = vunpack.c.h.s8.bf16 %v339
        %v1180 = vunpack.c.h.s8.bf16 %v340
        %v1181 = vunpack.c.h.s8.bf16 %v341
        %v1182 = vunpack.c.l.s8.bf16 %v342
        %v1183 = vunpack.c.l.s8.bf16 %v343
        %v1184 = vunpack.c.l.s8.bf16 %v344
        %v1185 = vunpack.c.l.s8.bf16 %v345
        %v1186 = vunpack.c.l.s8.bf16 %v346
        %v1187 = vunpack.c.l.s8.bf16 %v347
        %v1188 = vunpack.c.l.s8.bf16 %v348
        %v1189 = vunpack.c.l.s8.bf16 %v349
        %v1190 = vunpack.c.h.s8.bf16 %v342
        %v1191 = vunpack.c.h.s8.bf16 %v343
        %v1192 = vunpack.c.h.s8.bf16 %v344
        %v1193 = vunpack.c.h.s8.bf16 %v345
        %v1194 = vunpack.c.h.s8.bf16 %v346
        %v1195 = vunpack.c.h.s8.bf16 %v347
        %v1196 = vunpack.c.h.s8.bf16 %v348
        %v1197 = vunpack.c.h.s8.bf16 %v349
        %v1198 = vunpack.c.l.s8.bf16 %v350
        %v1199 = vunpack.c.l.s8.bf16 %v351
        %v1200 = vunpack.c.l.s8.bf16 %v352
        %v1201 = vunpack.c.l.s8.bf16 %v353
        %v1202 = vunpack.c.l.s8.bf16 %v354
        %v1203 = vunpack.c.l.s8.bf16 %v355
        %v1204 = vunpack.c.l.s8.bf16 %v356
        %v1205 = vunpack.c.l.s8.bf16 %v357
        %v1206 = vunpack.c.h.s8.bf16 %v350
        %v1207 = vunpack.c.h.s8.bf16 %v351
        %v1208 = vunpack.c.h.s8.bf16 %v352
        %v1209 = vunpack.c.h.s8.bf16 %v353
        %v1210 = vunpack.c.h.s8.bf16 %v354
        %v1211 = vunpack.c.h.s8.bf16 %v355
        %v1212 = vunpack.c.h.s8.bf16 %v356
        %v1213 = vunpack.c.h.s8.bf16 %v357
        %v1214 = vunpack.c.l.s8.bf16 %v358
        %v1215 = vunpack.c.l.s8.bf16 %v359
        %v1216 = vunpack.c.l.s8.bf16 %v360
        %v1217 = vunpack.c.l.s8.bf16 %v361
        %v1218 = vunpack.c.l.s8.bf16 %v362
        %v1219 = vunpack.c.l.s8.bf16 %v363
        %v1220 = vunpack.c.l.s8.bf16 %v364
        %v1221 = vunpack.c.l.s8.bf16 %v365
        %v1222 = vunpack.c.h.s8.bf16 %v358
        %v1223 = vunpack.c.h.s8.bf16 %v359
        %v1224 = vunpack.c.h.s8.bf16 %v360
        %v1225 = vunpack.c.h.s8.bf16 %v361
        %v1226 = vunpack.c.h.s8.bf16 %v362
        %v1227 = vunpack.c.h.s8.bf16 %v363
        %v1228 = vunpack.c.h.s8.bf16 %v364
        %v1229 = vunpack.c.h.s8.bf16 %v365
        %v1230 = vunpack.c.l.s8.bf16 %v366
        %v1231 = vunpack.c.l.s8.bf16 %v367
        %v1232 = vunpack.c.l.s8.bf16 %v368
        %v1233 = vunpack.c.l.s8.bf16 %v369
        %v1234 = vunpack.c.l.s8.bf16 %v370
        %v1235 = vunpack.c.l.s8.bf16 %v371
        %v1236 = vunpack.c.l.s8.bf16 %v372
        %v1237 = vunpack.c.l.s8.bf16 %v373
        %v1238 = vunpack.c.h.s8.bf16 %v366
        %v1239 = vunpack.c.h.s8.bf16 %v367
        %v1240 = vunpack.c.h.s8.bf16 %v368
        %v1241 = vunpack.c.h.s8.bf16 %v369
        %v1242 = vunpack.c.h.s8.bf16 %v370
        %v1243 = vunpack.c.h.s8.bf16 %v371
        %v1244 = vunpack.c.h.s8.bf16 %v372
        %v1245 = vunpack.c.h.s8.bf16 %v373
        %v1246 = vunpack.c.l.s8.bf16 %v374
        %v1247 = vunpack.c.l.s8.bf16 %v375
        %v1248 = vunpack.c.l.s8.bf16 %v376
        %v1249 = vunpack.c.l.s8.bf16 %v377
        %v1250 = vunpack.c.l.s8.bf16 %v378
        %v1251 = vunpack.c.l.s8.bf16 %v379
        %v1252 = vunpack.c.l.s8.bf16 %v380
        %v1253 = vunpack.c.l.s8.bf16 %v381
        %v1254 = vunpack.c.h.s8.bf16 %v374
        %v1255 = vunpack.c.h.s8.bf16 %v375
        %v1256 = vunpack.c.h.s8.bf16 %v376
        %v1257 = vunpack.c.h.s8.bf16 %v377
        %v1258 = vunpack.c.h.s8.bf16 %v378
        %v1259 = vunpack.c.h.s8.bf16 %v379
        %v1260 = vunpack.c.h.s8.bf16 %v380
        %v1261 = vunpack.c.h.s8.bf16 %v381
        %v1262 = vunpack.c.l.s8.bf16 %v382
        %v1263 = vunpack.c.l.s8.bf16 %v383
        %v1264 = vunpack.c.l.s8.bf16 %v384
        %v1265 = vunpack.c.l.s8.bf16 %v385
        %v1266 = vunpack.c.l.s8.bf16 %v386
        %v1267 = vunpack.c.l.s8.bf16 %v387
        %v1268 = vunpack.c.l.s8.bf16 %v388
        %v1269 = vunpack.c.l.s8.bf16 %v389
        %v1270 = vunpack.c.h.s8.bf16 %v382
        %v1271 = vunpack.c.h.s8.bf16 %v383
        %v1272 = vunpack.c.h.s8.bf16 %v384
        %v1273 = vunpack.c.h.s8.bf16 %v385
        %v1274 = vunpack.c.h.s8.bf16 %v386
        %v1275 = vunpack.c.h.s8.bf16 %v387
        %v1276 = vunpack.c.h.s8.bf16 %v388
        %v1277 = vunpack.c.h.s8.bf16 %v389
        %v1278 = vunpack.c.l.s8.bf16 %v390
        %v1279 = vunpack.c.l.s8.bf16 %v391
        %v1280 = vunpack.c.l.s8.bf16 %v392
        %v1281 = vunpack.c.l.s8.bf16 %v393
        %v1282 = vunpack.c.l.s8.bf16 %v394
        %v1283 = vunpack.c.l.s8.bf16 %v395
        %v1284 = vunpack.c.l.s8.bf16 %v396
        %v1285 = vunpack.c.l.s8.bf16 %v397
        %v1286 = vunpack.c.h.s8.bf16 %v390
        %v1287 = vunpack.c.h.s8.bf16 %v391
        %v1288 = vunpack.c.h.s8.bf16 %v392
        %v1289 = vunpack.c.h.s8.bf16 %v393
        %v1290 = vunpack.c.h.s8.bf16 %v394
        %v1291 = vunpack.c.h.s8.bf16 %v395
        %v1292 = vunpack.c.h.s8.bf16 %v396
        %v1293 = vunpack.c.h.s8.bf16 %v397
        %v1294 = vunpack.c.l.s8.bf16 %v398
        %v1295 = vunpack.c.l.s8.bf16 %v399
        %v1296 = vunpack.c.l.s8.bf16 %v400
        %v1297 = vunpack.c.l.s8.bf16 %v401
        %v1298 = vunpack.c.l.s8.bf16 %v402
        %v1299 = vunpack.c.l.s8.bf16 %v403
        %v1300 = vunpack.c.l.s8.bf16 %v404
        %v1301 = vunpack.c.l.s8.bf16 %v405
        %v1302 = vunpack.c.h.s8.bf16 %v398
        %v1303 = vunpack.c.h.s8.bf16 %v399
        %v1304 = vunpack.c.h.s8.bf16 %v400
        %v1305 = vunpack.c.h.s8.bf16 %v401
        %v1306 = vunpack.c.h.s8.bf16 %v402
        %v1307 = vunpack.c.h.s8.bf16 %v403
        %v1308 = vunpack.c.h.s8.bf16 %v404
        %v1309 = vunpack.c.h.s8.bf16 %v405
        %v1310 = vunpack.c.l.s8.bf16 %v406
        %v1311 = vunpack.c.l.s8.bf16 %v407
        %v1312 = vunpack.c.l.s8.bf16 %v408
        %v1313 = vunpack.c.l.s8.bf16 %v409
        %v1314 = vunpack.c.l.s8.bf16 %v410
        %v1315 = vunpack.c.l.s8.bf16 %v411
        %v1316 = vunpack.c.l.s8.bf16 %v412
        %v1317 = vunpack.c.l.s8.bf16 %v413
        %v1318 = vunpack.c.h.s8.bf16 %v406
        %v1319 = vunpack.c.h.s8.bf16 %v407
        %v1320 = vunpack.c.h.s8.bf16 %v408
        %v1321 = vunpack.c.h.s8.bf16 %v409
        %v1322 = vunpack.c.h.s8.bf16 %v410
        %v1323 = vunpack.c.h.s8.bf16 %v411
        %v1324 = vunpack.c.h.s8.bf16 %v412
        %v1325 = vunpack.c.h.s8.bf16 %v413
        %v1326 = vunpack.c.l.s8.bf16 %v414
        %v1327 = vunpack.c.l.s8.bf16 %v415
        %v1328 = vunpack.c.l.s8.bf16 %v416
        %v1329 = vunpack.c.l.s8.bf16 %v417
        %v1330 = vunpack.c.l.s8.bf16 %v418
        %v1331 = vunpack.c.l.s8.bf16 %v419
        %v1332 = vunpack.c.l.s8.bf16 %v420
        %v1333 = vunpack.c.l.s8.bf16 %v421
        %v1334 = vunpack.c.h.s8.bf16 %v414
        %v1335 = vunpack.c.h.s8.bf16 %v415
        %v1336 = vunpack.c.h.s8.bf16 %v416
        %v1337 = vunpack.c.h.s8.bf16 %v417
        %v1338 = vunpack.c.h.s8.bf16 %v418
        %v1339 = vunpack.c.h.s8.bf16 %v419
        %v1340 = vunpack.c.h.s8.bf16 %v420
        %v1341 = vunpack.c.h.s8.bf16 %v421
        %v1342 = vunpack.c.l.s8.bf16 %v422
        %v1343 = vunpack.c.l.s8.bf16 %v423
        %v1344 = vunpack.c.l.s8.bf16 %v424
        %v1345 = vunpack.c.l.s8.bf16 %v425
        %v1346 = vunpack.c.l.s8.bf16 %v426
        %v1347 = vunpack.c.l.s8.bf16 %v427
        %v1348 = vunpack.c.l.s8.bf16 %v428
        %v1349 = vunpack.c.l.s8.bf16 %v429
        %v1350 = vunpack.c.h.s8.bf16 %v422
        %v1351 = vunpack.c.h.s8.bf16 %v423
        %v1352 = vunpack.c.h.s8.bf16 %v424
        %v1353 = vunpack.c.h.s8.bf16 %v425
        %v1354 = vunpack.c.h.s8.bf16 %v426
        %v1355 = vunpack.c.h.s8.bf16 %v427
        %v1356 = vunpack.c.h.s8.bf16 %v428
        %v1357 = vunpack.c.h.s8.bf16 %v429
        %v1358 = vunpack.c.l.s8.bf16 %v430
        %v1359 = vunpack.c.l.s8.bf16 %v431
        %v1360 = vunpack.c.l.s8.bf16 %v432
        %v1361 = vunpack.c.l.s8.bf16 %v433
        %v1362 = vunpack.c.l.s8.bf16 %v434
        %v1363 = vunpack.c.l.s8.bf16 %v435
        %v1364 = vunpack.c.l.s8.bf16 %v436
        %v1365 = vunpack.c.l.s8.bf16 %v437
        %v1366 = vunpack.c.h.s8.bf16 %v430
        %v1367 = vunpack.c.h.s8.bf16 %v431
        %v1368 = vunpack.c.h.s8.bf16 %v432
        %v1369 = vunpack.c.h.s8.bf16 %v433
        %v1370 = vunpack.c.h.s8.bf16 %v434
        %v1371 = vunpack.c.h.s8.bf16 %v435
        %v1372 = vunpack.c.h.s8.bf16 %v436
        %v1373 = vunpack.c.h.s8.bf16 %v437
        %v1374 = vunpack.c.l.s8.bf16 %v438
        %v1375 = vunpack.c.l.s8.bf16 %v439
        %v1376 = vunpack.c.l.s8.bf16 %v440
        %v1377 = vunpack.c.l.s8.bf16 %v441
        %v1378 = vunpack.c.l.s8.bf16 %v442
        %v1379 = vunpack.c.l.s8.bf16 %v443
        %v1380 = vunpack.c.l.s8.bf16 %v444
        %v1381 = vunpack.c.l.s8.bf16 %v445
        %v1382 = vunpack.c.h.s8.bf16 %v438
        %v1383 = vunpack.c.h.s8.bf16 %v439
        %v1384 = vunpack.c.h.s8.bf16 %v440
        %v1385 = vunpack.c.h.s8.bf16 %v441
        %v1386 = vunpack.c.h.s8.bf16 %v442
        %v1387 = vunpack.c.h.s8.bf16 %v443
        %v1388 = vunpack.c.h.s8.bf16 %v444
        %v1389 = vunpack.c.h.s8.bf16 %v445
        %v1390 = vunpack.c.l.s8.bf16 %v446
        %v1391 = vunpack.c.l.s8.bf16 %v447
        %v1392 = vunpack.c.l.s8.bf16 %v448
        %v1393 = vunpack.c.l.s8.bf16 %v449
        %v1394 = vunpack.c.l.s8.bf16 %v450
        %v1395 = vunpack.c.l.s8.bf16 %v451
        %v1396 = vunpack.c.l.s8.bf16 %v452
        %v1397 = vunpack.c.l.s8.bf16 %v453
        %v1398 = vunpack.c.h.s8.bf16 %v446
        %v1399 = vunpack.c.h.s8.bf16 %v447
        %v1400 = vunpack.c.h.s8.bf16 %v448
        %v1401 = vunpack.c.h.s8.bf16 %v449
        %v1402 = vunpack.c.h.s8.bf16 %v450
        %v1403 = vunpack.c.h.s8.bf16 %v451
        %v1404 = vunpack.c.h.s8.bf16 %v452
        %v1405 = vunpack.c.h.s8.bf16 %v453
        %v1406 = vunpack.c.l.s8.bf16 %v454
        %v1407 = vunpack.c.l.s8.bf16 %v455
        %v1408 = vunpack.c.l.s8.bf16 %v456
        %v1409 = vunpack.c.l.s8.bf16 %v457
        %v1410 = vunpack.c.l.s8.bf16 %v458
        %v1411 = vunpack.c.l.s8.bf16 %v459
        %v1412 = vunpack.c.l.s8.bf16 %v460
        %v1413 = vunpack.c.l.s8.bf16 %v461
        %v1414 = vunpack.c.h.s8.bf16 %v454
        %v1415 = vunpack.c.h.s8.bf16 %v455
        %v1416 = vunpack.c.h.s8.bf16 %v456
        %v1417 = vunpack.c.h.s8.bf16 %v457
        %v1418 = vunpack.c.h.s8.bf16 %v458
        %v1419 = vunpack.c.h.s8.bf16 %v459
        %v1420 = vunpack.c.h.s8.bf16 %v460
        %v1421 = vunpack.c.h.s8.bf16 %v461
        %v1422 = vunpack.c.l.s8.bf16 %v462
        %v1423 = vunpack.c.l.s8.bf16 %v463
        %v1424 = vunpack.c.l.s8.bf16 %v464
        %v1425 = vunpack.c.l.s8.bf16 %v465
        %v1426 = vunpack.c.l.s8.bf16 %v466
        %v1427 = vunpack.c.l.s8.bf16 %v467
        %v1428 = vunpack.c.l.s8.bf16 %v468
        %v1429 = vunpack.c.l.s8.bf16 %v469
        %v1430 = vunpack.c.h.s8.bf16 %v462
        %v1431 = vunpack.c.h.s8.bf16 %v463
        %v1432 = vunpack.c.h.s8.bf16 %v464
        %v1433 = vunpack.c.h.s8.bf16 %v465
        %v1434 = vunpack.c.h.s8.bf16 %v466
        %v1435 = vunpack.c.h.s8.bf16 %v467
        %v1436 = vunpack.c.h.s8.bf16 %v468
        %v1437 = vunpack.c.h.s8.bf16 %v469
        %v1438 = vunpack.c.l.s8.bf16 %v470
        %v1439 = vunpack.c.l.s8.bf16 %v471
        %v1440 = vunpack.c.l.s8.bf16 %v472
        %v1441 = vunpack.c.l.s8.bf16 %v473
        %v1442 = vunpack.c.l.s8.bf16 %v474
        %v1443 = vunpack.c.l.s8.bf16 %v475
        %v1444 = vunpack.c.l.s8.bf16 %v476
        %v1445 = vunpack.c.l.s8.bf16 %v477
        %v1446 = vunpack.c.h.s8.bf16 %v470
        %v1447 = vunpack.c.h.s8.bf16 %v471
        %v1448 = vunpack.c.h.s8.bf16 %v472
        %v1449 = vunpack.c.h.s8.bf16 %v473
        %v1450 = vunpack.c.h.s8.bf16 %v474
        %v1451 = vunpack.c.h.s8.bf16 %v475
        %v1452 = vunpack.c.h.s8.bf16 %v476
        %v1453 = vunpack.c.h.s8.bf16 %v477
        %v1454 = vunpack.c.l.s8.bf16 %v478
        %v1455 = vunpack.c.l.s8.bf16 %v479
        %v1456 = vunpack.c.l.s8.bf16 %v480
        %v1457 = vunpack.c.l.s8.bf16 %v481
        %v1458 = vunpack.c.l.s8.bf16 %v482
        %v1459 = vunpack.c.l.s8.bf16 %v483
        %v1460 = vunpack.c.l.s8.bf16 %v484
        %v1461 = vunpack.c.l.s8.bf16 %v485
        %v1462 = vunpack.c.h.s8.bf16 %v478
        %v1463 = vunpack.c.h.s8.bf16 %v479
        %v1464 = vunpack.c.h.s8.bf16 %v480
        %v1465 = vunpack.c.h.s8.bf16 %v481
        %v1466 = vunpack.c.h.s8.bf16 %v482
        %v1467 = vunpack.c.h.s8.bf16 %v483
        %v1468 = vunpack.c.h.s8.bf16 %v484
        %v1469 = vunpack.c.h.s8.bf16 %v485
        %v1470 = vunpack.c.l.s8.bf16 %v486
        %v1471 = vunpack.c.l.s8.bf16 %v487
        %v1472 = vunpack.c.l.s8.bf16 %v488
        %v1473 = vunpack.c.l.s8.bf16 %v489
        %v1474 = vunpack.c.l.s8.bf16 %v490
        %v1475 = vunpack.c.l.s8.bf16 %v491
        %v1476 = vunpack.c.l.s8.bf16 %v492
        %v1477 = vunpack.c.l.s8.bf16 %v493
        %v1478 = vunpack.c.h.s8.bf16 %v486
        %v1479 = vunpack.c.h.s8.bf16 %v487
        %v1480 = vunpack.c.h.s8.bf16 %v488
        %v1481 = vunpack.c.h.s8.bf16 %v489
        %v1482 = vunpack.c.h.s8.bf16 %v490
        %v1483 = vunpack.c.h.s8.bf16 %v491
        %v1484 = vunpack.c.h.s8.bf16 %v492
        %v1485 = vunpack.c.h.s8.bf16 %v493
        %v1486 = vunpack.c.l.s8.bf16 %v494
        %v1487 = vunpack.c.l.s8.bf16 %v495
        %v1488 = vunpack.c.l.s8.bf16 %v496
        %v1489 = vunpack.c.l.s8.bf16 %v497
        %v1490 = vunpack.c.l.s8.bf16 %v498
        %v1491 = vunpack.c.l.s8.bf16 %v499
        %v1492 = vunpack.c.l.s8.bf16 %v500
        %v1493 = vunpack.c.l.s8.bf16 %v501
        %v1494 = vunpack.c.h.s8.bf16 %v494
        %v1495 = vunpack.c.h.s8.bf16 %v495
        %v1496 = vunpack.c.h.s8.bf16 %v496
        %v1497 = vunpack.c.h.s8.bf16 %v497
        %v1498 = vunpack.c.h.s8.bf16 %v498
        %v1499 = vunpack.c.h.s8.bf16 %v499
        %v1500 = vunpack.c.h.s8.bf16 %v500
        %v1501 = vunpack.c.h.s8.bf16 %v501
        %v1502 = vunpack.c.l.s8.bf16 %v502
        %v1503 = vunpack.c.l.s8.bf16 %v503
        %v1504 = vunpack.c.l.s8.bf16 %v504
        %v1505 = vunpack.c.l.s8.bf16 %v505
        %v1506 = vunpack.c.l.s8.bf16 %v506
        %v1507 = vunpack.c.l.s8.bf16 %v507
        %v1508 = vunpack.c.l.s8.bf16 %v508
        %v1509 = vunpack.c.l.s8.bf16 %v509
        %v1510 = vunpack.c.h.s8.bf16 %v502
        %v1511 = vunpack.c.h.s8.bf16 %v503
        %v1512 = vunpack.c.h.s8.bf16 %v504
        %v1513 = vunpack.c.h.s8.bf16 %v505
        %v1514 = vunpack.c.h.s8.bf16 %v506
        %v1515 = vunpack.c.h.s8.bf16 %v507
        %v1516 = vunpack.c.h.s8.bf16 %v508
        %v1517 = vunpack.c.h.s8.bf16 %v509
        %v1518 = vunpack.c.l.s8.bf16 %v510
        %v1519 = vunpack.c.l.s8.bf16 %v511
        %v1520 = vunpack.c.l.s8.bf16 %v512
        %v1521 = vunpack.c.l.s8.bf16 %v513
        %v1522 = vunpack.c.l.s8.bf16 %v514
        %v1523 = vunpack.c.l.s8.bf16 %v515
        %v1524 = vunpack.c.l.s8.bf16 %v516
        %v1525 = vunpack.c.l.s8.bf16 %v517
        %v1526 = vunpack.c.h.s8.bf16 %v510
        %v1527 = vunpack.c.h.s8.bf16 %v511
        %v1528 = vunpack.c.h.s8.bf16 %v512
        %v1529 = vunpack.c.h.s8.bf16 %v513
        %v1530 = vunpack.c.h.s8.bf16 %v514
        %v1531 = vunpack.c.h.s8.bf16 %v515
        %v1532 = vunpack.c.h.s8.bf16 %v516
        %v1533 = vunpack.c.h.s8.bf16 %v517
        %v1534 = vunpack.c.l.s8.bf16 %v518
        %v1535 = vunpack.c.l.s8.bf16 %v519
        %v1536 = vunpack.c.l.s8.bf16 %v520
        %v1537 = vunpack.c.l.s8.bf16 %v521
        %v1538 = vunpack.c.l.s8.bf16 %v522
        %v1539 = vunpack.c.l.s8.bf16 %v523
        %v1540 = vunpack.c.l.s8.bf16 %v524
        %v1541 = vunpack.c.l.s8.bf16 %v525
        %v1542 = vunpack.c.h.s8.bf16 %v518
        %v1543 = vunpack.c.h.s8.bf16 %v519
        %v1544 = vunpack.c.h.s8.bf16 %v520
        %v1545 = vunpack.c.h.s8.bf16 %v521
        %v1546 = vunpack.c.h.s8.bf16 %v522
        %v1547 = vunpack.c.h.s8.bf16 %v523
        %v1548 = vunpack.c.h.s8.bf16 %v524
        %v1549 = vunpack.c.h.s8.bf16 %v525
        %v1550 = vunpack.c.l.s8.bf16 %v526
        %v1551 = vunpack.c.l.s8.bf16 %v527
        %v1552 = vunpack.c.l.s8.bf16 %v528
        %v1553 = vunpack.c.l.s8.bf16 %v529
        %v1554 = vunpack.c.l.s8.bf16 %v530
        %v1555 = vunpack.c.l.s8.bf16 %v531
        %v1556 = vunpack.c.l.s8.bf16 %v532
        %v1557 = vunpack.c.l.s8.bf16 %v533
        %v1558 = vunpack.c.h.s8.bf16 %v526
        %v1559 = vunpack.c.h.s8.bf16 %v527
        %v1560 = vunpack.c.h.s8.bf16 %v528
        %v1561 = vunpack.c.h.s8.bf16 %v529
        %v1562 = vunpack.c.h.s8.bf16 %v530
        %v1563 = vunpack.c.h.s8.bf16 %v531
        %v1564 = vunpack.c.h.s8.bf16 %v532
        %v1565 = vunpack.c.h.s8.bf16 %v533
        %v1566 = vunpack.c.l.s8.bf16 %v534
        %v1567 = vunpack.c.l.s8.bf16 %v535
        %v1568 = vunpack.c.l.s8.bf16 %v536
        %v1569 = vunpack.c.l.s8.bf16 %v537
        %v1570 = vunpack.c.l.s8.bf16 %v538
        %v1571 = vunpack.c.l.s8.bf16 %v539
        %v1572 = vunpack.c.l.s8.bf16 %v540
        %v1573 = vunpack.c.l.s8.bf16 %v541
        %v1574 = vunpack.c.h.s8.bf16 %v534
        %v1575 = vunpack.c.h.s8.bf16 %v535
        %v1576 = vunpack.c.h.s8.bf16 %v536
        %v1577 = vunpack.c.h.s8.bf16 %v537
        %v1578 = vunpack.c.h.s8.bf16 %v538
        %v1579 = vunpack.c.h.s8.bf16 %v539
        %v1580 = vunpack.c.h.s8.bf16 %v540
        %v1581 = vunpack.c.h.s8.bf16 %v541
        %v1582 = vunpack.c.l.s8.bf16 %v542
        %v1583 = vunpack.c.l.s8.bf16 %v543
        %v1584 = vunpack.c.l.s8.bf16 %v544
        %v1585 = vunpack.c.l.s8.bf16 %v545
        %v1586 = vunpack.c.l.s8.bf16 %v546
        %v1587 = vunpack.c.l.s8.bf16 %v547
        %v1588 = vunpack.c.l.s8.bf16 %v548
        %v1589 = vunpack.c.l.s8.bf16 %v549
        %v1590 = vunpack.c.h.s8.bf16 %v542
        %v1591 = vunpack.c.h.s8.bf16 %v543
        %v1592 = vunpack.c.h.s8.bf16 %v544
        %v1593 = vunpack.c.h.s8.bf16 %v545
        %v1594 = vunpack.c.h.s8.bf16 %v546
        %v1595 = vunpack.c.h.s8.bf16 %v547
        %v1596 = vunpack.c.h.s8.bf16 %v548
        %v1597 = vunpack.c.h.s8.bf16 %v549
        %v1598 = vunpack.c.l.s8.bf16 %v550
        %v1599 = vunpack.c.l.s8.bf16 %v551
        %v1600 = vunpack.c.l.s8.bf16 %v552
        %v1601 = vunpack.c.l.s8.bf16 %v553
        %v1602 = vunpack.c.l.s8.bf16 %v554
        %v1603 = vunpack.c.l.s8.bf16 %v555
        %v1604 = vunpack.c.l.s8.bf16 %v556
        %v1605 = vunpack.c.l.s8.bf16 %v557
        %v1606 = vunpack.c.h.s8.bf16 %v550
        %v1607 = vunpack.c.h.s8.bf16 %v551
        %v1608 = vunpack.c.h.s8.bf16 %v552
        %v1609 = vunpack.c.h.s8.bf16 %v553
        %v1610 = vunpack.c.h.s8.bf16 %v554
        %v1611 = vunpack.c.h.s8.bf16 %v555
        %v1612 = vunpack.c.h.s8.bf16 %v556
        %v1613 = vunpack.c.h.s8.bf16 %v557
        %v1614 = vunpack.c.l.s8.bf16 %v558
        %v1615 = vunpack.c.l.s8.bf16 %v559
        %v1616 = vunpack.c.l.s8.bf16 %v560
        %v1617 = vunpack.c.l.s8.bf16 %v561
        %v1618 = vunpack.c.l.s8.bf16 %v562
        %v1619 = vunpack.c.l.s8.bf16 %v563
        %v1620 = vunpack.c.l.s8.bf16 %v564
        %v1621 = vunpack.c.l.s8.bf16 %v565
        %v1622 = vunpack.c.h.s8.bf16 %v558
        %v1623 = vunpack.c.h.s8.bf16 %v559
        %v1624 = vunpack.c.h.s8.bf16 %v560
        %v1625 = vunpack.c.h.s8.bf16 %v561
        %v1626 = vunpack.c.h.s8.bf16 %v562
        %v1627 = vunpack.c.h.s8.bf16 %v563
        %v1628 = vunpack.c.h.s8.bf16 %v564
        %v1629 = vunpack.c.h.s8.bf16 %v565
        %v1630 = vunpack.c.l.s8.bf16 %v566
        %v1631 = vunpack.c.l.s8.bf16 %v567
        %v1632 = vunpack.c.l.s8.bf16 %v568
        %v1633 = vunpack.c.l.s8.bf16 %v569
        %v1634 = vunpack.c.l.s8.bf16 %v570
        %v1635 = vunpack.c.l.s8.bf16 %v571
        %v1636 = vunpack.c.l.s8.bf16 %v572
        %v1637 = vunpack.c.l.s8.bf16 %v573
        %v1638 = vunpack.c.h.s8.bf16 %v566
        %v1639 = vunpack.c.h.s8.bf16 %v567
        %v1640 = vunpack.c.h.s8.bf16 %v568
        %v1641 = vunpack.c.h.s8.bf16 %v569
        %v1642 = vunpack.c.h.s8.bf16 %v570
        %v1643 = vunpack.c.h.s8.bf16 %v571
        %v1644 = vunpack.c.h.s8.bf16 %v572
        %v1645 = vunpack.c.h.s8.bf16 %v573
        %v1646 = vunpack.c.l.s8.bf16 %v574
        %v1647 = vunpack.c.l.s8.bf16 %v575
        %v1648 = vunpack.c.l.s8.bf16 %v576
        %v1649 = vunpack.c.l.s8.bf16 %v577
        %v1650 = vunpack.c.l.s8.bf16 %v578
        %v1651 = vunpack.c.l.s8.bf16 %v579
        %v1652 = vunpack.c.l.s8.bf16 %v580
        %v1653 = vunpack.c.l.s8.bf16 %v581
        %v1654 = vunpack.c.h.s8.bf16 %v574
        %v1655 = vunpack.c.h.s8.bf16 %v575
        %v1656 = vunpack.c.h.s8.bf16 %v576
        %v1657 = vunpack.c.h.s8.bf16 %v577
        %v1658 = vunpack.c.h.s8.bf16 %v578
        %v1659 = vunpack.c.h.s8.bf16 %v579
        %v1660 = vunpack.c.h.s8.bf16 %v580
        %v1661 = vunpack.c.h.s8.bf16 %v581
        %v1662 = vunpack.c.l.s8.bf16 %v582
        %v1663 = vunpack.c.l.s8.bf16 %v583
        %v1664 = vunpack.c.l.s8.bf16 %v584
        %v1665 = vunpack.c.l.s8.bf16 %v585
        %v1666 = vunpack.c.l.s8.bf16 %v586
        %v1667 = vunpack.c.l.s8.bf16 %v587
        %v1668 = vunpack.c.l.s8.bf16 %v588
        %v1669 = vunpack.c.l.s8.bf16 %v589
        %v1670 = vunpack.c.h.s8.bf16 %v582
        %v1671 = vunpack.c.h.s8.bf16 %v583
        %v1672 = vunpack.c.h.s8.bf16 %v584
        %v1673 = vunpack.c.h.s8.bf16 %v585
        %v1674 = vunpack.c.h.s8.bf16 %v586
        %v1675 = vunpack.c.h.s8.bf16 %v587
        %v1676 = vunpack.c.h.s8.bf16 %v588
        %v1677 = vunpack.c.h.s8.bf16 %v589
        %v1678 = vunpack.c.l.s8.bf16 %v590
        %v1679 = vunpack.c.l.s8.bf16 %v591
        %v1680 = vunpack.c.l.s8.bf16 %v592
        %v1681 = vunpack.c.l.s8.bf16 %v593
        %v1682 = vunpack.c.l.s8.bf16 %v594
        %v1683 = vunpack.c.l.s8.bf16 %v595
        %v1684 = vunpack.c.l.s8.bf16 %v596
        %v1685 = vunpack.c.l.s8.bf16 %v597
        %v1686 = vunpack.c.h.s8.bf16 %v590
        %v1687 = vunpack.c.h.s8.bf16 %v591
        %v1688 = vunpack.c.h.s8.bf16 %v592
        %v1689 = vunpack.c.h.s8.bf16 %v593
        %v1690 = vunpack.c.h.s8.bf16 %v594
        %v1691 = vunpack.c.h.s8.bf16 %v595
        %v1692 = vunpack.c.h.s8.bf16 %v596
        %v1693 = vunpack.c.h.s8.bf16 %v597
        %v1694 = vunpack.c.l.s8.bf16 %v598
        %v1695 = vunpack.c.l.s8.bf16 %v599
        %v1696 = vunpack.c.l.s8.bf16 %v600
        %v1697 = vunpack.c.l.s8.bf16 %v601
        %v1698 = vunpack.c.l.s8.bf16 %v602
        %v1699 = vunpack.c.l.s8.bf16 %v603
        %v1700 = vunpack.c.l.s8.bf16 %v604
        %v1701 = vunpack.c.l.s8.bf16 %v605
        %v1702 = vunpack.c.h.s8.bf16 %v598
        %v1703 = vunpack.c.h.s8.bf16 %v599
        %v1704 = vunpack.c.h.s8.bf16 %v600
        %v1705 = vunpack.c.h.s8.bf16 %v601
        %v1706 = vunpack.c.h.s8.bf16 %v602
        %v1707 = vunpack.c.h.s8.bf16 %v603
        %v1708 = vunpack.c.h.s8.bf16 %v604
        %v1709 = vunpack.c.h.s8.bf16 %v605
        %v1710 = vunpack.c.l.s8.bf16 %v606
        %v1711 = vunpack.c.l.s8.bf16 %v607
        %v1712 = vunpack.c.l.s8.bf16 %v608
        %v1713 = vunpack.c.l.s8.bf16 %v609
        %v1714 = vunpack.c.l.s8.bf16 %v610
        %v1715 = vunpack.c.l.s8.bf16 %v611
        %v1716 = vunpack.c.l.s8.bf16 %v612
        %v1717 = vunpack.c.l.s8.bf16 %v613
        %v1718 = vunpack.c.h.s8.bf16 %v606
        %v1719 = vunpack.c.h.s8.bf16 %v607
        %v1720 = vunpack.c.h.s8.bf16 %v608
        %v1721 = vunpack.c.h.s8.bf16 %v609
        %v1722 = vunpack.c.h.s8.bf16 %v610
        %v1723 = vunpack.c.h.s8.bf16 %v611
        %v1724 = vunpack.c.h.s8.bf16 %v612
        %v1725 = vunpack.c.h.s8.bf16 %v613
        %v1726 = vunpack.c.l.s8.bf16 %v614
        %v1727 = vunpack.c.l.s8.bf16 %v615
        %v1728 = vunpack.c.l.s8.bf16 %v616
        %v1729 = vunpack.c.l.s8.bf16 %v617
        %v1730 = vunpack.c.l.s8.bf16 %v618
        %v1731 = vunpack.c.l.s8.bf16 %v619
        %v1732 = vunpack.c.l.s8.bf16 %v620
        %v1733 = vunpack.c.l.s8.bf16 %v621
        %v1734 = vunpack.c.h.s8.bf16 %v614
        %v1735 = vunpack.c.h.s8.bf16 %v615
        %v1736 = vunpack.c.h.s8.bf16 %v616
        %v1737 = vunpack.c.h.s8.bf16 %v617
        %v1738 = vunpack.c.h.s8.bf16 %v618
        %v1739 = vunpack.c.h.s8.bf16 %v619
        %v1740 = vunpack.c.h.s8.bf16 %v620
        %v1741 = vunpack.c.h.s8.bf16 %v621
        %v1742 = vunpack.c.l.s8.bf16 %v622
        %v1743 = vunpack.c.l.s8.bf16 %v623
        %v1744 = vunpack.c.l.s8.bf16 %v624
        %v1745 = vunpack.c.l.s8.bf16 %v625
        %v1746 = vunpack.c.l.s8.bf16 %v626
        %v1747 = vunpack.c.l.s8.bf16 %v627
        %v1748 = vunpack.c.l.s8.bf16 %v628
        %v1749 = vunpack.c.l.s8.bf16 %v629
        %v1750 = vunpack.c.h.s8.bf16 %v622
        %v1751 = vunpack.c.h.s8.bf16 %v623
        %v1752 = vunpack.c.h.s8.bf16 %v624
        %v1753 = vunpack.c.h.s8.bf16 %v625
        %v1754 = vunpack.c.h.s8.bf16 %v626
        %v1755 = vunpack.c.h.s8.bf16 %v627
        %v1756 = vunpack.c.h.s8.bf16 %v628
        %v1757 = vunpack.c.h.s8.bf16 %v629
        %v1758 = vunpack.c.l.s8.bf16 %v630
        %v1759 = vunpack.c.l.s8.bf16 %v631
        %v1760 = vunpack.c.l.s8.bf16 %v632
        %v1761 = vunpack.c.l.s8.bf16 %v633
        %v1762 = vunpack.c.l.s8.bf16 %v634
        %v1763 = vunpack.c.l.s8.bf16 %v635
        %v1764 = vunpack.c.l.s8.bf16 %v636
        %v1765 = vunpack.c.l.s8.bf16 %v637
        %v1766 = vunpack.c.h.s8.bf16 %v630
        %v1767 = vunpack.c.h.s8.bf16 %v631
        %v1768 = vunpack.c.h.s8.bf16 %v632
        %v1769 = vunpack.c.h.s8.bf16 %v633
        %v1770 = vunpack.c.h.s8.bf16 %v634
        %v1771 = vunpack.c.h.s8.bf16 %v635
        %v1772 = vunpack.c.h.s8.bf16 %v636
        %v1773 = vunpack.c.h.s8.bf16 %v637
        %v1774 = vunpack.c.l.s8.bf16 %v638
        %v1775 = vunpack.c.l.s8.bf16 %v639
        %v1776 = vunpack.c.l.s8.bf16 %v640
        %v1777 = vunpack.c.l.s8.bf16 %v641
        %v1778 = vunpack.c.l.s8.bf16 %v642
        %v1779 = vunpack.c.l.s8.bf16 %v643
        %v1780 = vunpack.c.l.s8.bf16 %v644
        %v1781 = vunpack.c.l.s8.bf16 %v645
        %v1782 = vunpack.c.h.s8.bf16 %v638
        %v1783 = vunpack.c.h.s8.bf16 %v639
        %v1784 = vunpack.c.h.s8.bf16 %v640
        %v1785 = vunpack.c.h.s8.bf16 %v641
        %v1786 = vunpack.c.h.s8.bf16 %v642
        %v1787 = vunpack.c.h.s8.bf16 %v643
        %v1788 = vunpack.c.h.s8.bf16 %v644
        %v1789 = vunpack.c.h.s8.bf16 %v645
        %v1790 = vunpack.c.l.s8.bf16 %v646
        %v1791 = vunpack.c.l.s8.bf16 %v647
        %v1792 = vunpack.c.l.s8.bf16 %v648
        %v1793 = vunpack.c.l.s8.bf16 %v649
        %v1794 = vunpack.c.l.s8.bf16 %v650
        %v1795 = vunpack.c.l.s8.bf16 %v651
        %v1796 = vunpack.c.l.s8.bf16 %v652
        %v1797 = vunpack.c.l.s8.bf16 %v653
        %v1798 = vunpack.c.h.s8.bf16 %v646
        %v1799 = vunpack.c.h.s8.bf16 %v647
        %v1800 = vunpack.c.h.s8.bf16 %v648
        %v1801 = vunpack.c.h.s8.bf16 %v649
        %v1802 = vunpack.c.h.s8.bf16 %v650
        %v1803 = vunpack.c.h.s8.bf16 %v651
        %v1804 = vunpack.c.h.s8.bf16 %v652
        %v1805 = vunpack.c.h.s8.bf16 %v653
        %v1806 = vunpack.c.l.s8.bf16 %v654
        %v1807 = vunpack.c.l.s8.bf16 %v655
        %v1808 = vunpack.c.l.s8.bf16 %v656
        %v1809 = vunpack.c.l.s8.bf16 %v657
        %v1810 = vunpack.c.l.s8.bf16 %v658
        %v1811 = vunpack.c.l.s8.bf16 %v659
        %v1812 = vunpack.c.l.s8.bf16 %v660
        %v1813 = vunpack.c.l.s8.bf16 %v661
        %v1814 = vunpack.c.h.s8.bf16 %v654
        %v1815 = vunpack.c.h.s8.bf16 %v655
        %v1816 = vunpack.c.h.s8.bf16 %v656
        %v1817 = vunpack.c.h.s8.bf16 %v657
        %v1818 = vunpack.c.h.s8.bf16 %v658
        %v1819 = vunpack.c.h.s8.bf16 %v659
        %v1820 = vunpack.c.h.s8.bf16 %v660
        %v1821 = vunpack.c.h.s8.bf16 %v661
        %v1822 = vunpack.c.l.s8.bf16 %v662
        %v1823 = vunpack.c.l.s8.bf16 %v663
        %v1824 = vunpack.c.l.s8.bf16 %v664
        %v1825 = vunpack.c.l.s8.bf16 %v665
        %v1826 = vunpack.c.l.s8.bf16 %v666
        %v1827 = vunpack.c.l.s8.bf16 %v667
        %v1828 = vunpack.c.l.s8.bf16 %v668
        %v1829 = vunpack.c.l.s8.bf16 %v669
        %v1830 = vunpack.c.h.s8.bf16 %v662
        %v1831 = vunpack.c.h.s8.bf16 %v663
        %v1832 = vunpack.c.h.s8.bf16 %v664
        %v1833 = vunpack.c.h.s8.bf16 %v665
        %v1834 = vunpack.c.h.s8.bf16 %v666
        %v1835 = vunpack.c.h.s8.bf16 %v667
        %v1836 = vunpack.c.h.s8.bf16 %v668
        %v1837 = vunpack.c.h.s8.bf16 %v669
        %v1838 = vunpack.c.l.s8.bf16 %v670
        %v1839 = vunpack.c.l.s8.bf16 %v671
        %v1840 = vunpack.c.l.s8.bf16 %v672
        %v1841 = vunpack.c.l.s8.bf16 %v673
        %v1842 = vunpack.c.l.s8.bf16 %v674
        %v1843 = vunpack.c.l.s8.bf16 %v675
        %v1844 = vunpack.c.l.s8.bf16 %v676
        %v1845 = vunpack.c.l.s8.bf16 %v677
        %v1846 = vunpack.c.h.s8.bf16 %v670
        %v1847 = vunpack.c.h.s8.bf16 %v671
        %v1848 = vunpack.c.h.s8.bf16 %v672
        %v1849 = vunpack.c.h.s8.bf16 %v673
        %v1850 = vunpack.c.h.s8.bf16 %v674
        %v1851 = vunpack.c.h.s8.bf16 %v675
        %v1852 = vunpack.c.h.s8.bf16 %v676
        %v1853 = vunpack.c.h.s8.bf16 %v677
        %v1854 = vunpack.c.l.s8.bf16 %v678
        %v1855 = vunpack.c.l.s8.bf16 %v679
        %v1856 = vunpack.c.l.s8.bf16 %v680
        %v1857 = vunpack.c.l.s8.bf16 %v681
        %v1858 = vunpack.c.l.s8.bf16 %v682
        %v1859 = vunpack.c.l.s8.bf16 %v683
        %v1860 = vunpack.c.l.s8.bf16 %v684
        %v1861 = vunpack.c.l.s8.bf16 %v685
        %v1862 = vunpack.c.h.s8.bf16 %v678
        %v1863 = vunpack.c.h.s8.bf16 %v679
        %v1864 = vunpack.c.h.s8.bf16 %v680
        %v1865 = vunpack.c.h.s8.bf16 %v681
        %v1866 = vunpack.c.h.s8.bf16 %v682
        %v1867 = vunpack.c.h.s8.bf16 %v683
        %v1868 = vunpack.c.h.s8.bf16 %v684
        %v1869 = vunpack.c.h.s8.bf16 %v685
        %v1870 = vunpack.c.l.s8.bf16 %v686
        %v1871 = vunpack.c.l.s8.bf16 %v687
        %v1872 = vunpack.c.l.s8.bf16 %v688
        %v1873 = vunpack.c.l.s8.bf16 %v689
        %v1874 = vunpack.c.l.s8.bf16 %v690
        %v1875 = vunpack.c.l.s8.bf16 %v691
        %v1876 = vunpack.c.l.s8.bf16 %v692
        %v1877 = vunpack.c.l.s8.bf16 %v693
        %v1878 = vunpack.c.h.s8.bf16 %v686
        %v1879 = vunpack.c.h.s8.bf16 %v687
        %v1880 = vunpack.c.h.s8.bf16 %v688
        %v1881 = vunpack.c.h.s8.bf16 %v689
        %v1882 = vunpack.c.h.s8.bf16 %v690
        %v1883 = vunpack.c.h.s8.bf16 %v691
        %v1884 = vunpack.c.h.s8.bf16 %v692
        %v1885 = vunpack.c.h.s8.bf16 %v693
        %v1886 = vunpack.c.l.s8.bf16 %v694
        %v1887 = vunpack.c.l.s8.bf16 %v695
        %v1888 = vunpack.c.l.s8.bf16 %v696
        %v1889 = vunpack.c.l.s8.bf16 %v697
        %v1890 = vunpack.c.l.s8.bf16 %v698
        %v1891 = vunpack.c.l.s8.bf16 %v699
        %v1892 = vunpack.c.l.s8.bf16 %v700
        %v1893 = vunpack.c.l.s8.bf16 %v701
        %v1894 = vunpack.c.h.s8.bf16 %v694
        %v1895 = vunpack.c.h.s8.bf16 %v695
        %v1896 = vunpack.c.h.s8.bf16 %v696
        %v1897 = vunpack.c.h.s8.bf16 %v697
        %v1898 = vunpack.c.h.s8.bf16 %v698
        %v1899 = vunpack.c.h.s8.bf16 %v699
        %v1900 = vunpack.c.h.s8.bf16 %v700
        %v1901 = vunpack.c.h.s8.bf16 %v701
        %v1902 = vunpack.c.l.s8.bf16 %v702
        %v1903 = vunpack.c.l.s8.bf16 %v703
        %v1904 = vunpack.c.l.s8.bf16 %v704
        %v1905 = vunpack.c.l.s8.bf16 %v705
        %v1906 = vunpack.c.l.s8.bf16 %v706
        %v1907 = vunpack.c.l.s8.bf16 %v707
        %v1908 = vunpack.c.l.s8.bf16 %v708
        %v1909 = vunpack.c.l.s8.bf16 %v709
        %v1910 = vunpack.c.h.s8.bf16 %v702
        %v1911 = vunpack.c.h.s8.bf16 %v703
        %v1912 = vunpack.c.h.s8.bf16 %v704
        %v1913 = vunpack.c.h.s8.bf16 %v705
        %v1914 = vunpack.c.h.s8.bf16 %v706
        %v1915 = vunpack.c.h.s8.bf16 %v707
        %v1916 = vunpack.c.h.s8.bf16 %v708
        %v1917 = vunpack.c.h.s8.bf16 %v709
        %v1918 = vunpack.c.l.s8.bf16 %v710
        %v1919 = vunpack.c.l.s8.bf16 %v711
        %v1920 = vunpack.c.l.s8.bf16 %v712
        %v1921 = vunpack.c.l.s8.bf16 %v713
        %v1922 = vunpack.c.l.s8.bf16 %v714
        %v1923 = vunpack.c.l.s8.bf16 %v715
        %v1924 = vunpack.c.l.s8.bf16 %v716
        %v1925 = vunpack.c.l.s8.bf16 %v717
        %v1926 = vunpack.c.h.s8.bf16 %v710
        %v1927 = vunpack.c.h.s8.bf16 %v711
        %v1928 = vunpack.c.h.s8.bf16 %v712
        %v1929 = vunpack.c.h.s8.bf16 %v713
        %v1930 = vunpack.c.h.s8.bf16 %v714
        %v1931 = vunpack.c.h.s8.bf16 %v715
        %v1932 = vunpack.c.h.s8.bf16 %v716
        %v1933 = vunpack.c.h.s8.bf16 %v717
        %v1934 = vunpack.c.l.s8.bf16 %v718
        %v1935 = vunpack.c.l.s8.bf16 %v719
        %v1936 = vunpack.c.l.s8.bf16 %v720
        %v1937 = vunpack.c.l.s8.bf16 %v721
        %v1938 = vunpack.c.l.s8.bf16 %v722
        %v1939 = vunpack.c.l.s8.bf16 %v723
        %v1940 = vunpack.c.l.s8.bf16 %v724
        %v1941 = vunpack.c.l.s8.bf16 %v725
        %v1942 = vunpack.c.h.s8.bf16 %v718
        %v1943 = vunpack.c.h.s8.bf16 %v719
        %v1944 = vunpack.c.h.s8.bf16 %v720
        %v1945 = vunpack.c.h.s8.bf16 %v721
        %v1946 = vunpack.c.h.s8.bf16 %v722
        %v1947 = vunpack.c.h.s8.bf16 %v723
        %v1948 = vunpack.c.h.s8.bf16 %v724
        %v1949 = vunpack.c.h.s8.bf16 %v725
        %v1950 = vunpack.c.l.s8.bf16 %v726
        %v1951 = vunpack.c.l.s8.bf16 %v727
        %v1952 = vunpack.c.l.s8.bf16 %v728
        %v1953 = vunpack.c.l.s8.bf16 %v729
        %v1954 = vunpack.c.l.s8.bf16 %v730
        %v1955 = vunpack.c.l.s8.bf16 %v731
        %v1956 = vunpack.c.l.s8.bf16 %v732
        %v1957 = vunpack.c.l.s8.bf16 %v733
        %v1958 = vunpack.c.h.s8.bf16 %v726
        %v1959 = vunpack.c.h.s8.bf16 %v727
        %v1960 = vunpack.c.h.s8.bf16 %v728
        %v1961 = vunpack.c.h.s8.bf16 %v729
        %v1962 = vunpack.c.h.s8.bf16 %v730
        %v1963 = vunpack.c.h.s8.bf16 %v731
        %v1964 = vunpack.c.h.s8.bf16 %v732
        %v1965 = vunpack.c.h.s8.bf16 %v733
        %v1966 = vunpack.c.l.s8.bf16 %v734
        %v1967 = vunpack.c.l.s8.bf16 %v735
        %v1968 = vunpack.c.l.s8.bf16 %v736
        %v1969 = vunpack.c.l.s8.bf16 %v737
        %v1970 = vunpack.c.l.s8.bf16 %v738
        %v1971 = vunpack.c.l.s8.bf16 %v739
        %v1972 = vunpack.c.l.s8.bf16 %v740
        %v1973 = vunpack.c.l.s8.bf16 %v741
        %v1974 = vunpack.c.h.s8.bf16 %v734
        %v1975 = vunpack.c.h.s8.bf16 %v735
        %v1976 = vunpack.c.h.s8.bf16 %v736
        %v1977 = vunpack.c.h.s8.bf16 %v737
        %v1978 = vunpack.c.h.s8.bf16 %v738
        %v1979 = vunpack.c.h.s8.bf16 %v739
        %v1980 = vunpack.c.h.s8.bf16 %v740
        %v1981 = vunpack.c.h.s8.bf16 %v741
        %v1982 = vunpack.c.l.s8.bf16 %v742
        %v1983 = vunpack.c.l.s8.bf16 %v743
        %v1984 = vunpack.c.l.s8.bf16 %v744
        %v1985 = vunpack.c.l.s8.bf16 %v745
        %v1986 = vunpack.c.l.s8.bf16 %v746
        %v1987 = vunpack.c.l.s8.bf16 %v747
        %v1988 = vunpack.c.l.s8.bf16 %v748
        %v1989 = vunpack.c.l.s8.bf16 %v749
        %v1990 = vunpack.c.h.s8.bf16 %v742
        %v1991 = vunpack.c.h.s8.bf16 %v743
        %v1992 = vunpack.c.h.s8.bf16 %v744
        %v1993 = vunpack.c.h.s8.bf16 %v745
        %v1994 = vunpack.c.h.s8.bf16 %v746
        %v1995 = vunpack.c.h.s8.bf16 %v747
        %v1996 = vunpack.c.h.s8.bf16 %v748
        %v1997 = vunpack.c.h.s8.bf16 %v749
        %v1998 = vunpack.c.l.s8.bf16 %v750
        %v1999 = vunpack.c.l.s8.bf16 %v751
        %v2000 = vunpack.c.l.s8.bf16 %v752
        %v2001 = vunpack.c.l.s8.bf16 %v753
        %v2002 = vunpack.c.l.s8.bf16 %v754
        %v2003 = vunpack.c.l.s8.bf16 %v755
        %v2004 = vunpack.c.l.s8.bf16 %v756
        %v2005 = vunpack.c.l.s8.bf16 %v757
        %v2006 = vunpack.c.h.s8.bf16 %v750
        %v2007 = vunpack.c.h.s8.bf16 %v751
        %v2008 = vunpack.c.h.s8.bf16 %v752
        %v2009 = vunpack.c.h.s8.bf16 %v753
        %v2010 = vunpack.c.h.s8.bf16 %v754
        %v2011 = vunpack.c.h.s8.bf16 %v755
        %v2012 = vunpack.c.h.s8.bf16 %v756
        %v2013 = vunpack.c.h.s8.bf16 %v757
        %v2014 = vunpack.c.l.s8.bf16 %v758
        %v2015 = vunpack.c.l.s8.bf16 %v759
        %v2016 = vunpack.c.l.s8.bf16 %v760
        %v2017 = vunpack.c.l.s8.bf16 %v761
        %v2018 = vunpack.c.l.s8.bf16 %v762
        %v2019 = vunpack.c.l.s8.bf16 %v763
        %v2020 = vunpack.c.l.s8.bf16 %v764
        %v2021 = vunpack.c.l.s8.bf16 %v765
        %v2022 = vunpack.c.h.s8.bf16 %v758
        %v2023 = vunpack.c.h.s8.bf16 %v759
        %v2024 = vunpack.c.h.s8.bf16 %v760
        %v2025 = vunpack.c.h.s8.bf16 %v761
        %v2026 = vunpack.c.h.s8.bf16 %v762
        %v2027 = vunpack.c.h.s8.bf16 %v763
        %v2028 = vunpack.c.h.s8.bf16 %v764
        %v2029 = vunpack.c.h.s8.bf16 %v765
        %v2030 = vunpack.c.l.s8.bf16 %v766
        %v2031 = vunpack.c.l.s8.bf16 %v767
        %v2032 = vunpack.c.l.s8.bf16 %v768
        %v2033 = vunpack.c.l.s8.bf16 %v769
        %v2034 = vunpack.c.l.s8.bf16 %v770
        %v2035 = vunpack.c.l.s8.bf16 %v771
        %v2036 = vunpack.c.l.s8.bf16 %v772
        %v2037 = vunpack.c.l.s8.bf16 %v773
        %v2038 = vunpack.c.h.s8.bf16 %v766
        %v2039 = vunpack.c.h.s8.bf16 %v767
        %v2040 = vunpack.c.h.s8.bf16 %v768
        %v2041 = vunpack.c.h.s8.bf16 %v769
        %v2042 = vunpack.c.h.s8.bf16 %v770
        %v2043 = vunpack.c.h.s8.bf16 %v771
        %v2044 = vunpack.c.h.s8.bf16 %v772
        %v2045 = vunpack.c.h.s8.bf16 %v773
        %v2046 = vunpack.c.l.s8.bf16 %v774
        %v2047 = vunpack.c.l.s8.bf16 %v775
        %v2048 = vunpack.c.l.s8.bf16 %v776
        %v2049 = vunpack.c.l.s8.bf16 %v777
        %v2050 = vunpack.c.l.s8.bf16 %v778
        %v2051 = vunpack.c.l.s8.bf16 %v779
        %v2052 = vunpack.c.l.s8.bf16 %v780
        %v2053 = vunpack.c.l.s8.bf16 %v781
        %v2054 = vunpack.c.h.s8.bf16 %v774
        %v2055 = vunpack.c.h.s8.bf16 %v775
        %v2056 = vunpack.c.h.s8.bf16 %v776
        %v2057 = vunpack.c.h.s8.bf16 %v777
        %v2058 = vunpack.c.h.s8.bf16 %v778
        %v2059 = vunpack.c.h.s8.bf16 %v779
        %v2060 = vunpack.c.h.s8.bf16 %v780
        %v2061 = vunpack.c.h.s8.bf16 %v781
        %v2062 = vunpack.c.l.s8.bf16 %v782
        %v2063 = vunpack.c.l.s8.bf16 %v783
        %v2064 = vunpack.c.l.s8.bf16 %v784
        %v2065 = vunpack.c.l.s8.bf16 %v785
        %v2066 = vunpack.c.l.s8.bf16 %v786
        %v2067 = vunpack.c.l.s8.bf16 %v787
        %v2068 = vunpack.c.l.s8.bf16 %v788
        %v2069 = vunpack.c.l.s8.bf16 %v789
        %v2070 = vunpack.c.h.s8.bf16 %v782
        %v2071 = vunpack.c.h.s8.bf16 %v783
        %v2072 = vunpack.c.h.s8.bf16 %v784
        %v2073 = vunpack.c.h.s8.bf16 %v785
        %v2074 = vunpack.c.h.s8.bf16 %v786
        %v2075 = vunpack.c.h.s8.bf16 %v787
        %v2076 = vunpack.c.h.s8.bf16 %v788
        %v2077 = vunpack.c.h.s8.bf16 %v789
        %v2078 = vunpack.c.l.s8.bf16 %v790
        %v2079 = vunpack.c.l.s8.bf16 %v791
        %v2080 = vunpack.c.l.s8.bf16 %v792
        %v2081 = vunpack.c.l.s8.bf16 %v793
        %v2082 = vunpack.c.l.s8.bf16 %v794
        %v2083 = vunpack.c.l.s8.bf16 %v795
        %v2084 = vunpack.c.l.s8.bf16 %v796
        %v2085 = vunpack.c.l.s8.bf16 %v797
        %v2086 = vunpack.c.h.s8.bf16 %v790
        %v2087 = vunpack.c.h.s8.bf16 %v791
        %v2088 = vunpack.c.h.s8.bf16 %v792
        %v2089 = vunpack.c.h.s8.bf16 %v793
        %v2090 = vunpack.c.h.s8.bf16 %v794
        %v2091 = vunpack.c.h.s8.bf16 %v795
        %v2092 = vunpack.c.h.s8.bf16 %v796
        %v2093 = vunpack.c.h.s8.bf16 %v797
        %v2094 = vunpack.c.l.s8.bf16 %v798
        %v2095 = vunpack.c.l.s8.bf16 %v799
        %v2096 = vunpack.c.l.s8.bf16 %v800
        %v2097 = vunpack.c.l.s8.bf16 %v801
        %v2098 = vunpack.c.l.s8.bf16 %v802
        %v2099 = vunpack.c.l.s8.bf16 %v803
        %v2100 = vunpack.c.l.s8.bf16 %v804
        %v2101 = vunpack.c.l.s8.bf16 %v805
        %v2102 = vunpack.c.h.s8.bf16 %v798
        %v2103 = vunpack.c.h.s8.bf16 %v799
        %v2104 = vunpack.c.h.s8.bf16 %v800
        %v2105 = vunpack.c.h.s8.bf16 %v801
        %v2106 = vunpack.c.h.s8.bf16 %v802
        %v2107 = vunpack.c.h.s8.bf16 %v803
        %v2108 = vunpack.c.h.s8.bf16 %v804
        %v2109 = vunpack.c.h.s8.bf16 %v805
        %v2110 = vunpack.c.l.s8.bf16 %v806
        %v2111 = vunpack.c.l.s8.bf16 %v807
        %v2112 = vunpack.c.l.s8.bf16 %v808
        %v2113 = vunpack.c.l.s8.bf16 %v809
        %v2114 = vunpack.c.l.s8.bf16 %v810
        %v2115 = vunpack.c.l.s8.bf16 %v811
        %v2116 = vunpack.c.l.s8.bf16 %v812
        %v2117 = vunpack.c.l.s8.bf16 %v813
        %v2118 = vunpack.c.h.s8.bf16 %v806
        %v2119 = vunpack.c.h.s8.bf16 %v807
        %v2120 = vunpack.c.h.s8.bf16 %v808
        %v2121 = vunpack.c.h.s8.bf16 %v809
        %v2122 = vunpack.c.h.s8.bf16 %v810
        %v2123 = vunpack.c.h.s8.bf16 %v811
        %v2124 = vunpack.c.h.s8.bf16 %v812
        %v2125 = vunpack.c.h.s8.bf16 %v813
        %v2126 = vunpack.c.l.s8.bf16 %v814
        %v2127 = vunpack.c.l.s8.bf16 %v815
        %v2128 = vunpack.c.l.s8.bf16 %v816
        %v2129 = vunpack.c.l.s8.bf16 %v817
        %v2130 = vunpack.c.l.s8.bf16 %v818
        %v2131 = vunpack.c.l.s8.bf16 %v819
        %v2132 = vunpack.c.l.s8.bf16 %v820
        %v2133 = vunpack.c.l.s8.bf16 %v821
        %v2134 = vunpack.c.h.s8.bf16 %v814
        %v2135 = vunpack.c.h.s8.bf16 %v815
        %v2136 = vunpack.c.h.s8.bf16 %v816
        %v2137 = vunpack.c.h.s8.bf16 %v817
        %v2138 = vunpack.c.h.s8.bf16 %v818
        %v2139 = vunpack.c.h.s8.bf16 %v819
        %v2140 = vunpack.c.h.s8.bf16 %v820
        %v2141 = vunpack.c.h.s8.bf16 %v821
        %v2142 = vunpack.c.l.s8.bf16 %v822
        %v2143 = vunpack.c.l.s8.bf16 %v823
        %v2144 = vunpack.c.l.s8.bf16 %v824
        %v2145 = vunpack.c.l.s8.bf16 %v825
        %v2146 = vunpack.c.l.s8.bf16 %v826
        %v2147 = vunpack.c.l.s8.bf16 %v827
        %v2148 = vunpack.c.l.s8.bf16 %v828
        %v2149 = vunpack.c.l.s8.bf16 %v829
        %v2150 = vunpack.c.h.s8.bf16 %v822
        %v2151 = vunpack.c.h.s8.bf16 %v823
        %v2152 = vunpack.c.h.s8.bf16 %v824
        %v2153 = vunpack.c.h.s8.bf16 %v825
        %v2154 = vunpack.c.h.s8.bf16 %v826
        %v2155 = vunpack.c.h.s8.bf16 %v827
        %v2156 = vunpack.c.h.s8.bf16 %v828
        %v2157 = vunpack.c.h.s8.bf16 %v829
        %v2158 = vunpack.c.l.s8.bf16 %v830
        %v2159 = vunpack.c.l.s8.bf16 %v831
        %v2160 = vunpack.c.l.s8.bf16 %v832
        %v2161 = vunpack.c.l.s8.bf16 %v833
        %v2162 = vunpack.c.l.s8.bf16 %v834
        %v2163 = vunpack.c.l.s8.bf16 %v835
        %v2164 = vunpack.c.l.s8.bf16 %v836
        %v2165 = vunpack.c.l.s8.bf16 %v837
        %v2166 = vunpack.c.h.s8.bf16 %v830
        %v2167 = vunpack.c.h.s8.bf16 %v831
        %v2168 = vunpack.c.h.s8.bf16 %v832
        %v2169 = vunpack.c.h.s8.bf16 %v833
        %v2170 = vunpack.c.h.s8.bf16 %v834
        %v2171 = vunpack.c.h.s8.bf16 %v835
        %v2172 = vunpack.c.h.s8.bf16 %v836
        %v2173 = vunpack.c.h.s8.bf16 %v837
        %v2174 = vunpack.c.l.s8.bf16 %v838
        %v2175 = vunpack.c.l.s8.bf16 %v839
        %v2176 = vunpack.c.l.s8.bf16 %v840
        %v2177 = vunpack.c.l.s8.bf16 %v841
        %v2178 = vunpack.c.l.s8.bf16 %v842
        %v2179 = vunpack.c.l.s8.bf16 %v843
        %v2180 = vunpack.c.l.s8.bf16 %v844
        %v2181 = vunpack.c.l.s8.bf16 %v845
        %v2182 = vunpack.c.h.s8.bf16 %v838
        %v2183 = vunpack.c.h.s8.bf16 %v839
        %v2184 = vunpack.c.h.s8.bf16 %v840
        %v2185 = vunpack.c.h.s8.bf16 %v841
        %v2186 = vunpack.c.h.s8.bf16 %v842
        %v2187 = vunpack.c.h.s8.bf16 %v843
        %v2188 = vunpack.c.h.s8.bf16 %v844
        %v2189 = vunpack.c.h.s8.bf16 %v845
        %v2190 = vunpack.c.l.s8.bf16 %v846
        %v2191 = vunpack.c.l.s8.bf16 %v847
        %v2192 = vunpack.c.l.s8.bf16 %v848
        %v2193 = vunpack.c.l.s8.bf16 %v849
        %v2194 = vunpack.c.l.s8.bf16 %v850
        %v2195 = vunpack.c.l.s8.bf16 %v851
        %v2196 = vunpack.c.l.s8.bf16 %v852
        %v2197 = vunpack.c.l.s8.bf16 %v853
        %v2198 = vunpack.c.h.s8.bf16 %v846
        %v2199 = vunpack.c.h.s8.bf16 %v847
        %v2200 = vunpack.c.h.s8.bf16 %v848
        %v2201 = vunpack.c.h.s8.bf16 %v849
        %v2202 = vunpack.c.h.s8.bf16 %v850
        %v2203 = vunpack.c.h.s8.bf16 %v851
        %v2204 = vunpack.c.h.s8.bf16 %v852
        %v2205 = vunpack.c.h.s8.bf16 %v853
        %v2206 = vunpack.c.l.s8.bf16 %v854
        %v2207 = vunpack.c.l.s8.bf16 %v855
        %v2208 = vunpack.c.l.s8.bf16 %v856
        %v2209 = vunpack.c.l.s8.bf16 %v857
        %v2210 = vunpack.c.l.s8.bf16 %v858
        %v2211 = vunpack.c.l.s8.bf16 %v859
        %v2212 = vunpack.c.l.s8.bf16 %v860
        %v2213 = vunpack.c.l.s8.bf16 %v861
        %v2214 = vunpack.c.h.s8.bf16 %v854
        %v2215 = vunpack.c.h.s8.bf16 %v855
        %v2216 = vunpack.c.h.s8.bf16 %v856
        %v2217 = vunpack.c.h.s8.bf16 %v857
        %v2218 = vunpack.c.h.s8.bf16 %v858
        %v2219 = vunpack.c.h.s8.bf16 %v859
        %v2220 = vunpack.c.h.s8.bf16 %v860
        %v2221 = vunpack.c.h.s8.bf16 %v861
        %v2222 = vunpack.c.l.s8.bf16 %v862
        %v2223 = vunpack.c.l.s8.bf16 %v863
        %v2224 = vunpack.c.l.s8.bf16 %v864
        %v2225 = vunpack.c.l.s8.bf16 %v865
        %v2226 = vunpack.c.l.s8.bf16 %v866
        %v2227 = vunpack.c.l.s8.bf16 %v867
        %v2228 = vunpack.c.l.s8.bf16 %v868
        %v2229 = vunpack.c.l.s8.bf16 %v869
        %v2230 = vunpack.c.h.s8.bf16 %v862
        %v2231 = vunpack.c.h.s8.bf16 %v863
        %v2232 = vunpack.c.h.s8.bf16 %v864
        %v2233 = vunpack.c.h.s8.bf16 %v865
        %v2234 = vunpack.c.h.s8.bf16 %v866
        %v2235 = vunpack.c.h.s8.bf16 %v867
        %v2236 = vunpack.c.h.s8.bf16 %v868
        %v2237 = vunpack.c.h.s8.bf16 %v869
        %v2238 = vunpack.c.l.s8.bf16 %v870
        %v2239 = vunpack.c.l.s8.bf16 %v871
        %v2240 = vunpack.c.l.s8.bf16 %v872
        %v2241 = vunpack.c.l.s8.bf16 %v873
        %v2242 = vunpack.c.l.s8.bf16 %v874
        %v2243 = vunpack.c.l.s8.bf16 %v875
        %v2244 = vunpack.c.l.s8.bf16 %v876
        %v2245 = vunpack.c.l.s8.bf16 %v877
        %v2246 = vunpack.c.h.s8.bf16 %v870
        %v2247 = vunpack.c.h.s8.bf16 %v871
        %v2248 = vunpack.c.h.s8.bf16 %v872
        %v2249 = vunpack.c.h.s8.bf16 %v873
        %v2250 = vunpack.c.h.s8.bf16 %v874
        %v2251 = vunpack.c.h.s8.bf16 %v875
        %v2252 = vunpack.c.h.s8.bf16 %v876
        %v2253 = vunpack.c.h.s8.bf16 %v877
        %v2254 = vunpack.c.l.s8.bf16 %v878
        %v2255 = vunpack.c.l.s8.bf16 %v879
        %v2256 = vunpack.c.l.s8.bf16 %v880
        %v2257 = vunpack.c.l.s8.bf16 %v881
        %v2258 = vunpack.c.l.s8.bf16 %v882
        %v2259 = vunpack.c.l.s8.bf16 %v883
        %v2260 = vunpack.c.l.s8.bf16 %v884
        %v2261 = vunpack.c.l.s8.bf16 %v885
        %v2262 = vunpack.c.h.s8.bf16 %v878
        %v2263 = vunpack.c.h.s8.bf16 %v879
        %v2264 = vunpack.c.h.s8.bf16 %v880
        %v2265 = vunpack.c.h.s8.bf16 %v881
        %v2266 = vunpack.c.h.s8.bf16 %v882
        %v2267 = vunpack.c.h.s8.bf16 %v883
        %v2268 = vunpack.c.h.s8.bf16 %v884
        %v2269 = vunpack.c.h.s8.bf16 %v885
        %v2270 = vunpack.c.l.s8.bf16 %v886
        %v2271 = vunpack.c.l.s8.bf16 %v887
        %v2272 = vunpack.c.l.s8.bf16 %v888
        %v2273 = vunpack.c.l.s8.bf16 %v889
        %v2274 = vunpack.c.l.s8.bf16 %v890
        %v2275 = vunpack.c.l.s8.bf16 %v891
        %v2276 = vunpack.c.l.s8.bf16 %v892
        %v2277 = vunpack.c.l.s8.bf16 %v893
        %v2278 = vunpack.c.h.s8.bf16 %v886
        %v2279 = vunpack.c.h.s8.bf16 %v887
        %v2280 = vunpack.c.h.s8.bf16 %v888
        %v2281 = vunpack.c.h.s8.bf16 %v889
        %v2282 = vunpack.c.h.s8.bf16 %v890
        %v2283 = vunpack.c.h.s8.bf16 %v891
        %v2284 = vunpack.c.h.s8.bf16 %v892
        %v2285 = vunpack.c.h.s8.bf16 %v893
        %v2286 = vunpack.c.l.s8.bf16 %v894
        %v2287 = vunpack.c.l.s8.bf16 %v895
        %v2288 = vunpack.c.l.s8.bf16 %v896
        %v2289 = vunpack.c.l.s8.bf16 %v897
        %v2290 = vunpack.c.l.s8.bf16 %v898
        %v2291 = vunpack.c.l.s8.bf16 %v899
        %v2292 = vunpack.c.l.s8.bf16 %v900
        %v2293 = vunpack.c.l.s8.bf16 %v901
        %v2294 = vunpack.c.h.s8.bf16 %v894
        %v2295 = vunpack.c.h.s8.bf16 %v895
        %v2296 = vunpack.c.h.s8.bf16 %v896
        %v2297 = vunpack.c.h.s8.bf16 %v897
        %v2298 = vunpack.c.h.s8.bf16 %v898
        %v2299 = vunpack.c.h.s8.bf16 %v899
        %v2300 = vunpack.c.h.s8.bf16 %v900
        %v2301 = vunpack.c.h.s8.bf16 %v901
        %v2302 = vunpack.c.l.s8.bf16 %v902
        %v2303 = vunpack.c.l.s8.bf16 %v903
        %v2304 = vunpack.c.l.s8.bf16 %v904
        %v2305 = vunpack.c.l.s8.bf16 %v905
        %v2306 = vunpack.c.l.s8.bf16 %v906
        %v2307 = vunpack.c.l.s8.bf16 %v907
        %v2308 = vunpack.c.l.s8.bf16 %v908
        %v2309 = vunpack.c.l.s8.bf16 %v909
        %v2310 = vunpack.c.h.s8.bf16 %v902
        %v2311 = vunpack.c.h.s8.bf16 %v903
        %v2312 = vunpack.c.h.s8.bf16 %v904
        %v2313 = vunpack.c.h.s8.bf16 %v905
        %v2314 = vunpack.c.h.s8.bf16 %v906
        %v2315 = vunpack.c.h.s8.bf16 %v907
        %v2316 = vunpack.c.h.s8.bf16 %v908
        %v2317 = vunpack.c.h.s8.bf16 %v909
        %v2318 = vunpack.c.l.s8.bf16 %v910
        %v2319 = vunpack.c.l.s8.bf16 %v911
        %v2320 = vunpack.c.l.s8.bf16 %v912
        %v2321 = vunpack.c.l.s8.bf16 %v913
        %v2322 = vunpack.c.l.s8.bf16 %v914
        %v2323 = vunpack.c.l.s8.bf16 %v915
        %v2324 = vunpack.c.l.s8.bf16 %v916
        %v2325 = vunpack.c.l.s8.bf16 %v917
        %v2326 = vunpack.c.h.s8.bf16 %v910
        %v2327 = vunpack.c.h.s8.bf16 %v911
        %v2328 = vunpack.c.h.s8.bf16 %v912
        %v2329 = vunpack.c.h.s8.bf16 %v913
        %v2330 = vunpack.c.h.s8.bf16 %v914
        %v2331 = vunpack.c.h.s8.bf16 %v915
        %v2332 = vunpack.c.h.s8.bf16 %v916
        %v2333 = vunpack.c.h.s8.bf16 %v917
        %v2334 = vunpack.c.l.s8.bf16 %v918
        %v2335 = vunpack.c.l.s8.bf16 %v919
        %v2336 = vunpack.c.l.s8.bf16 %v920
        %v2337 = vunpack.c.l.s8.bf16 %v921
        %v2338 = vunpack.c.l.s8.bf16 %v922
        %v2339 = vunpack.c.l.s8.bf16 %v923
        %v2340 = vunpack.c.l.s8.bf16 %v924
        %v2341 = vunpack.c.l.s8.bf16 %v925
        %v2342 = vunpack.c.h.s8.bf16 %v918
        %v2343 = vunpack.c.h.s8.bf16 %v919
        %v2344 = vunpack.c.h.s8.bf16 %v920
        %v2345 = vunpack.c.h.s8.bf16 %v921
        %v2346 = vunpack.c.h.s8.bf16 %v922
        %v2347 = vunpack.c.h.s8.bf16 %v923
        %v2348 = vunpack.c.h.s8.bf16 %v924
        %v2349 = vunpack.c.h.s8.bf16 %v925
        %v2350 = vunpack.c.l.s8.bf16 %v926
        %v2351 = vunpack.c.l.s8.bf16 %v927
        %v2352 = vunpack.c.l.s8.bf16 %v928
        %v2353 = vunpack.c.l.s8.bf16 %v929
        %v2354 = vunpack.c.l.s8.bf16 %v930
        %v2355 = vunpack.c.l.s8.bf16 %v931
        %v2356 = vunpack.c.l.s8.bf16 %v932
        %v2357 = vunpack.c.l.s8.bf16 %v933
        %v2358 = vunpack.c.h.s8.bf16 %v926
        %v2359 = vunpack.c.h.s8.bf16 %v927
        %v2360 = vunpack.c.h.s8.bf16 %v928
        %v2361 = vunpack.c.h.s8.bf16 %v929
        %v2362 = vunpack.c.h.s8.bf16 %v930
        %v2363 = vunpack.c.h.s8.bf16 %v931
        %v2364 = vunpack.c.h.s8.bf16 %v932
        %v2365 = vunpack.c.h.s8.bf16 %v933
        %v2366 = vunpack.c.l.s8.bf16 %v934
        %v2367 = vunpack.c.l.s8.bf16 %v935
        %v2368 = vunpack.c.l.s8.bf16 %v936
        %v2369 = vunpack.c.l.s8.bf16 %v937
        %v2370 = vunpack.c.l.s8.bf16 %v938
        %v2371 = vunpack.c.l.s8.bf16 %v939
        %v2372 = vunpack.c.l.s8.bf16 %v940
        %v2373 = vunpack.c.l.s8.bf16 %v941
        %v2374 = vunpack.c.h.s8.bf16 %v934
        %v2375 = vunpack.c.h.s8.bf16 %v935
        %v2376 = vunpack.c.h.s8.bf16 %v936
        %v2377 = vunpack.c.h.s8.bf16 %v937
        %v2378 = vunpack.c.h.s8.bf16 %v938
        %v2379 = vunpack.c.h.s8.bf16 %v939
        %v2380 = vunpack.c.h.s8.bf16 %v940
        %v2381 = vunpack.c.h.s8.bf16 %v941
        %v2382 = vunpack.c.l.s8.bf16 %v942
        %v2383 = vunpack.c.l.s8.bf16 %v943
        %v2384 = vunpack.c.l.s8.bf16 %v944
        %v2385 = vunpack.c.l.s8.bf16 %v945
        %v2386 = vunpack.c.l.s8.bf16 %v946
        %v2387 = vunpack.c.l.s8.bf16 %v947
        %v2388 = vunpack.c.l.s8.bf16 %v948
        %v2389 = vunpack.c.l.s8.bf16 %v949
        %v2390 = vunpack.c.h.s8.bf16 %v942
        %v2391 = vunpack.c.h.s8.bf16 %v943
        %v2392 = vunpack.c.h.s8.bf16 %v944
        %v2393 = vunpack.c.h.s8.bf16 %v945
        %v2394 = vunpack.c.h.s8.bf16 %v946
        %v2395 = vunpack.c.h.s8.bf16 %v947
        %v2396 = vunpack.c.h.s8.bf16 %v948
        %v2397 = vunpack.c.h.s8.bf16 %v949
        %v2398 = vunpack.c.l.s8.bf16 %v950
        %v2399 = vunpack.c.l.s8.bf16 %v951
        %v2400 = vunpack.c.l.s8.bf16 %v952
        %v2401 = vunpack.c.l.s8.bf16 %v953
        %v2402 = vunpack.c.l.s8.bf16 %v954
        %v2403 = vunpack.c.l.s8.bf16 %v955
        %v2404 = vunpack.c.l.s8.bf16 %v956
        %v2405 = vunpack.c.l.s8.bf16 %v957
        %v2406 = vunpack.c.h.s8.bf16 %v950
        %v2407 = vunpack.c.h.s8.bf16 %v951
        %v2408 = vunpack.c.h.s8.bf16 %v952
        %v2409 = vunpack.c.h.s8.bf16 %v953
        %v2410 = vunpack.c.h.s8.bf16 %v954
        %v2411 = vunpack.c.h.s8.bf16 %v955
        %v2412 = vunpack.c.h.s8.bf16 %v956
        %v2413 = vunpack.c.h.s8.bf16 %v957
        %v2414 = vunpack.c.l.s8.bf16 %v958
        %v2415 = vunpack.c.l.s8.bf16 %v959
        %v2416 = vunpack.c.l.s8.bf16 %v960
        %v2417 = vunpack.c.l.s8.bf16 %v961
        %v2418 = vunpack.c.l.s8.bf16 %v962
        %v2419 = vunpack.c.l.s8.bf16 %v963
        %v2420 = vunpack.c.l.s8.bf16 %v964
        %v2421 = vunpack.c.l.s8.bf16 %v965
        %v2422 = vunpack.c.h.s8.bf16 %v958
        %v2423 = vunpack.c.h.s8.bf16 %v959
        %v2424 = vunpack.c.h.s8.bf16 %v960
        %v2425 = vunpack.c.h.s8.bf16 %v961
        %v2426 = vunpack.c.h.s8.bf16 %v962
        %v2427 = vunpack.c.h.s8.bf16 %v963
        %v2428 = vunpack.c.h.s8.bf16 %v964
        %v2429 = vunpack.c.h.s8.bf16 %v965
        %v2430 = vunpack.c.l.s8.bf16 %v966
        %v2431 = vunpack.c.l.s8.bf16 %v967
        %v2432 = vunpack.c.l.s8.bf16 %v968
        %v2433 = vunpack.c.l.s8.bf16 %v969
        %v2434 = vunpack.c.l.s8.bf16 %v970
        %v2435 = vunpack.c.l.s8.bf16 %v971
        %v2436 = vunpack.c.l.s8.bf16 %v972
        %v2437 = vunpack.c.l.s8.bf16 %v973
        %v2438 = vunpack.c.h.s8.bf16 %v966
        %v2439 = vunpack.c.h.s8.bf16 %v967
        %v2440 = vunpack.c.h.s8.bf16 %v968
        %v2441 = vunpack.c.h.s8.bf16 %v969
        %v2442 = vunpack.c.h.s8.bf16 %v970
        %v2443 = vunpack.c.h.s8.bf16 %v971
        %v2444 = vunpack.c.h.s8.bf16 %v972
        %v2445 = vunpack.c.h.s8.bf16 %v973
        %v2446 = vunpack.c.l.s8.bf16 %v974
        %v2447 = vunpack.c.l.s8.bf16 %v975
        %v2448 = vunpack.c.l.s8.bf16 %v976
        %v2449 = vunpack.c.l.s8.bf16 %v977
        %v2450 = vunpack.c.l.s8.bf16 %v978
        %v2451 = vunpack.c.l.s8.bf16 %v979
        %v2452 = vunpack.c.l.s8.bf16 %v980
        %v2453 = vunpack.c.l.s8.bf16 %v981
        %v2454 = vunpack.c.h.s8.bf16 %v974
        %v2455 = vunpack.c.h.s8.bf16 %v975
        %v2456 = vunpack.c.h.s8.bf16 %v976
        %v2457 = vunpack.c.h.s8.bf16 %v977
        %v2458 = vunpack.c.h.s8.bf16 %v978
        %v2459 = vunpack.c.h.s8.bf16 %v979
        %v2460 = vunpack.c.h.s8.bf16 %v980
        %v2461 = vunpack.c.h.s8.bf16 %v981
        %v2462 = vunpack.c.l.s8.bf16 %v982
        %v2463 = vunpack.c.l.s8.bf16 %v983
        %v2464 = vunpack.c.l.s8.bf16 %v984
        %v2465 = vunpack.c.l.s8.bf16 %v985
        %v2466 = vunpack.c.l.s8.bf16 %v986
        %v2467 = vunpack.c.l.s8.bf16 %v987
        %v2468 = vunpack.c.l.s8.bf16 %v988
        %v2469 = vunpack.c.l.s8.bf16 %v989
        %v2470 = vunpack.c.h.s8.bf16 %v982
        %v2471 = vunpack.c.h.s8.bf16 %v983
        %v2472 = vunpack.c.h.s8.bf16 %v984
        %v2473 = vunpack.c.h.s8.bf16 %v985
        %v2474 = vunpack.c.h.s8.bf16 %v986
        %v2475 = vunpack.c.h.s8.bf16 %v987
        %v2476 = vunpack.c.h.s8.bf16 %v988
        %v2477 = vunpack.c.h.s8.bf16 %v989
        %v2478 = vunpack.c.l.s8.bf16 %v990
        %v2479 = vunpack.c.l.s8.bf16 %v991
        %v2480 = vunpack.c.l.s8.bf16 %v992
        %v2481 = vunpack.c.l.s8.bf16 %v993
        %v2482 = vunpack.c.l.s8.bf16 %v994
        %v2483 = vunpack.c.l.s8.bf16 %v995
        %v2484 = vunpack.c.l.s8.bf16 %v996
        %v2485 = vunpack.c.l.s8.bf16 %v997
        %v2486 = vunpack.c.h.s8.bf16 %v990
        %v2487 = vunpack.c.h.s8.bf16 %v991
        %v2488 = vunpack.c.h.s8.bf16 %v992
        %v2489 = vunpack.c.h.s8.bf16 %v993
        %v2490 = vunpack.c.h.s8.bf16 %v994
        %v2491 = vunpack.c.h.s8.bf16 %v995
        %v2492 = vunpack.c.h.s8.bf16 %v996
        %v2493 = vunpack.c.h.s8.bf16 %v997
        %v2494 = vunpack.c.l.s8.bf16 %v998
        %v2495 = vunpack.c.l.s8.bf16 %v999
        %v2496 = vunpack.c.l.s8.bf16 %v1000
        %v2497 = vunpack.c.l.s8.bf16 %v1001
        %v2498 = vunpack.c.l.s8.bf16 %v1002
        %v2499 = vunpack.c.l.s8.bf16 %v1003
        %v2500 = vunpack.c.l.s8.bf16 %v1004
        %v2501 = vunpack.c.l.s8.bf16 %v1005
        %v2502 = vunpack.c.h.s8.bf16 %v998
        %v2503 = vunpack.c.h.s8.bf16 %v999
        %v2504 = vunpack.c.h.s8.bf16 %v1000
        %v2505 = vunpack.c.h.s8.bf16 %v1001
        %v2506 = vunpack.c.h.s8.bf16 %v1002
        %v2507 = vunpack.c.h.s8.bf16 %v1003
        %v2508 = vunpack.c.h.s8.bf16 %v1004
        %v2509 = vunpack.c.h.s8.bf16 %v1005
        %v2510 = vunpack.c.l.s8.bf16 %v1006
        %v2511 = vunpack.c.l.s8.bf16 %v1007
        %v2512 = vunpack.c.l.s8.bf16 %v1008
        %v2513 = vunpack.c.l.s8.bf16 %v1009
        %v2514 = vunpack.c.l.s8.bf16 %v1010
        %v2515 = vunpack.c.l.s8.bf16 %v1011
        %v2516 = vunpack.c.l.s8.bf16 %v1012
        %v2517 = vunpack.c.l.s8.bf16 %v1013
        %v2518 = vunpack.c.h.s8.bf16 %v1006
        %v2519 = vunpack.c.h.s8.bf16 %v1007
        %v2520 = vunpack.c.h.s8.bf16 %v1008
        %v2521 = vunpack.c.h.s8.bf16 %v1009
        %v2522 = vunpack.c.h.s8.bf16 %v1010
        %v2523 = vunpack.c.h.s8.bf16 %v1011
        %v2524 = vunpack.c.h.s8.bf16 %v1012
        %v2525 = vunpack.c.h.s8.bf16 %v1013
        %v2526 = vunpack.c.l.s8.bf16 %v1014
        %v2527 = vunpack.c.l.s8.bf16 %v1015
        %v2528 = vunpack.c.l.s8.bf16 %v1016
        %v2529 = vunpack.c.l.s8.bf16 %v1017
        %v2530 = vunpack.c.l.s8.bf16 %v1018
        %v2531 = vunpack.c.l.s8.bf16 %v1019
        %v2532 = vunpack.c.l.s8.bf16 %v1020
        %v2533 = vunpack.c.l.s8.bf16 %v1021
        %v2534 = vunpack.c.h.s8.bf16 %v1014
        %v2535 = vunpack.c.h.s8.bf16 %v1015
        %v2536 = vunpack.c.h.s8.bf16 %v1016
        %v2537 = vunpack.c.h.s8.bf16 %v1017
        %v2538 = vunpack.c.h.s8.bf16 %v1018
        %v2539 = vunpack.c.h.s8.bf16 %v1019
        %v2540 = vunpack.c.h.s8.bf16 %v1020
        %v2541 = vunpack.c.h.s8.bf16 %v1021
        %v2542 = vunpack.c.l.s8.bf16 %v1022
        %v2543 = vunpack.c.l.s8.bf16 %v1023
        %v2544 = vunpack.c.l.s8.bf16 %v1024
        %v2545 = vunpack.c.l.s8.bf16 %v1025
        %v2546 = vunpack.c.l.s8.bf16 %v1026
        %v2547 = vunpack.c.l.s8.bf16 %v1027
        %v2548 = vunpack.c.l.s8.bf16 %v1028
        %v2549 = vunpack.c.l.s8.bf16 %v1029
        %v2550 = vunpack.c.h.s8.bf16 %v1022
        %v2551 = vunpack.c.h.s8.bf16 %v1023
        %v2552 = vunpack.c.h.s8.bf16 %v1024
        %v2553 = vunpack.c.h.s8.bf16 %v1025
        %v2554 = vunpack.c.h.s8.bf16 %v1026
        %v2555 = vunpack.c.h.s8.bf16 %v1027
        %v2556 = vunpack.c.h.s8.bf16 %v1028
        %v2557 = vunpack.c.h.s8.bf16 %v1029
        %v2558 = vunpack.c.l.s8.bf16 %v1030
        %v2559 = vunpack.c.l.s8.bf16 %v1031
        %v2560 = vunpack.c.l.s8.bf16 %v1032
        %v2561 = vunpack.c.l.s8.bf16 %v1033
        %v2562 = vunpack.c.l.s8.bf16 %v1034
        %v2563 = vunpack.c.l.s8.bf16 %v1035
        %v2564 = vunpack.c.l.s8.bf16 %v1036
        %v2565 = vunpack.c.l.s8.bf16 %v1037
        %v2566 = vunpack.c.h.s8.bf16 %v1030
        %v2567 = vunpack.c.h.s8.bf16 %v1031
        %v2568 = vunpack.c.h.s8.bf16 %v1032
        %v2569 = vunpack.c.h.s8.bf16 %v1033
        %v2570 = vunpack.c.h.s8.bf16 %v1034
        %v2571 = vunpack.c.h.s8.bf16 %v1035
        %v2572 = vunpack.c.h.s8.bf16 %v1036
        %v2573 = vunpack.c.h.s8.bf16 %v1037
        %v2574 = vunpack.c.l.s8.bf16 %v1038
        %v2575 = vunpack.c.l.s8.bf16 %v1039
        %v2576 = vunpack.c.l.s8.bf16 %v1040
        %v2577 = vunpack.c.l.s8.bf16 %v1041
        %v2578 = vunpack.c.l.s8.bf16 %v1042
        %v2579 = vunpack.c.l.s8.bf16 %v1043
        %v2580 = vunpack.c.l.s8.bf16 %v1044
        %v2581 = vunpack.c.l.s8.bf16 %v1045
        %v2582 = vunpack.c.h.s8.bf16 %v1038
        %v2583 = vunpack.c.h.s8.bf16 %v1039
        %v2584 = vunpack.c.h.s8.bf16 %v1040
        %v2585 = vunpack.c.h.s8.bf16 %v1041
        %v2586 = vunpack.c.h.s8.bf16 %v1042
        %v2587 = vunpack.c.h.s8.bf16 %v1043
        %v2588 = vunpack.c.h.s8.bf16 %v1044
        %v2589 = vunpack.c.h.s8.bf16 %v1045
        %v2590 = vunpack.c.l.s8.bf16 %v1046
        %v2591 = vunpack.c.l.s8.bf16 %v1047
        %v2592 = vunpack.c.l.s8.bf16 %v1048
        %v2593 = vunpack.c.l.s8.bf16 %v1049
        %v2594 = vunpack.c.l.s8.bf16 %v1050
        %v2595 = vunpack.c.l.s8.bf16 %v1051
        %v2596 = vunpack.c.l.s8.bf16 %v1052
        %v2597 = vunpack.c.l.s8.bf16 %v1053
        %v2598 = vunpack.c.h.s8.bf16 %v1046
        %v2599 = vunpack.c.h.s8.bf16 %v1047
        %v2600 = vunpack.c.h.s8.bf16 %v1048
        %v2601 = vunpack.c.h.s8.bf16 %v1049
        %v2602 = vunpack.c.h.s8.bf16 %v1050
        %v2603 = vunpack.c.h.s8.bf16 %v1051
        %v2604 = vunpack.c.h.s8.bf16 %v1052
        %v2605 = vunpack.c.h.s8.bf16 %v1053
        %v2606 = vunpack.c.l.s8.bf16 %v1054
        %v2607 = vunpack.c.l.s8.bf16 %v1055
        %v2608 = vunpack.c.l.s8.bf16 %v1056
        %v2609 = vunpack.c.l.s8.bf16 %v1057
        %v2610 = vunpack.c.l.s8.bf16 %v1058
        %v2611 = vunpack.c.l.s8.bf16 %v1059
        %v2612 = vunpack.c.l.s8.bf16 %v1060
        %v2613 = vunpack.c.l.s8.bf16 %v1061
        %v2614 = vunpack.c.h.s8.bf16 %v1054
        %v2615 = vunpack.c.h.s8.bf16 %v1055
        %v2616 = vunpack.c.h.s8.bf16 %v1056
        %v2617 = vunpack.c.h.s8.bf16 %v1057
        %v2618 = vunpack.c.h.s8.bf16 %v1058
        %v2619 = vunpack.c.h.s8.bf16 %v1059
        %v2620 = vunpack.c.h.s8.bf16 %v1060
        %v2621 = vunpack.c.h.s8.bf16 %v1061
        %v2622 = vunpack.c.l.s8.bf16 %v1062
        %v2623 = vunpack.c.l.s8.bf16 %v1063
        %v2624 = vunpack.c.l.s8.bf16 %v1064
        %v2625 = vunpack.c.l.s8.bf16 %v1065
        %v2626 = vunpack.c.l.s8.bf16 %v1066
        %v2627 = vunpack.c.l.s8.bf16 %v1067
        %v2628 = vunpack.c.l.s8.bf16 %v1068
        %v2629 = vunpack.c.l.s8.bf16 %v1069
        %v2630 = vunpack.c.h.s8.bf16 %v1062
        %v2631 = vunpack.c.h.s8.bf16 %v1063
        %v2632 = vunpack.c.h.s8.bf16 %v1064
        %v2633 = vunpack.c.h.s8.bf16 %v1065
        %v2634 = vunpack.c.h.s8.bf16 %v1066
        %v2635 = vunpack.c.h.s8.bf16 %v1067
        %v2636 = vunpack.c.h.s8.bf16 %v1068
        %v2637 = vunpack.c.h.s8.bf16 %v1069
        %v2638 = vunpack.c.l.s8.bf16 %v1070
        %v2639 = vunpack.c.l.s8.bf16 %v1071
        %v2640 = vunpack.c.l.s8.bf16 %v1072
        %v2641 = vunpack.c.l.s8.bf16 %v1073
        %v2642 = vunpack.c.l.s8.bf16 %v1074
        %v2643 = vunpack.c.l.s8.bf16 %v1075
        %v2644 = vunpack.c.l.s8.bf16 %v1076
        %v2645 = vunpack.c.l.s8.bf16 %v1077
        %v2646 = vunpack.c.h.s8.bf16 %v1070
        %v2647 = vunpack.c.h.s8.bf16 %v1071
        %v2648 = vunpack.c.h.s8.bf16 %v1072
        %v2649 = vunpack.c.h.s8.bf16 %v1073
        %v2650 = vunpack.c.h.s8.bf16 %v1074
        %v2651 = vunpack.c.h.s8.bf16 %v1075
        %v2652 = vunpack.c.h.s8.bf16 %v1076
        %v2653 = vunpack.c.h.s8.bf16 %v1077
        %v2654 = vunpack.c.l.s8.bf16 %v1078
        %v2655 = vunpack.c.l.s8.bf16 %v1079
        %v2656 = vunpack.c.l.s8.bf16 %v1080
        %v2657 = vunpack.c.l.s8.bf16 %v1081
        %v2658 = vunpack.c.l.s8.bf16 %v1082
        %v2659 = vunpack.c.l.s8.bf16 %v1083
        %v2660 = vunpack.c.l.s8.bf16 %v1084
        %v2661 = vunpack.c.l.s8.bf16 %v1085
        %v2662 = vunpack.c.h.s8.bf16 %v1078
        %v2663 = vunpack.c.h.s8.bf16 %v1079
        %v2664 = vunpack.c.h.s8.bf16 %v1080
        %v2665 = vunpack.c.h.s8.bf16 %v1081
        %v2666 = vunpack.c.h.s8.bf16 %v1082
        %v2667 = vunpack.c.h.s8.bf16 %v1083
        %v2668 = vunpack.c.h.s8.bf16 %v1084
        %v2669 = vunpack.c.h.s8.bf16 %v1085
        %v2670 = vunpack.c.l.s8.bf16 %v1086
        %v2671 = vunpack.c.l.s8.bf16 %v1087
        %v2672 = vunpack.c.l.s8.bf16 %v1088
        %v2673 = vunpack.c.l.s8.bf16 %v1089
        %v2674 = vunpack.c.l.s8.bf16 %v1090
        %v2675 = vunpack.c.l.s8.bf16 %v1091
        %v2676 = vunpack.c.l.s8.bf16 %v1092
        %v2677 = vunpack.c.l.s8.bf16 %v1093
        %v2678 = vunpack.c.h.s8.bf16 %v1086
        %v2679 = vunpack.c.h.s8.bf16 %v1087
        %v2680 = vunpack.c.h.s8.bf16 %v1088
        %v2681 = vunpack.c.h.s8.bf16 %v1089
        %v2682 = vunpack.c.h.s8.bf16 %v1090
        %v2683 = vunpack.c.h.s8.bf16 %v1091
        %v2684 = vunpack.c.h.s8.bf16 %v1092
        %v2685 = vunpack.c.h.s8.bf16 %v1093
        %v2686 = vunpack.c.l.s8.bf16 %v1094
        %v2687 = vunpack.c.l.s8.bf16 %v1095
        %v2688 = vunpack.c.l.s8.bf16 %v1096
        %v2689 = vunpack.c.l.s8.bf16 %v1097
        %v2690 = vunpack.c.l.s8.bf16 %v1098
        %v2691 = vunpack.c.l.s8.bf16 %v1099
        %v2692 = vunpack.c.l.s8.bf16 %v1100
        %v2693 = vunpack.c.l.s8.bf16 %v1101
        %v2694 = vunpack.c.h.s8.bf16 %v1094
        %v2695 = vunpack.c.h.s8.bf16 %v1095
        %v2696 = vunpack.c.h.s8.bf16 %v1096
        %v2697 = vunpack.c.h.s8.bf16 %v1097
        %v2698 = vunpack.c.h.s8.bf16 %v1098
        %v2699 = vunpack.c.h.s8.bf16 %v1099
        %v2700 = vunpack.c.h.s8.bf16 %v1100
        %v2701 = vunpack.c.h.s8.bf16 %v1101
        %v2702 = vunpack.c.l.s8.bf16 %v1102
        %v2703 = vunpack.c.l.s8.bf16 %v1103
        %v2704 = vunpack.c.l.s8.bf16 %v1104
        %v2705 = vunpack.c.l.s8.bf16 %v1105
        %v2706 = vunpack.c.l.s8.bf16 %v1106
        %v2707 = vunpack.c.l.s8.bf16 %v1107
        %v2708 = vunpack.c.l.s8.bf16 %v1108
        %v2709 = vunpack.c.l.s8.bf16 %v1109
        %v2710 = vunpack.c.h.s8.bf16 %v1102
        %v2711 = vunpack.c.h.s8.bf16 %v1103
        %v2712 = vunpack.c.h.s8.bf16 %v1104
        %v2713 = vunpack.c.h.s8.bf16 %v1105
        %v2714 = vunpack.c.h.s8.bf16 %v1106
        %v2715 = vunpack.c.h.s8.bf16 %v1107
        %v2716 = vunpack.c.h.s8.bf16 %v1108
        %v2717 = vunpack.c.h.s8.bf16 %v1109
        %v2718 = vunpack.c.l.s8.bf16 %v1110
        %v2719 = vunpack.c.l.s8.bf16 %v1111
        %v2720 = vunpack.c.l.s8.bf16 %v1112
        %v2721 = vunpack.c.l.s8.bf16 %v1113
        %v2722 = vunpack.c.l.s8.bf16 %v1114
        %v2723 = vunpack.c.l.s8.bf16 %v1115
        %v2724 = vunpack.c.l.s8.bf16 %v1116
        %v2725 = vunpack.c.l.s8.bf16 %v1117
        %v2726 = vunpack.c.h.s8.bf16 %v1110
        %v2727 = vunpack.c.h.s8.bf16 %v1111
        %v2728 = vunpack.c.h.s8.bf16 %v1112
        %v2729 = vunpack.c.h.s8.bf16 %v1113
        %v2730 = vunpack.c.h.s8.bf16 %v1114
        %v2731 = vunpack.c.h.s8.bf16 %v1115
        %v2732 = vunpack.c.h.s8.bf16 %v1116
        %v2733 = vunpack.c.h.s8.bf16 %v1117
        %v2734 = vunpack.c.l.s8.bf16 %v1118
        %v2735 = vunpack.c.l.s8.bf16 %v1119
        %v2736 = vunpack.c.l.s8.bf16 %v1120
        %v2737 = vunpack.c.l.s8.bf16 %v1121
        %v2738 = vunpack.c.l.s8.bf16 %v1122
        %v2739 = vunpack.c.l.s8.bf16 %v1123
        %v2740 = vunpack.c.l.s8.bf16 %v1124
        %v2741 = vunpack.c.l.s8.bf16 %v1125
        %v2742 = vunpack.c.h.s8.bf16 %v1118
        %v2743 = vunpack.c.h.s8.bf16 %v1119
        %v2744 = vunpack.c.h.s8.bf16 %v1120
        %v2745 = vunpack.c.h.s8.bf16 %v1121
        %v2746 = vunpack.c.h.s8.bf16 %v1122
        %v2747 = vunpack.c.h.s8.bf16 %v1123
        %v2748 = vunpack.c.h.s8.bf16 %v1124
        %v2749 = vunpack.c.h.s8.bf16 %v1125
        %v2750 = vunpack.c.l.s8.bf16 %v1126
        %v2751 = vunpack.c.l.s8.bf16 %v1127
        %v2752 = vunpack.c.l.s8.bf16 %v1128
        %v2753 = vunpack.c.l.s8.bf16 %v1129
        %v2754 = vunpack.c.l.s8.bf16 %v1130
        %v2755 = vunpack.c.l.s8.bf16 %v1131
        %v2756 = vunpack.c.l.s8.bf16 %v1132
        %v2757 = vunpack.c.l.s8.bf16 %v1133
        %v2758 = vunpack.c.h.s8.bf16 %v1126
        %v2759 = vunpack.c.h.s8.bf16 %v1127
        %v2760 = vunpack.c.h.s8.bf16 %v1128
        %v2761 = vunpack.c.h.s8.bf16 %v1129
        %v2762 = vunpack.c.h.s8.bf16 %v1130
        %v2763 = vunpack.c.h.s8.bf16 %v1131
        %v2764 = vunpack.c.h.s8.bf16 %v1132
        %v2765 = vunpack.c.h.s8.bf16 %v1133
        %v2766 = vunpack.c.l.s8.bf16 %v1134
        %v2767 = vunpack.c.l.s8.bf16 %v1135
        %v2768 = vunpack.c.l.s8.bf16 %v1136
        %v2769 = vunpack.c.l.s8.bf16 %v1137
        %v2770 = vunpack.c.l.s8.bf16 %v1138
        %v2771 = vunpack.c.l.s8.bf16 %v1139
        %v2772 = vunpack.c.l.s8.bf16 %v1140
        %v2773 = vunpack.c.l.s8.bf16 %v1141
        %v2774 = vunpack.c.h.s8.bf16 %v1134
        %v2775 = vunpack.c.h.s8.bf16 %v1135
        %v2776 = vunpack.c.h.s8.bf16 %v1136
        %v2777 = vunpack.c.h.s8.bf16 %v1137
        %v2778 = vunpack.c.h.s8.bf16 %v1138
        %v2779 = vunpack.c.h.s8.bf16 %v1139
        %v2780 = vunpack.c.h.s8.bf16 %v1140
        %v2781 = vunpack.c.h.s8.bf16 %v1141
        %v2782 = vunpack.c.l.s8.bf16 %v1142
        %v2783 = vunpack.c.l.s8.bf16 %v1143
        %v2784 = vunpack.c.l.s8.bf16 %v1144
        %v2785 = vunpack.c.l.s8.bf16 %v1145
        %v2786 = vunpack.c.l.s8.bf16 %v1146
        %v2787 = vunpack.c.l.s8.bf16 %v1147
        %v2788 = vunpack.c.l.s8.bf16 %v1148
        %v2789 = vunpack.c.l.s8.bf16 %v1149
        %v2790 = vunpack.c.h.s8.bf16 %v1142
        %v2791 = vunpack.c.h.s8.bf16 %v1143
        %v2792 = vunpack.c.h.s8.bf16 %v1144
        %v2793 = vunpack.c.h.s8.bf16 %v1145
        %v2794 = vunpack.c.h.s8.bf16 %v1146
        %v2795 = vunpack.c.h.s8.bf16 %v1147
        %v2796 = vunpack.c.h.s8.bf16 %v1148
        %v2797 = vunpack.c.h.s8.bf16 %v1149
        %v2798 = vunpack.c.l.s8.bf16 %v1150
        %v2799 = vunpack.c.l.s8.bf16 %v1151
        %v2800 = vunpack.c.l.s8.bf16 %v1152
        %v2801 = vunpack.c.l.s8.bf16 %v1153
        %v2802 = vunpack.c.l.s8.bf16 %v1154
        %v2803 = vunpack.c.l.s8.bf16 %v1155
        %v2804 = vunpack.c.l.s8.bf16 %v1156
        %v2805 = vunpack.c.l.s8.bf16 %v1157
        %v2806 = vunpack.c.h.s8.bf16 %v1150
        %v2807 = vunpack.c.h.s8.bf16 %v1151
        %v2808 = vunpack.c.h.s8.bf16 %v1152
        %v2809 = vunpack.c.h.s8.bf16 %v1153
        %v2810 = vunpack.c.h.s8.bf16 %v1154
        %v2811 = vunpack.c.h.s8.bf16 %v1155
        %v2812 = vunpack.c.h.s8.bf16 %v1156
        %v2813 = vunpack.c.h.s8.bf16 %v1157
        %v2814 = vunpack.c.l.s8.bf16 %v1158
        %v2815 = vunpack.c.l.s8.bf16 %v1159
        %v2816 = vunpack.c.l.s8.bf16 %v1160
        %v2817 = vunpack.c.l.s8.bf16 %v1161
        %v2818 = vunpack.c.l.s8.bf16 %v1162
        %v2819 = vunpack.c.l.s8.bf16 %v1163
        %v2820 = vunpack.c.l.s8.bf16 %v1164
        %v2821 = vunpack.c.l.s8.bf16 %v1165
        %v2822 = vunpack.c.h.s8.bf16 %v1158
        %v2823 = vunpack.c.h.s8.bf16 %v1159
        %v2824 = vunpack.c.h.s8.bf16 %v1160
        %v2825 = vunpack.c.h.s8.bf16 %v1161
        %v2826 = vunpack.c.h.s8.bf16 %v1162
        %v2827 = vunpack.c.h.s8.bf16 %v1163
        %v2828 = vunpack.c.h.s8.bf16 %v1164
        %v2829 = vunpack.c.h.s8.bf16 %v1165
        %v2856 = vunpack.c.l.b16 %v308
        %v2857 = vunpack.c.h.b16 %v308
        %v2858 = vunpack.c.l.b16 %v309
        %v2859 = vunpack.c.h.b16 %v309
        %v2860 = vunpack.c.l.b16 %v310
        %v2861 = vunpack.c.h.b16 %v310
        %v2862 = vunpack.c.l.b16 %v311
        %v2863 = vunpack.c.h.b16 %v311
        %v2864 = vunpack.c.l.b16 %v312
        %v2865 = vunpack.c.h.b16 %v312
        %v2866 = vunpack.c.l.b16 %v313
        %v2867 = vunpack.c.h.b16 %v313
        %v2868 = vunpack.c.l.b16 %v314
        %v2869 = vunpack.c.h.b16 %v314
        %v2870 = vunpack.c.l.b16 %v315
        %v2871 = vunpack.c.h.b16 %v315
        %v2872 = vunpack.c.l.b16 %v316
        %v2873 = vunpack.c.h.b16 %v316
        %v2874 = vunpack.c.l.b16 %v317
        %v2875 = vunpack.c.h.b16 %v317
        %v2876 = vunpack.c.l.b16 %v318
        %v2877 = vunpack.c.h.b16 %v318
        %v2878 = vunpack.c.l.b16 %v319
        %v2879 = vunpack.c.h.b16 %v319
        %v2880 = vunpack.c.l.b16 %v320
        %v2881 = vunpack.c.h.b16 %v320
        %v2882 = vunpack.c.l.b16 %v321
        %v2883 = vunpack.c.h.b16 %v321
        %v2884 = vunpack.c.l.b16 %v322
        %v2885 = vunpack.c.h.b16 %v322
        %v2886 = vunpack.c.l.b16 %v323
        %v2887 = vunpack.c.h.b16 %v323
        %v2888 = vunpack.c.l.b16 %v324
        %v2889 = vunpack.c.h.b16 %v324
        %v2890 = vunpack.c.l.b16 %v325
        %v2891 = vunpack.c.h.b16 %v325
        %v2892 = vunpack.c.l.b16 %v326
        %v2893 = vunpack.c.h.b16 %v326
        %v2894 = vunpack.c.l.b16 %v327
        %v2895 = vunpack.c.h.b16 %v327
        %v2896 = vunpack.c.l.b16 %v328
        %v2897 = vunpack.c.h.b16 %v328
        %v2898 = vunpack.c.l.b16 %v329
        %v2899 = vunpack.c.h.b16 %v329
        %v2900 = vunpack.c.l.b16 %v330
        %v2901 = vunpack.c.h.b16 %v330
        %v2902 = vunpack.c.l.b16 %v331
        %v2903 = vunpack.c.h.b16 %v331
        %v2904 = vunpack.c.l.b16 %v332
        %v2905 = vunpack.c.h.b16 %v332
        %v2906 = vunpack.c.l.b16 %v333
        %v2907 = vunpack.c.h.b16 %v333
        %v2908 = vpack.c.b16 %v2882, %v2856
        %v2909 = vpack.c.b16 %v2883, %v2857
        %v2910 = vpack.c.b16 %v2884, %v2858
        %v2911 = vpack.c.b16 %v2885, %v2859
        %v2912 = vpack.c.b16 %v2886, %v2860
        %v2913 = vpack.c.b16 %v2887, %v2861
        %v2914 = vpack.c.b16 %v2888, %v2862
        %v2915 = vpack.c.b16 %v2889, %v2863
        %v2916 = vpack.c.b16 %v2890, %v2864
        %v2917 = vpack.c.b16 %v2891, %v2865
        %v2918 = vpack.c.b16 %v2892, %v2866
        %v2919 = vpack.c.b16 %v2893, %v2867
        %v2920 = vpack.c.b16 %v2894, %v2868
        %v2921 = vpack.c.b16 %v2895, %v2869
        %v2922 = vpack.c.b16 %v2896, %v2870
        %v2923 = vpack.c.b16 %v2897, %v2871
        %v2924 = vpack.c.b16 %v2898, %v2872
        %v2925 = vpack.c.b16 %v2899, %v2873
        %v2926 = vpack.c.b16 %v2900, %v2874
        %v2927 = vpack.c.b16 %v2901, %v2875
        %v2928 = vpack.c.b16 %v2902, %v2876
        %v2929 = vpack.c.b16 %v2903, %v2877
        %v2930 = vpack.c.b16 %v2904, %v2878
        %v2931 = vpack.c.b16 %v2905, %v2879
        %v2932 = vpack.c.b16 %v2906, %v2880
        %v2933 = vpack.c.b16 %v2907, %v2881
        %2960 = vmatprep.subr.bf16.mxu0 %v1223
        %2961 = vmatpush1.bf16.msra.mxu0 %v1222
        %2962 = vmatprep.subr.bf16.mxu0 %v1215
        %2963 = vmatpush1.bf16.msra.mxu0 %v1214
        %2964 = vmatprep.subr.bf16.mxu0 %v1207
        %2965 = vmatpush1.bf16.msra.mxu0 %v1206
        %2966 = vmatprep.subr.bf16.mxu0 %v1199
        %2967 = vmatpush1.bf16.msra.mxu0 %v1198
        %2968 = vmatprep.subr.bf16.mxu0 %v1191
        %2969 = vmatpush1.bf16.msra.mxu0 %v1190
        %2970 = vmatprep.subr.bf16.mxu0 %v1183
        %2971 = vmatpush1.bf16.msra.mxu0 %v1182
        %2972 = vmatprep.subr.bf16.mxu0 %v1175
        %2973 = vmatpush1.bf16.msra.mxu0 %v1174
        %2974 = vmatprep.subr.bf16.mxu0 %v1167
        %2975 = vmatpush1.bf16.msra.mxu0 %v1166
        %2976 = vmatprep.subr.bf16.mxu0 %v1287
        %2977 = vmatpush2.bf16.msra.mxu0 %v1286
        %2978 = vmatprep.subr.bf16.mxu0 %v1279
        %2979 = vmatpush2.bf16.msra.mxu0 %v1278
        %2980 = vmatprep.subr.bf16.mxu0 %v1271
        %2981 = vmatpush2.bf16.msra.mxu0 %v1270
        %2982 = vmatprep.subr.bf16.mxu0 %v1263
        %2983 = vmatpush2.bf16.msra.mxu0 %v1262
        %2984 = vmatprep.subr.bf16.mxu0 %v1255
        %2985 = vmatpush2.bf16.msra.mxu0 %v1254
        %2986 = vmatprep.subr.bf16.mxu0 %v1247
        %2987 = vmatpush2.bf16.msra.mxu0 %v1246
        %2988 = vmatprep.subr.bf16.mxu0 %v1239
        %2989 = vmatpush2.bf16.msra.mxu0 %v1238
        %2990 = vmatprep.subr.bf16.mxu0 %v1231
        %2991 = vmatpush2.bf16.msra.mxu0 %v1230
        %2992 = vmatprep.mubr.bf16.mxu0 %v2909
        %2993 = vmatmul.mubr.bf16.gmra.mxu0 %v2908
        %v2994 = vpop.f32.mrf.mxu0
        %v2995 = vadd.f32 0.0, %v2994
        %v2996 = vpop.f32.mrf.mxu0
        %v2997 = vadd.f32 0.0, %v2996
        %v2998 = vpop.f32.mrf.mxu0
        %v2999 = vadd.f32 0.0, %v2998
        %v3000 = vpop.f32.mrf.mxu0
        %v3001 = vadd.f32 0.0, %v3000
        %3002 = vdwg.mxu0
        %3003 = vmatprep.subr.bf16.mxu0 %v1351
        %3004 = vmatpush1.bf16.msra.mxu0 %v1350
        %3005 = vmatprep.subr.bf16.mxu0 %v1343
        %3006 = vmatpush1.bf16.msra.mxu0 %v1342
        %3007 = vmatprep.subr.bf16.mxu0 %v1335
        %3008 = vmatpush1.bf16.msra.mxu0 %v1334
        %3009 = vmatprep.subr.bf16.mxu0 %v1327
        %3010 = vmatpush1.bf16.msra.mxu0 %v1326
        %3011 = vmatprep.subr.bf16.mxu0 %v1319
        %3012 = vmatpush1.bf16.msra.mxu0 %v1318
        %3013 = vmatprep.subr.bf16.mxu0 %v1311
        %3014 = vmatpush1.bf16.msra.mxu0 %v1310
        %3015 = vmatprep.subr.bf16.mxu0 %v1303
        %3016 = vmatpush1.bf16.msra.mxu0 %v1302
        %3017 = vmatprep.subr.bf16.mxu0 %v1295
        %3018 = vmatpush1.bf16.msra.mxu0 %v1294
        %3019 = vmatprep.subr.bf16.mxu0 %v1415
        %3020 = vmatpush2.bf16.msra.mxu0 %v1414
        %3021 = vmatprep.subr.bf16.mxu0 %v1407
        %3022 = vmatpush2.bf16.msra.mxu0 %v1406
        %3023 = vmatprep.subr.bf16.mxu0 %v1399
        %3024 = vmatpush2.bf16.msra.mxu0 %v1398
        %3025 = vmatprep.subr.bf16.mxu0 %v1391
        %3026 = vmatpush2.bf16.msra.mxu0 %v1390
        %3027 = vmatprep.subr.bf16.mxu0 %v1383
        %3028 = vmatpush2.bf16.msra.mxu0 %v1382
        %3029 = vmatprep.subr.bf16.mxu0 %v1375
        %3030 = vmatpush2.bf16.msra.mxu0 %v1374
        %3031 = vmatprep.subr.bf16.mxu0 %v1367
        %3032 = vmatpush2.bf16.msra.mxu0 %v1366
        %3033 = vmatprep.subr.bf16.mxu0 %v1359
        %3034 = vmatpush2.bf16.msra.mxu0 %v1358
        %3035 = vmatprep.mubr.bf16.mxu0 %v2911
        %3036 = vmatmul.mubr.bf16.gmra.mxu0 %v2910
        %v3037 = vpop.f32.mrf.mxu0
        %v3038 = vadd.f32 %v2995, %v3037
        %v3039 = vpop.f32.mrf.mxu0
        %v3040 = vadd.f32 %v2997, %v3039
        %v3041 = vpop.f32.mrf.mxu0
        %v3042 = vadd.f32 %v2999, %v3041
        %v3043 = vpop.f32.mrf.mxu0
        %v3044 = vadd.f32 %v3001, %v3043
        %3045 = vdwg.mxu0
        %3046 = vmatprep.subr.bf16.mxu0 %v1479
        %3047 = vmatpush1.bf16.msra.mxu0 %v1478
        %3048 = vmatprep.subr.bf16.mxu0 %v1471
        %3049 = vmatpush1.bf16.msra.mxu0 %v1470
        %3050 = vmatprep.subr.bf16.mxu0 %v1463
        %3051 = vmatpush1.bf16.msra.mxu0 %v1462
        %3052 = vmatprep.subr.bf16.mxu0 %v1455
        %3053 = vmatpush1.bf16.msra.mxu0 %v1454
        %3054 = vmatprep.subr.bf16.mxu0 %v1447
        %3055 = vmatpush1.bf16.msra.mxu0 %v1446
        %3056 = vmatprep.subr.bf16.mxu0 %v1439
        %3057 = vmatpush1.bf16.msra.mxu0 %v1438
        %3058 = vmatprep.subr.bf16.mxu0 %v1431
        %3059 = vmatpush1.bf16.msra.mxu0 %v1430
        %3060 = vmatprep.subr.bf16.mxu0 %v1423
        %3061 = vmatpush1.bf16.msra.mxu0 %v1422
        %3062 = vmatprep.subr.bf16.mxu0 %v1543
        %3063 = vmatpush2.bf16.msra.mxu0 %v1542
        %3064 = vmatprep.subr.bf16.mxu0 %v1535
        %3065 = vmatpush2.bf16.msra.mxu0 %v1534
        %3066 = vmatprep.subr.bf16.mxu0 %v1527
        %3067 = vmatpush2.bf16.msra.mxu0 %v1526
        %3068 = vmatprep.subr.bf16.mxu0 %v1519
        %3069 = vmatpush2.bf16.msra.mxu0 %v1518
        %3070 = vmatprep.subr.bf16.mxu0 %v1511
        %3071 = vmatpush2.bf16.msra.mxu0 %v1510
        %3072 = vmatprep.subr.bf16.mxu0 %v1503
        %3073 = vmatpush2.bf16.msra.mxu0 %v1502
        %3074 = vmatprep.subr.bf16.mxu0 %v1495
        %3075 = vmatpush2.bf16.msra.mxu0 %v1494
        %3076 = vmatprep.subr.bf16.mxu0 %v1487
        %3077 = vmatpush2.bf16.msra.mxu0 %v1486
        %3078 = vmatprep.mubr.bf16.mxu0 %v2913
        %3079 = vmatmul.mubr.bf16.gmra.mxu0 %v2912
        %v3080 = vpop.f32.mrf.mxu0
        %v3081 = vadd.f32 %v3038, %v3080
        %v3082 = vpop.f32.mrf.mxu0
        %v3083 = vadd.f32 %v3040, %v3082
        %v3084 = vpop.f32.mrf.mxu0
        %v3085 = vadd.f32 %v3042, %v3084
        %v3086 = vpop.f32.mrf.mxu0
        %v3087 = vadd.f32 %v3044, %v3086
        %3088 = vdwg.mxu0
        %3089 = vmatprep.subr.bf16.mxu0 %v1607
        %3090 = vmatpush1.bf16.msra.mxu0 %v1606
        %3091 = vmatprep.subr.bf16.mxu0 %v1599
        %3092 = vmatpush1.bf16.msra.mxu0 %v1598
        %3093 = vmatprep.subr.bf16.mxu0 %v1591
        %3094 = vmatpush1.bf16.msra.mxu0 %v1590
        %3095 = vmatprep.subr.bf16.mxu0 %v1583
        %3096 = vmatpush1.bf16.msra.mxu0 %v1582
        %3097 = vmatprep.subr.bf16.mxu0 %v1575
        %3098 = vmatpush1.bf16.msra.mxu0 %v1574
        %3099 = vmatprep.subr.bf16.mxu0 %v1567
        %3100 = vmatpush1.bf16.msra.mxu0 %v1566
        %3101 = vmatprep.subr.bf16.mxu0 %v1559
        %3102 = vmatpush1.bf16.msra.mxu0 %v1558
        %3103 = vmatprep.subr.bf16.mxu0 %v1551
        %3104 = vmatpush1.bf16.msra.mxu0 %v1550
        %3105 = vmatprep.subr.bf16.mxu0 %v1671
        %3106 = vmatpush2.bf16.msra.mxu0 %v1670
        %3107 = vmatprep.subr.bf16.mxu0 %v1663
        %3108 = vmatpush2.bf16.msra.mxu0 %v1662
        %3109 = vmatprep.subr.bf16.mxu0 %v1655
        %3110 = vmatpush2.bf16.msra.mxu0 %v1654
        %3111 = vmatprep.subr.bf16.mxu0 %v1647
        %3112 = vmatpush2.bf16.msra.mxu0 %v1646
        %3113 = vmatprep.subr.bf16.mxu0 %v1639
        %3114 = vmatpush2.bf16.msra.mxu0 %v1638
        %3115 = vmatprep.subr.bf16.mxu0 %v1631
        %3116 = vmatpush2.bf16.msra.mxu0 %v1630
        %3117 = vmatprep.subr.bf16.mxu0 %v1623
        %3118 = vmatpush2.bf16.msra.mxu0 %v1622
        %3119 = vmatprep.subr.bf16.mxu0 %v1615
        %3120 = vmatpush2.bf16.msra.mxu0 %v1614
        %3121 = vmatprep.mubr.bf16.mxu0 %v2915
        %3122 = vmatmul.mubr.bf16.gmra.mxu0 %v2914
        %v3123 = vpop.f32.mrf.mxu0
        %v3124 = vadd.f32 %v3081, %v3123
        %v3125 = vpop.f32.mrf.mxu0
        %v3126 = vadd.f32 %v3083, %v3125
        %v3127 = vpop.f32.mrf.mxu0
        %v3128 = vadd.f32 %v3085, %v3127
        %v3129 = vpop.f32.mrf.mxu0
        %v3130 = vadd.f32 %v3087, %v3129
        %3131 = vdwg.mxu0
        %3132 = vmatprep.subr.bf16.mxu0 %v1735
        %3133 = vmatpush1.bf16.msra.mxu0 %v1734
        %3134 = vmatprep.subr.bf16.mxu0 %v1727
        %3135 = vmatpush1.bf16.msra.mxu0 %v1726
        %3136 = vmatprep.subr.bf16.mxu0 %v1719
        %3137 = vmatpush1.bf16.msra.mxu0 %v1718
        %3138 = vmatprep.subr.bf16.mxu0 %v1711
        %3139 = vmatpush1.bf16.msra.mxu0 %v1710
        %3140 = vmatprep.subr.bf16.mxu0 %v1703
        %3141 = vmatpush1.bf16.msra.mxu0 %v1702
        %3142 = vmatprep.subr.bf16.mxu0 %v1695
        %3143 = vmatpush1.bf16.msra.mxu0 %v1694
        %3144 = vmatprep.subr.bf16.mxu0 %v1687
        %3145 = vmatpush1.bf16.msra.mxu0 %v1686
        %3146 = vmatprep.subr.bf16.mxu0 %v1679
        %3147 = vmatpush1.bf16.msra.mxu0 %v1678
        %3148 = vmatprep.subr.bf16.mxu0 %v1799
        %3149 = vmatpush2.bf16.msra.mxu0 %v1798
        %3150 = vmatprep.subr.bf16.mxu0 %v1791
        %3151 = vmatpush2.bf16.msra.mxu0 %v1790
        %3152 = vmatprep.subr.bf16.mxu0 %v1783
        %3153 = vmatpush2.bf16.msra.mxu0 %v1782
        %3154 = vmatprep.subr.bf16.mxu0 %v1775
        %3155 = vmatpush2.bf16.msra.mxu0 %v1774
        %3156 = vmatprep.subr.bf16.mxu0 %v1767
        %3157 = vmatpush2.bf16.msra.mxu0 %v1766
        %3158 = vmatprep.subr.bf16.mxu0 %v1759
        %3159 = vmatpush2.bf16.msra.mxu0 %v1758
        %3160 = vmatprep.subr.bf16.mxu0 %v1751
        %3161 = vmatpush2.bf16.msra.mxu0 %v1750
        %3162 = vmatprep.subr.bf16.mxu0 %v1743
        %3163 = vmatpush2.bf16.msra.mxu0 %v1742
        %3164 = vmatprep.mubr.bf16.mxu0 %v2917
        %3165 = vmatmul.mubr.bf16.gmra.mxu0 %v2916
        %v3166 = vpop.f32.mrf.mxu0
        %v3167 = vadd.f32 %v3124, %v3166
        %v3168 = vpop.f32.mrf.mxu0
        %v3169 = vadd.f32 %v3126, %v3168
        %v3170 = vpop.f32.mrf.mxu0
        %v3171 = vadd.f32 %v3128, %v3170
        %v3172 = vpop.f32.mrf.mxu0
        %v3173 = vadd.f32 %v3130, %v3172
        %3174 = vdwg.mxu0
        %3175 = vmatprep.subr.bf16.mxu0 %v1863
        %3176 = vmatpush1.bf16.msra.mxu0 %v1862
        %3177 = vmatprep.subr.bf16.mxu0 %v1855
        %3178 = vmatpush1.bf16.msra.mxu0 %v1854
        %3179 = vmatprep.subr.bf16.mxu0 %v1847
        %3180 = vmatpush1.bf16.msra.mxu0 %v1846
        %3181 = vmatprep.subr.bf16.mxu0 %v1839
        %3182 = vmatpush1.bf16.msra.mxu0 %v1838
        %3183 = vmatprep.subr.bf16.mxu0 %v1831
        %3184 = vmatpush1.bf16.msra.mxu0 %v1830
        %3185 = vmatprep.subr.bf16.mxu0 %v1823
        %3186 = vmatpush1.bf16.msra.mxu0 %v1822
        %3187 = vmatprep.subr.bf16.mxu0 %v1815
        %3188 = vmatpush1.bf16.msra.mxu0 %v1814
        %3189 = vmatprep.subr.bf16.mxu0 %v1807
        %3190 = vmatpush1.bf16.msra.mxu0 %v1806
        %3191 = vmatprep.subr.bf16.mxu0 %v1927
        %3192 = vmatpush2.bf16.msra.mxu0 %v1926
        %3193 = vmatprep.subr.bf16.mxu0 %v1919
        %3194 = vmatpush2.bf16.msra.mxu0 %v1918
        %3195 = vmatprep.subr.bf16.mxu0 %v1911
        %3196 = vmatpush2.bf16.msra.mxu0 %v1910
        %3197 = vmatprep.subr.bf16.mxu0 %v1903
        %3198 = vmatpush2.bf16.msra.mxu0 %v1902
        %3199 = vmatprep.subr.bf16.mxu0 %v1895
        %3200 = vmatpush2.bf16.msra.mxu0 %v1894
        %3201 = vmatprep.subr.bf16.mxu0 %v1887
        %3202 = vmatpush2.bf16.msra.mxu0 %v1886
        %3203 = vmatprep.subr.bf16.mxu0 %v1879
        %3204 = vmatpush2.bf16.msra.mxu0 %v1878
        %3205 = vmatprep.subr.bf16.mxu0 %v1871
        %3206 = vmatpush2.bf16.msra.mxu0 %v1870
        %3207 = vmatprep.mubr.bf16.mxu0 %v2919
        %3208 = vmatmul.mubr.bf16.gmra.mxu0 %v2918
        %v3209 = vpop.f32.mrf.mxu0
        %v3210 = vadd.f32 %v3167, %v3209
        %v3211 = vpop.f32.mrf.mxu0
        %v3212 = vadd.f32 %v3169, %v3211
        %v3213 = vpop.f32.mrf.mxu0
        %v3214 = vadd.f32 %v3171, %v3213
        %v3215 = vpop.f32.mrf.mxu0
        %v3216 = vadd.f32 %v3173, %v3215
        %3217 = vdwg.mxu0
        %3218 = vmatprep.subr.bf16.mxu0 %v1991
        %3219 = vmatpush1.bf16.msra.mxu0 %v1990
        %3220 = vmatprep.subr.bf16.mxu0 %v1983
        %3221 = vmatpush1.bf16.msra.mxu0 %v1982
        %3222 = vmatprep.subr.bf16.mxu0 %v1975
        %3223 = vmatpush1.bf16.msra.mxu0 %v1974
        %3224 = vmatprep.subr.bf16.mxu0 %v1967
        %3225 = vmatpush1.bf16.msra.mxu0 %v1966
        %3226 = vmatprep.subr.bf16.mxu0 %v1959
        %3227 = vmatpush1.bf16.msra.mxu0 %v1958
        %3228 = vmatprep.subr.bf16.mxu0 %v1951
        %3229 = vmatpush1.bf16.msra.mxu0 %v1950
        %3230 = vmatprep.subr.bf16.mxu0 %v1943
        %3231 = vmatpush1.bf16.msra.mxu0 %v1942
        %3232 = vmatprep.subr.bf16.mxu0 %v1935
        %3233 = vmatpush1.bf16.msra.mxu0 %v1934
        %3234 = vmatprep.subr.bf16.mxu0 %v2055
        %3235 = vmatpush2.bf16.msra.mxu0 %v2054
        %3236 = vmatprep.subr.bf16.mxu0 %v2047
        %3237 = vmatpush2.bf16.msra.mxu0 %v2046
        %3238 = vmatprep.subr.bf16.mxu0 %v2039
        %3239 = vmatpush2.bf16.msra.mxu0 %v2038
        %3240 = vmatprep.subr.bf16.mxu0 %v2031
        %3241 = vmatpush2.bf16.msra.mxu0 %v2030
        %3242 = vmatprep.subr.bf16.mxu0 %v2023
        %3243 = vmatpush2.bf16.msra.mxu0 %v2022
        %3244 = vmatprep.subr.bf16.mxu0 %v2015
        %3245 = vmatpush2.bf16.msra.mxu0 %v2014
        %3246 = vmatprep.subr.bf16.mxu0 %v2007
        %3247 = vmatpush2.bf16.msra.mxu0 %v2006
        %3248 = vmatprep.subr.bf16.mxu0 %v1999
        %3249 = vmatpush2.bf16.msra.mxu0 %v1998
        %3250 = vmatprep.mubr.bf16.mxu0 %v2921
        %3251 = vmatmul.mubr.bf16.gmra.mxu0 %v2920
        %v3252 = vpop.f32.mrf.mxu0
        %v3253 = vadd.f32 %v3210, %v3252
        %v3254 = vpop.f32.mrf.mxu0
        %v3255 = vadd.f32 %v3212, %v3254
        %v3256 = vpop.f32.mrf.mxu0
        %v3257 = vadd.f32 %v3214, %v3256
        %v3258 = vpop.f32.mrf.mxu0
        %v3259 = vadd.f32 %v3216, %v3258
        %3260 = vdwg.mxu0
        %3261 = vmatprep.subr.bf16.mxu0 %v2119
        %3262 = vmatpush1.bf16.msra.mxu0 %v2118
        %3263 = vmatprep.subr.bf16.mxu0 %v2111
        %3264 = vmatpush1.bf16.msra.mxu0 %v2110
        %3265 = vmatprep.subr.bf16.mxu0 %v2103
        %3266 = vmatpush1.bf16.msra.mxu0 %v2102
        %3267 = vmatprep.subr.bf16.mxu0 %v2095
        %3268 = vmatpush1.bf16.msra.mxu0 %v2094
        %3269 = vmatprep.subr.bf16.mxu0 %v2087
        %3270 = vmatpush1.bf16.msra.mxu0 %v2086
        %3271 = vmatprep.subr.bf16.mxu0 %v2079
        %3272 = vmatpush1.bf16.msra.mxu0 %v2078
        %3273 = vmatprep.subr.bf16.mxu0 %v2071
        %3274 = vmatpush1.bf16.msra.mxu0 %v2070
        %3275 = vmatprep.subr.bf16.mxu0 %v2063
        %3276 = vmatpush1.bf16.msra.mxu0 %v2062
        %3277 = vmatprep.subr.bf16.mxu0 %v2183
        %3278 = vmatpush2.bf16.msra.mxu0 %v2182
        %3279 = vmatprep.subr.bf16.mxu0 %v2175
        %3280 = vmatpush2.bf16.msra.mxu0 %v2174
        %3281 = vmatprep.subr.bf16.mxu0 %v2167
        %3282 = vmatpush2.bf16.msra.mxu0 %v2166
        %3283 = vmatprep.subr.bf16.mxu0 %v2159
        %3284 = vmatpush2.bf16.msra.mxu0 %v2158
        %3285 = vmatprep.subr.bf16.mxu0 %v2151
        %3286 = vmatpush2.bf16.msra.mxu0 %v2150
        %3287 = vmatprep.subr.bf16.mxu0 %v2143
        %3288 = vmatpush2.bf16.msra.mxu0 %v2142
        %3289 = vmatprep.subr.bf16.mxu0 %v2135
        %3290 = vmatpush2.bf16.msra.mxu0 %v2134
        %3291 = vmatprep.subr.bf16.mxu0 %v2127
        %3292 = vmatpush2.bf16.msra.mxu0 %v2126
        %3293 = vmatprep.mubr.bf16.mxu0 %v2923
        %3294 = vmatmul.mubr.bf16.gmra.mxu0 %v2922
        %v3295 = vpop.f32.mrf.mxu0
        %v3296 = vadd.f32 %v3253, %v3295
        %v3297 = vpop.f32.mrf.mxu0
        %v3298 = vadd.f32 %v3255, %v3297
        %v3299 = vpop.f32.mrf.mxu0
        %v3300 = vadd.f32 %v3257, %v3299
        %v3301 = vpop.f32.mrf.mxu0
        %v3302 = vadd.f32 %v3259, %v3301
        %3303 = vdwg.mxu0
        %3304 = vmatprep.subr.bf16.mxu0 %v2247
        %3305 = vmatpush1.bf16.msra.mxu0 %v2246
        %3306 = vmatprep.subr.bf16.mxu0 %v2239
        %3307 = vmatpush1.bf16.msra.mxu0 %v2238
        %3308 = vmatprep.subr.bf16.mxu0 %v2231
        %3309 = vmatpush1.bf16.msra.mxu0 %v2230
        %3310 = vmatprep.subr.bf16.mxu0 %v2223
        %3311 = vmatpush1.bf16.msra.mxu0 %v2222
        %3312 = vmatprep.subr.bf16.mxu0 %v2215
        %3313 = vmatpush1.bf16.msra.mxu0 %v2214
        %3314 = vmatprep.subr.bf16.mxu0 %v2207
        %3315 = vmatpush1.bf16.msra.mxu0 %v2206
        %3316 = vmatprep.subr.bf16.mxu0 %v2199
        %3317 = vmatpush1.bf16.msra.mxu0 %v2198
        %3318 = vmatprep.subr.bf16.mxu0 %v2191
        %3319 = vmatpush1.bf16.msra.mxu0 %v2190
        %3320 = vmatprep.subr.bf16.mxu0 %v2311
        %3321 = vmatpush2.bf16.msra.mxu0 %v2310
        %3322 = vmatprep.subr.bf16.mxu0 %v2303
        %3323 = vmatpush2.bf16.msra.mxu0 %v2302
        %3324 = vmatprep.subr.bf16.mxu0 %v2295
        %3325 = vmatpush2.bf16.msra.mxu0 %v2294
        %3326 = vmatprep.subr.bf16.mxu0 %v2287
        %3327 = vmatpush2.bf16.msra.mxu0 %v2286
        %3328 = vmatprep.subr.bf16.mxu0 %v2279
        %3329 = vmatpush2.bf16.msra.mxu0 %v2278
        %3330 = vmatprep.subr.bf16.mxu0 %v2271
        %3331 = vmatpush2.bf16.msra.mxu0 %v2270
        %3332 = vmatprep.subr.bf16.mxu0 %v2263
        %3333 = vmatpush2.bf16.msra.mxu0 %v2262
        %3334 = vmatprep.subr.bf16.mxu0 %v2255
        %3335 = vmatpush2.bf16.msra.mxu0 %v2254
        %3336 = vmatprep.mubr.bf16.mxu0 %v2925
        %3337 = vmatmul.mubr.bf16.gmra.mxu0 %v2924
        %v3338 = vpop.f32.mrf.mxu0
        %v3339 = vadd.f32 %v3296, %v3338
        %v3340 = vpop.f32.mrf.mxu0
        %v3341 = vadd.f32 %v3298, %v3340
        %v3342 = vpop.f32.mrf.mxu0
        %v3343 = vadd.f32 %v3300, %v3342
        %v3344 = vpop.f32.mrf.mxu0
        %v3345 = vadd.f32 %v3302, %v3344
        %3346 = vdwg.mxu0
        %3347 = vmatprep.subr.bf16.mxu0 %v2375
        %3348 = vmatpush1.bf16.msra.mxu0 %v2374
        %3349 = vmatprep.subr.bf16.mxu0 %v2367
        %3350 = vmatpush1.bf16.msra.mxu0 %v2366
        %3351 = vmatprep.subr.bf16.mxu0 %v2359
        %3352 = vmatpush1.bf16.msra.mxu0 %v2358
        %3353 = vmatprep.subr.bf16.mxu0 %v2351
        %3354 = vmatpush1.bf16.msra.mxu0 %v2350
        %3355 = vmatprep.subr.bf16.mxu0 %v2343
        %3356 = vmatpush1.bf16.msra.mxu0 %v2342
        %3357 = vmatprep.subr.bf16.mxu0 %v2335
        %3358 = vmatpush1.bf16.msra.mxu0 %v2334
        %3359 = vmatprep.subr.bf16.mxu0 %v2327
        %3360 = vmatpush1.bf16.msra.mxu0 %v2326
        %3361 = vmatprep.subr.bf16.mxu0 %v2319
        %3362 = vmatpush1.bf16.msra.mxu0 %v2318
        %3363 = vmatprep.subr.bf16.mxu0 %v2439
        %3364 = vmatpush2.bf16.msra.mxu0 %v2438
        %3365 = vmatprep.subr.bf16.mxu0 %v2431
        %3366 = vmatpush2.bf16.msra.mxu0 %v2430
        %3367 = vmatprep.subr.bf16.mxu0 %v2423
        %3368 = vmatpush2.bf16.msra.mxu0 %v2422
        %3369 = vmatprep.subr.bf16.mxu0 %v2415
        %3370 = vmatpush2.bf16.msra.mxu0 %v2414
        %3371 = vmatprep.subr.bf16.mxu0 %v2407
        %3372 = vmatpush2.bf16.msra.mxu0 %v2406
        %3373 = vmatprep.subr.bf16.mxu0 %v2399
        %3374 = vmatpush2.bf16.msra.mxu0 %v2398
        %3375 = vmatprep.subr.bf16.mxu0 %v2391
        %3376 = vmatpush2.bf16.msra.mxu0 %v2390
        %3377 = vmatprep.subr.bf16.mxu0 %v2383
        %3378 = vmatpush2.bf16.msra.mxu0 %v2382
        %3379 = vmatprep.mubr.bf16.mxu0 %v2927
        %3380 = vmatmul.mubr.bf16.gmra.mxu0 %v2926
        %v3381 = vpop.f32.mrf.mxu0
        %v3382 = vadd.f32 %v3339, %v3381
        %v3383 = vpop.f32.mrf.mxu0
        %v3384 = vadd.f32 %v3341, %v3383
        %v3385 = vpop.f32.mrf.mxu0
        %v3386 = vadd.f32 %v3343, %v3385
        %v3387 = vpop.f32.mrf.mxu0
        %v3388 = vadd.f32 %v3345, %v3387
        %3389 = vdwg.mxu0
        %3390 = vmatprep.subr.bf16.mxu0 %v2503
        %3391 = vmatpush1.bf16.msra.mxu0 %v2502
        %3392 = vmatprep.subr.bf16.mxu0 %v2495
        %3393 = vmatpush1.bf16.msra.mxu0 %v2494
        %3394 = vmatprep.subr.bf16.mxu0 %v2487
        %3395 = vmatpush1.bf16.msra.mxu0 %v2486
        %3396 = vmatprep.subr.bf16.mxu0 %v2479
        %3397 = vmatpush1.bf16.msra.mxu0 %v2478
        %3398 = vmatprep.subr.bf16.mxu0 %v2471
        %3399 = vmatpush1.bf16.msra.mxu0 %v2470
        %3400 = vmatprep.subr.bf16.mxu0 %v2463
        %3401 = vmatpush1.bf16.msra.mxu0 %v2462
        %3402 = vmatprep.subr.bf16.mxu0 %v2455
        %3403 = vmatpush1.bf16.msra.mxu0 %v2454
        %3404 = vmatprep.subr.bf16.mxu0 %v2447
        %3405 = vmatpush1.bf16.msra.mxu0 %v2446
        %3406 = vmatprep.subr.bf16.mxu0 %v2567
        %3407 = vmatpush2.bf16.msra.mxu0 %v2566
        %3408 = vmatprep.subr.bf16.mxu0 %v2559
        %3409 = vmatpush2.bf16.msra.mxu0 %v2558
        %3410 = vmatprep.subr.bf16.mxu0 %v2551
        %3411 = vmatpush2.bf16.msra.mxu0 %v2550
        %3412 = vmatprep.subr.bf16.mxu0 %v2543
        %3413 = vmatpush2.bf16.msra.mxu0 %v2542
        %3414 = vmatprep.subr.bf16.mxu0 %v2535
        %3415 = vmatpush2.bf16.msra.mxu0 %v2534
        %3416 = vmatprep.subr.bf16.mxu0 %v2527
        %3417 = vmatpush2.bf16.msra.mxu0 %v2526
        %3418 = vmatprep.subr.bf16.mxu0 %v2519
        %3419 = vmatpush2.bf16.msra.mxu0 %v2518
        %3420 = vmatprep.subr.bf16.mxu0 %v2511
        %3421 = vmatpush2.bf16.msra.mxu0 %v2510
        %3422 = vmatprep.mubr.bf16.mxu0 %v2929
        %3423 = vmatmul.mubr.bf16.gmra.mxu0 %v2928
        %v3424 = vpop.f32.mrf.mxu0
        %v3425 = vadd.f32 %v3382, %v3424
        %v3426 = vpop.f32.mrf.mxu0
        %v3427 = vadd.f32 %v3384, %v3426
        %v3428 = vpop.f32.mrf.mxu0
        %v3429 = vadd.f32 %v3386, %v3428
        %v3430 = vpop.f32.mrf.mxu0
        %v3431 = vadd.f32 %v3388, %v3430
        %3432 = vdwg.mxu0
        %3433 = vmatprep.subr.bf16.mxu0 %v2631
        %3434 = vmatpush1.bf16.msra.mxu0 %v2630
        %3435 = vmatprep.subr.bf16.mxu0 %v2623
        %3436 = vmatpush1.bf16.msra.mxu0 %v2622
        %3437 = vmatprep.subr.bf16.mxu0 %v2615
        %3438 = vmatpush1.bf16.msra.mxu0 %v2614
        %3439 = vmatprep.subr.bf16.mxu0 %v2607
        %3440 = vmatpush1.bf16.msra.mxu0 %v2606
        %3441 = vmatprep.subr.bf16.mxu0 %v2599
        %3442 = vmatpush1.bf16.msra.mxu0 %v2598
        %3443 = vmatprep.subr.bf16.mxu0 %v2591
        %3444 = vmatpush1.bf16.msra.mxu0 %v2590
        %3445 = vmatprep.subr.bf16.mxu0 %v2583
        %3446 = vmatpush1.bf16.msra.mxu0 %v2582
        %3447 = vmatprep.subr.bf16.mxu0 %v2575
        %3448 = vmatpush1.bf16.msra.mxu0 %v2574
        %3449 = vmatprep.subr.bf16.mxu0 %v2695
        %3450 = vmatpush2.bf16.msra.mxu0 %v2694
        %3451 = vmatprep.subr.bf16.mxu0 %v2687
        %3452 = vmatpush2.bf16.msra.mxu0 %v2686
        %3453 = vmatprep.subr.bf16.mxu0 %v2679
        %3454 = vmatpush2.bf16.msra.mxu0 %v2678
        %3455 = vmatprep.subr.bf16.mxu0 %v2671
        %3456 = vmatpush2.bf16.msra.mxu0 %v2670
        %3457 = vmatprep.subr.bf16.mxu0 %v2663
        %3458 = vmatpush2.bf16.msra.mxu0 %v2662
        %3459 = vmatprep.subr.bf16.mxu0 %v2655
        %3460 = vmatpush2.bf16.msra.mxu0 %v2654
        %3461 = vmatprep.subr.bf16.mxu0 %v2647
        %3462 = vmatpush2.bf16.msra.mxu0 %v2646
        %3463 = vmatprep.subr.bf16.mxu0 %v2639
        %3464 = vmatpush2.bf16.msra.mxu0 %v2638
        %3465 = vmatprep.mubr.bf16.mxu0 %v2931
        %3466 = vmatmul.mubr.bf16.gmra.mxu0 %v2930
        %v3467 = vpop.f32.mrf.mxu0
        %v3468 = vadd.f32 %v3425, %v3467
        %v3469 = vpop.f32.mrf.mxu0
        %v3470 = vadd.f32 %v3427, %v3469
        %v3471 = vpop.f32.mrf.mxu0
        %v3472 = vadd.f32 %v3429, %v3471
        %v3473 = vpop.f32.mrf.mxu0
        %v3474 = vadd.f32 %v3431, %v3473
        %3475 = vdwg.mxu0
        %3476 = vmatprep.subr.bf16.mxu0 %v2759
        %3477 = vmatpush1.bf16.msra.mxu0 %v2758
        %3478 = vmatprep.subr.bf16.mxu0 %v2751
        %3479 = vmatpush1.bf16.msra.mxu0 %v2750
        %3480 = vmatprep.subr.bf16.mxu0 %v2743
        %3481 = vmatpush1.bf16.msra.mxu0 %v2742
        %3482 = vmatprep.subr.bf16.mxu0 %v2735
        %3483 = vmatpush1.bf16.msra.mxu0 %v2734
        %3484 = vmatprep.subr.bf16.mxu0 %v2727
        %3485 = vmatpush1.bf16.msra.mxu0 %v2726
        %3486 = vmatprep.subr.bf16.mxu0 %v2719
        %3487 = vmatpush1.bf16.msra.mxu0 %v2718
        %3488 = vmatprep.subr.bf16.mxu0 %v2711
        %3489 = vmatpush1.bf16.msra.mxu0 %v2710
        %3490 = vmatprep.subr.bf16.mxu0 %v2703
        %3491 = vmatpush1.bf16.msra.mxu0 %v2702
        %3492 = vmatprep.subr.bf16.mxu0 %v2823
        %3493 = vmatpush2.bf16.msra.mxu0 %v2822
        %3494 = vmatprep.subr.bf16.mxu0 %v2815
        %3495 = vmatpush2.bf16.msra.mxu0 %v2814
        %3496 = vmatprep.subr.bf16.mxu0 %v2807
        %3497 = vmatpush2.bf16.msra.mxu0 %v2806
        %3498 = vmatprep.subr.bf16.mxu0 %v2799
        %3499 = vmatpush2.bf16.msra.mxu0 %v2798
        %3500 = vmatprep.subr.bf16.mxu0 %v2791
        %3501 = vmatpush2.bf16.msra.mxu0 %v2790
        %3502 = vmatprep.subr.bf16.mxu0 %v2783
        %3503 = vmatpush2.bf16.msra.mxu0 %v2782
        %3504 = vmatprep.subr.bf16.mxu0 %v2775
        %3505 = vmatpush2.bf16.msra.mxu0 %v2774
        %3506 = vmatprep.subr.bf16.mxu0 %v2767
        %3507 = vmatpush2.bf16.msra.mxu0 %v2766
        %3508 = vmatprep.mubr.bf16.mxu0 %v2933
        %3509 = vmatmul.mubr.bf16.gmra.mxu0 %v2932
        %v3510 = vpop.f32.mrf.mxu0
        %v3511 = vadd.f32 %v3468, %v3510
        %v3512 = vpop.f32.mrf.mxu0
        %v3513 = vadd.f32 %v3470, %v3512
        %v3514 = vpop.f32.mrf.mxu0
        %v3515 = vadd.f32 %v3472, %v3514
        %v3516 = vpop.f32.mrf.mxu0
        %v3517 = vadd.f32 %v3474, %v3516
        %3518 = vdwg.mxu0
        %3519 = vmatprep.subr.bf16.mxu0 %v1225
        %3520 = vmatpush1.bf16.msra.mxu0 %v1224
        %3521 = vmatprep.subr.bf16.mxu0 %v1217
        %3522 = vmatpush1.bf16.msra.mxu0 %v1216
        %3523 = vmatprep.subr.bf16.mxu0 %v1209
        %3524 = vmatpush1.bf16.msra.mxu0 %v1208
        %3525 = vmatprep.subr.bf16.mxu0 %v1201
        %3526 = vmatpush1.bf16.msra.mxu0 %v1200
        %3527 = vmatprep.subr.bf16.mxu0 %v1193
        %3528 = vmatpush1.bf16.msra.mxu0 %v1192
        %3529 = vmatprep.subr.bf16.mxu0 %v1185
        %3530 = vmatpush1.bf16.msra.mxu0 %v1184
        %3531 = vmatprep.subr.bf16.mxu0 %v1177
        %3532 = vmatpush1.bf16.msra.mxu0 %v1176
        %3533 = vmatprep.subr.bf16.mxu0 %v1169
        %3534 = vmatpush1.bf16.msra.mxu0 %v1168
        %3535 = vmatprep.subr.bf16.mxu0 %v1289
        %3536 = vmatpush2.bf16.msra.mxu0 %v1288
        %3537 = vmatprep.subr.bf16.mxu0 %v1281
        %3538 = vmatpush2.bf16.msra.mxu0 %v1280
        %3539 = vmatprep.subr.bf16.mxu0 %v1273
        %3540 = vmatpush2.bf16.msra.mxu0 %v1272
        %3541 = vmatprep.subr.bf16.mxu0 %v1265
        %3542 = vmatpush2.bf16.msra.mxu0 %v1264
        %3543 = vmatprep.subr.bf16.mxu0 %v1257
        %3544 = vmatpush2.bf16.msra.mxu0 %v1256
        %3545 = vmatprep.subr.bf16.mxu0 %v1249
        %3546 = vmatpush2.bf16.msra.mxu0 %v1248
        %3547 = vmatprep.subr.bf16.mxu0 %v1241
        %3548 = vmatpush2.bf16.msra.mxu0 %v1240
        %3549 = vmatprep.subr.bf16.mxu0 %v1233
        %3550 = vmatpush2.bf16.msra.mxu0 %v1232
        %3551 = vmatprep.mubr.bf16.mxu0 %v2909
        %3552 = vmatmul.mubr.bf16.gmra.mxu0 %v2908
        %v3553 = vpop.f32.mrf.mxu0
        %v3554 = vadd.f32 0.0, %v3553
        %v3555 = vpop.f32.mrf.mxu0
        %v3556 = vadd.f32 0.0, %v3555
        %v3557 = vpop.f32.mrf.mxu0
        %v3558 = vadd.f32 0.0, %v3557
        %v3559 = vpop.f32.mrf.mxu0
        %v3560 = vadd.f32 0.0, %v3559
        %3561 = vdwg.mxu0
        %3562 = vmatprep.subr.bf16.mxu0 %v1353
        %3563 = vmatpush1.bf16.msra.mxu0 %v1352
        %3564 = vmatprep.subr.bf16.mxu0 %v1345
        %3565 = vmatpush1.bf16.msra.mxu0 %v1344
        %3566 = vmatprep.subr.bf16.mxu0 %v1337
        %3567 = vmatpush1.bf16.msra.mxu0 %v1336
        %3568 = vmatprep.subr.bf16.mxu0 %v1329
        %3569 = vmatpush1.bf16.msra.mxu0 %v1328
        %3570 = vmatprep.subr.bf16.mxu0 %v1321
        %3571 = vmatpush1.bf16.msra.mxu0 %v1320
        %3572 = vmatprep.subr.bf16.mxu0 %v1313
        %3573 = vmatpush1.bf16.msra.mxu0 %v1312
        %3574 = vmatprep.subr.bf16.mxu0 %v1305
        %3575 = vmatpush1.bf16.msra.mxu0 %v1304
        %3576 = vmatprep.subr.bf16.mxu0 %v1297
        %3577 = vmatpush1.bf16.msra.mxu0 %v1296
        %3578 = vmatprep.subr.bf16.mxu0 %v1417
        %3579 = vmatpush2.bf16.msra.mxu0 %v1416
        %3580 = vmatprep.subr.bf16.mxu0 %v1409
        %3581 = vmatpush2.bf16.msra.mxu0 %v1408
        %3582 = vmatprep.subr.bf16.mxu0 %v1401
        %3583 = vmatpush2.bf16.msra.mxu0 %v1400
        %3584 = vmatprep.subr.bf16.mxu0 %v1393
        %3585 = vmatpush2.bf16.msra.mxu0 %v1392
        %3586 = vmatprep.subr.bf16.mxu0 %v1385
        %3587 = vmatpush2.bf16.msra.mxu0 %v1384
        %3588 = vmatprep.subr.bf16.mxu0 %v1377
        %3589 = vmatpush2.bf16.msra.mxu0 %v1376
        %3590 = vmatprep.subr.bf16.mxu0 %v1369
        %3591 = vmatpush2.bf16.msra.mxu0 %v1368
        %3592 = vmatprep.subr.bf16.mxu0 %v1361
        %3593 = vmatpush2.bf16.msra.mxu0 %v1360
        %3594 = vmatprep.mubr.bf16.mxu0 %v2911
        %3595 = vmatmul.mubr.bf16.gmra.mxu0 %v2910
        %v3596 = vpop.f32.mrf.mxu0
        %v3597 = vadd.f32 %v3554, %v3596
        %v3598 = vpop.f32.mrf.mxu0
        %v3599 = vadd.f32 %v3556, %v3598
        %v3600 = vpop.f32.mrf.mxu0
        %v3601 = vadd.f32 %v3558, %v3600
        %v3602 = vpop.f32.mrf.mxu0
        %v3603 = vadd.f32 %v3560, %v3602
        %3604 = vdwg.mxu0
        %3605 = vmatprep.subr.bf16.mxu0 %v1481
        %3606 = vmatpush1.bf16.msra.mxu0 %v1480
        %3607 = vmatprep.subr.bf16.mxu0 %v1473
        %3608 = vmatpush1.bf16.msra.mxu0 %v1472
        %3609 = vmatprep.subr.bf16.mxu0 %v1465
        %3610 = vmatpush1.bf16.msra.mxu0 %v1464
        %3611 = vmatprep.subr.bf16.mxu0 %v1457
        %3612 = vmatpush1.bf16.msra.mxu0 %v1456
        %3613 = vmatprep.subr.bf16.mxu0 %v1449
        %3614 = vmatpush1.bf16.msra.mxu0 %v1448
        %3615 = vmatprep.subr.bf16.mxu0 %v1441
        %3616 = vmatpush1.bf16.msra.mxu0 %v1440
        %3617 = vmatprep.subr.bf16.mxu0 %v1433
        %3618 = vmatpush1.bf16.msra.mxu0 %v1432
        %3619 = vmatprep.subr.bf16.mxu0 %v1425
        %3620 = vmatpush1.bf16.msra.mxu0 %v1424
        %3621 = vmatprep.subr.bf16.mxu0 %v1545
        %3622 = vmatpush2.bf16.msra.mxu0 %v1544
        %3623 = vmatprep.subr.bf16.mxu0 %v1537
        %3624 = vmatpush2.bf16.msra.mxu0 %v1536
        %3625 = vmatprep.subr.bf16.mxu0 %v1529
        %3626 = vmatpush2.bf16.msra.mxu0 %v1528
        %3627 = vmatprep.subr.bf16.mxu0 %v1521
        %3628 = vmatpush2.bf16.msra.mxu0 %v1520
        %3629 = vmatprep.subr.bf16.mxu0 %v1513
        %3630 = vmatpush2.bf16.msra.mxu0 %v1512
        %3631 = vmatprep.subr.bf16.mxu0 %v1505
        %3632 = vmatpush2.bf16.msra.mxu0 %v1504
        %3633 = vmatprep.subr.bf16.mxu0 %v1497
        %3634 = vmatpush2.bf16.msra.mxu0 %v1496
        %3635 = vmatprep.subr.bf16.mxu0 %v1489
        %3636 = vmatpush2.bf16.msra.mxu0 %v1488
        %3637 = vmatprep.mubr.bf16.mxu0 %v2913
        %3638 = vmatmul.mubr.bf16.gmra.mxu0 %v2912
        %v3639 = vpop.f32.mrf.mxu0
        %v3640 = vadd.f32 %v3597, %v3639
        %v3641 = vpop.f32.mrf.mxu0
        %v3642 = vadd.f32 %v3599, %v3641
        %v3643 = vpop.f32.mrf.mxu0
        %v3644 = vadd.f32 %v3601, %v3643
        %v3645 = vpop.f32.mrf.mxu0
        %v3646 = vadd.f32 %v3603, %v3645
        %3647 = vdwg.mxu0
        %3648 = vmatprep.subr.bf16.mxu0 %v1609
        %3649 = vmatpush1.bf16.msra.mxu0 %v1608
        %3650 = vmatprep.subr.bf16.mxu0 %v1601
        %3651 = vmatpush1.bf16.msra.mxu0 %v1600
        %3652 = vmatprep.subr.bf16.mxu0 %v1593
        %3653 = vmatpush1.bf16.msra.mxu0 %v1592
        %3654 = vmatprep.subr.bf16.mxu0 %v1585
        %3655 = vmatpush1.bf16.msra.mxu0 %v1584
        %3656 = vmatprep.subr.bf16.mxu0 %v1577
        %3657 = vmatpush1.bf16.msra.mxu0 %v1576
        %3658 = vmatprep.subr.bf16.mxu0 %v1569
        %3659 = vmatpush1.bf16.msra.mxu0 %v1568
        %3660 = vmatprep.subr.bf16.mxu0 %v1561
        %3661 = vmatpush1.bf16.msra.mxu0 %v1560
        %3662 = vmatprep.subr.bf16.mxu0 %v1553
        %3663 = vmatpush1.bf16.msra.mxu0 %v1552
        %3664 = vmatprep.subr.bf16.mxu0 %v1673
        %3665 = vmatpush2.bf16.msra.mxu0 %v1672
        %3666 = vmatprep.subr.bf16.mxu0 %v1665
        %3667 = vmatpush2.bf16.msra.mxu0 %v1664
        %3668 = vmatprep.subr.bf16.mxu0 %v1657
        %3669 = vmatpush2.bf16.msra.mxu0 %v1656
        %3670 = vmatprep.subr.bf16.mxu0 %v1649
        %3671 = vmatpush2.bf16.msra.mxu0 %v1648
        %3672 = vmatprep.subr.bf16.mxu0 %v1641
        %3673 = vmatpush2.bf16.msra.mxu0 %v1640
        %3674 = vmatprep.subr.bf16.mxu0 %v1633
        %3675 = vmatpush2.bf16.msra.mxu0 %v1632
        %3676 = vmatprep.subr.bf16.mxu0 %v1625
        %3677 = vmatpush2.bf16.msra.mxu0 %v1624
        %3678 = vmatprep.subr.bf16.mxu0 %v1617
        %3679 = vmatpush2.bf16.msra.mxu0 %v1616
        %3680 = vmatprep.mubr.bf16.mxu0 %v2915
        %3681 = vmatmul.mubr.bf16.gmra.mxu0 %v2914
        %v3682 = vpop.f32.mrf.mxu0
        %v3683 = vadd.f32 %v3640, %v3682
        %v3684 = vpop.f32.mrf.mxu0
        %v3685 = vadd.f32 %v3642, %v3684
        %v3686 = vpop.f32.mrf.mxu0
        %v3687 = vadd.f32 %v3644, %v3686
        %v3688 = vpop.f32.mrf.mxu0
        %v3689 = vadd.f32 %v3646, %v3688
        %3690 = vdwg.mxu0
        %3691 = vmatprep.subr.bf16.mxu0 %v1737
        %3692 = vmatpush1.bf16.msra.mxu0 %v1736
        %3693 = vmatprep.subr.bf16.mxu0 %v1729
        %3694 = vmatpush1.bf16.msra.mxu0 %v1728
        %3695 = vmatprep.subr.bf16.mxu0 %v1721
        %3696 = vmatpush1.bf16.msra.mxu0 %v1720
        %3697 = vmatprep.subr.bf16.mxu0 %v1713
        %3698 = vmatpush1.bf16.msra.mxu0 %v1712
        %3699 = vmatprep.subr.bf16.mxu0 %v1705
        %3700 = vmatpush1.bf16.msra.mxu0 %v1704
        %3701 = vmatprep.subr.bf16.mxu0 %v1697
        %3702 = vmatpush1.bf16.msra.mxu0 %v1696
        %3703 = vmatprep.subr.bf16.mxu0 %v1689
        %3704 = vmatpush1.bf16.msra.mxu0 %v1688
        %3705 = vmatprep.subr.bf16.mxu0 %v1681
        %3706 = vmatpush1.bf16.msra.mxu0 %v1680
        %3707 = vmatprep.subr.bf16.mxu0 %v1801
        %3708 = vmatpush2.bf16.msra.mxu0 %v1800
        %3709 = vmatprep.subr.bf16.mxu0 %v1793
        %3710 = vmatpush2.bf16.msra.mxu0 %v1792
        %3711 = vmatprep.subr.bf16.mxu0 %v1785
        %3712 = vmatpush2.bf16.msra.mxu0 %v1784
        %3713 = vmatprep.subr.bf16.mxu0 %v1777
        %3714 = vmatpush2.bf16.msra.mxu0 %v1776
        %3715 = vmatprep.subr.bf16.mxu0 %v1769
        %3716 = vmatpush2.bf16.msra.mxu0 %v1768
        %3717 = vmatprep.subr.bf16.mxu0 %v1761
        %3718 = vmatpush2.bf16.msra.mxu0 %v1760
        %3719 = vmatprep.subr.bf16.mxu0 %v1753
        %3720 = vmatpush2.bf16.msra.mxu0 %v1752
        %3721 = vmatprep.subr.bf16.mxu0 %v1745
        %3722 = vmatpush2.bf16.msra.mxu0 %v1744
        %3723 = vmatprep.mubr.bf16.mxu0 %v2917
        %3724 = vmatmul.mubr.bf16.gmra.mxu0 %v2916
        %v3725 = vpop.f32.mrf.mxu0
        %v3726 = vadd.f32 %v3683, %v3725
        %v3727 = vpop.f32.mrf.mxu0
        %v3728 = vadd.f32 %v3685, %v3727
        %v3729 = vpop.f32.mrf.mxu0
        %v3730 = vadd.f32 %v3687, %v3729
        %v3731 = vpop.f32.mrf.mxu0
        %v3732 = vadd.f32 %v3689, %v3731
        %3733 = vdwg.mxu0
        %3734 = vmatprep.subr.bf16.mxu0 %v1865
        %3735 = vmatpush1.bf16.msra.mxu0 %v1864
        %3736 = vmatprep.subr.bf16.mxu0 %v1857
        %3737 = vmatpush1.bf16.msra.mxu0 %v1856
        %3738 = vmatprep.subr.bf16.mxu0 %v1849
        %3739 = vmatpush1.bf16.msra.mxu0 %v1848
        %3740 = vmatprep.subr.bf16.mxu0 %v1841
        %3741 = vmatpush1.bf16.msra.mxu0 %v1840
        %3742 = vmatprep.subr.bf16.mxu0 %v1833
        %3743 = vmatpush1.bf16.msra.mxu0 %v1832
        %3744 = vmatprep.subr.bf16.mxu0 %v1825
        %3745 = vmatpush1.bf16.msra.mxu0 %v1824
        %3746 = vmatprep.subr.bf16.mxu0 %v1817
        %3747 = vmatpush1.bf16.msra.mxu0 %v1816
        %3748 = vmatprep.subr.bf16.mxu0 %v1809
        %3749 = vmatpush1.bf16.msra.mxu0 %v1808
        %3750 = vmatprep.subr.bf16.mxu0 %v1929
        %3751 = vmatpush2.bf16.msra.mxu0 %v1928
        %3752 = vmatprep.subr.bf16.mxu0 %v1921
        %3753 = vmatpush2.bf16.msra.mxu0 %v1920
        %3754 = vmatprep.subr.bf16.mxu0 %v1913
        %3755 = vmatpush2.bf16.msra.mxu0 %v1912
        %3756 = vmatprep.subr.bf16.mxu0 %v1905
        %3757 = vmatpush2.bf16.msra.mxu0 %v1904
        %3758 = vmatprep.subr.bf16.mxu0 %v1897
        %3759 = vmatpush2.bf16.msra.mxu0 %v1896
        %3760 = vmatprep.subr.bf16.mxu0 %v1889
        %3761 = vmatpush2.bf16.msra.mxu0 %v1888
        %3762 = vmatprep.subr.bf16.mxu0 %v1881
        %3763 = vmatpush2.bf16.msra.mxu0 %v1880
        %3764 = vmatprep.subr.bf16.mxu0 %v1873
        %3765 = vmatpush2.bf16.msra.mxu0 %v1872
        %3766 = vmatprep.mubr.bf16.mxu0 %v2919
        %3767 = vmatmul.mubr.bf16.gmra.mxu0 %v2918
        %v3768 = vpop.f32.mrf.mxu0
        %v3769 = vadd.f32 %v3726, %v3768
        %v3770 = vpop.f32.mrf.mxu0
        %v3771 = vadd.f32 %v3728, %v3770
        %v3772 = vpop.f32.mrf.mxu0
        %v3773 = vadd.f32 %v3730, %v3772
        %v3774 = vpop.f32.mrf.mxu0
        %v3775 = vadd.f32 %v3732, %v3774
        %3776 = vdwg.mxu0
        %3777 = vmatprep.subr.bf16.mxu0 %v1993
        %3778 = vmatpush1.bf16.msra.mxu0 %v1992
        %3779 = vmatprep.subr.bf16.mxu0 %v1985
        %3780 = vmatpush1.bf16.msra.mxu0 %v1984
        %3781 = vmatprep.subr.bf16.mxu0 %v1977
        %3782 = vmatpush1.bf16.msra.mxu0 %v1976
        %3783 = vmatprep.subr.bf16.mxu0 %v1969
        %3784 = vmatpush1.bf16.msra.mxu0 %v1968
        %3785 = vmatprep.subr.bf16.mxu0 %v1961
        %3786 = vmatpush1.bf16.msra.mxu0 %v1960
        %3787 = vmatprep.subr.bf16.mxu0 %v1953
        %3788 = vmatpush1.bf16.msra.mxu0 %v1952
        %3789 = vmatprep.subr.bf16.mxu0 %v1945
        %3790 = vmatpush1.bf16.msra.mxu0 %v1944
        %3791 = vmatprep.subr.bf16.mxu0 %v1937
        %3792 = vmatpush1.bf16.msra.mxu0 %v1936
        %3793 = vmatprep.subr.bf16.mxu0 %v2057
        %3794 = vmatpush2.bf16.msra.mxu0 %v2056
        %3795 = vmatprep.subr.bf16.mxu0 %v2049
        %3796 = vmatpush2.bf16.msra.mxu0 %v2048
        %3797 = vmatprep.subr.bf16.mxu0 %v2041
        %3798 = vmatpush2.bf16.msra.mxu0 %v2040
        %3799 = vmatprep.subr.bf16.mxu0 %v2033
        %3800 = vmatpush2.bf16.msra.mxu0 %v2032
        %3801 = vmatprep.subr.bf16.mxu0 %v2025
        %3802 = vmatpush2.bf16.msra.mxu0 %v2024
        %3803 = vmatprep.subr.bf16.mxu0 %v2017
        %3804 = vmatpush2.bf16.msra.mxu0 %v2016
        %3805 = vmatprep.subr.bf16.mxu0 %v2009
        %3806 = vmatpush2.bf16.msra.mxu0 %v2008
        %3807 = vmatprep.subr.bf16.mxu0 %v2001
        %3808 = vmatpush2.bf16.msra.mxu0 %v2000
        %3809 = vmatprep.mubr.bf16.mxu0 %v2921
        %3810 = vmatmul.mubr.bf16.gmra.mxu0 %v2920
        %v3811 = vpop.f32.mrf.mxu0
        %v3812 = vadd.f32 %v3769, %v3811
        %v3813 = vpop.f32.mrf.mxu0
        %v3814 = vadd.f32 %v3771, %v3813
        %v3815 = vpop.f32.mrf.mxu0
        %v3816 = vadd.f32 %v3773, %v3815
        %v3817 = vpop.f32.mrf.mxu0
        %v3818 = vadd.f32 %v3775, %v3817
        %3819 = vdwg.mxu0
        %3820 = vmatprep.subr.bf16.mxu0 %v2121
        %3821 = vmatpush1.bf16.msra.mxu0 %v2120
        %3822 = vmatprep.subr.bf16.mxu0 %v2113
        %3823 = vmatpush1.bf16.msra.mxu0 %v2112
        %3824 = vmatprep.subr.bf16.mxu0 %v2105
        %3825 = vmatpush1.bf16.msra.mxu0 %v2104
        %3826 = vmatprep.subr.bf16.mxu0 %v2097
        %3827 = vmatpush1.bf16.msra.mxu0 %v2096
        %3828 = vmatprep.subr.bf16.mxu0 %v2089
        %3829 = vmatpush1.bf16.msra.mxu0 %v2088
        %3830 = vmatprep.subr.bf16.mxu0 %v2081
        %3831 = vmatpush1.bf16.msra.mxu0 %v2080
        %3832 = vmatprep.subr.bf16.mxu0 %v2073
        %3833 = vmatpush1.bf16.msra.mxu0 %v2072
        %3834 = vmatprep.subr.bf16.mxu0 %v2065
        %3835 = vmatpush1.bf16.msra.mxu0 %v2064
        %3836 = vmatprep.subr.bf16.mxu0 %v2185
        %3837 = vmatpush2.bf16.msra.mxu0 %v2184
        %3838 = vmatprep.subr.bf16.mxu0 %v2177
        %3839 = vmatpush2.bf16.msra.mxu0 %v2176
        %3840 = vmatprep.subr.bf16.mxu0 %v2169
        %3841 = vmatpush2.bf16.msra.mxu0 %v2168
        %3842 = vmatprep.subr.bf16.mxu0 %v2161
        %3843 = vmatpush2.bf16.msra.mxu0 %v2160
        %3844 = vmatprep.subr.bf16.mxu0 %v2153
        %3845 = vmatpush2.bf16.msra.mxu0 %v2152
        %3846 = vmatprep.subr.bf16.mxu0 %v2145
        %3847 = vmatpush2.bf16.msra.mxu0 %v2144
        %3848 = vmatprep.subr.bf16.mxu0 %v2137
        %3849 = vmatpush2.bf16.msra.mxu0 %v2136
        %3850 = vmatprep.subr.bf16.mxu0 %v2129
        %3851 = vmatpush2.bf16.msra.mxu0 %v2128
        %3852 = vmatprep.mubr.bf16.mxu0 %v2923
        %3853 = vmatmul.mubr.bf16.gmra.mxu0 %v2922
        %v3854 = vpop.f32.mrf.mxu0
        %v3855 = vadd.f32 %v3812, %v3854
        %v3856 = vpop.f32.mrf.mxu0
        %v3857 = vadd.f32 %v3814, %v3856
        %v3858 = vpop.f32.mrf.mxu0
        %v3859 = vadd.f32 %v3816, %v3858
        %v3860 = vpop.f32.mrf.mxu0
        %v3861 = vadd.f32 %v3818, %v3860
        %3862 = vdwg.mxu0
        %3863 = vmatprep.subr.bf16.mxu0 %v2249
        %3864 = vmatpush1.bf16.msra.mxu0 %v2248
        %3865 = vmatprep.subr.bf16.mxu0 %v2241
        %3866 = vmatpush1.bf16.msra.mxu0 %v2240
        %3867 = vmatprep.subr.bf16.mxu0 %v2233
        %3868 = vmatpush1.bf16.msra.mxu0 %v2232
        %3869 = vmatprep.subr.bf16.mxu0 %v2225
        %3870 = vmatpush1.bf16.msra.mxu0 %v2224
        %3871 = vmatprep.subr.bf16.mxu0 %v2217
        %3872 = vmatpush1.bf16.msra.mxu0 %v2216
        %3873 = vmatprep.subr.bf16.mxu0 %v2209
        %3874 = vmatpush1.bf16.msra.mxu0 %v2208
        %3875 = vmatprep.subr.bf16.mxu0 %v2201
        %3876 = vmatpush1.bf16.msra.mxu0 %v2200
        %3877 = vmatprep.subr.bf16.mxu0 %v2193
        %3878 = vmatpush1.bf16.msra.mxu0 %v2192
        %3879 = vmatprep.subr.bf16.mxu0 %v2313
        %3880 = vmatpush2.bf16.msra.mxu0 %v2312
        %3881 = vmatprep.subr.bf16.mxu0 %v2305
        %3882 = vmatpush2.bf16.msra.mxu0 %v2304
        %3883 = vmatprep.subr.bf16.mxu0 %v2297
        %3884 = vmatpush2.bf16.msra.mxu0 %v2296
        %3885 = vmatprep.subr.bf16.mxu0 %v2289
        %3886 = vmatpush2.bf16.msra.mxu0 %v2288
        %3887 = vmatprep.subr.bf16.mxu0 %v2281
        %3888 = vmatpush2.bf16.msra.mxu0 %v2280
        %3889 = vmatprep.subr.bf16.mxu0 %v2273
        %3890 = vmatpush2.bf16.msra.mxu0 %v2272
        %3891 = vmatprep.subr.bf16.mxu0 %v2265
        %3892 = vmatpush2.bf16.msra.mxu0 %v2264
        %3893 = vmatprep.subr.bf16.mxu0 %v2257
        %3894 = vmatpush2.bf16.msra.mxu0 %v2256
        %3895 = vmatprep.mubr.bf16.mxu0 %v2925
        %3896 = vmatmul.mubr.bf16.gmra.mxu0 %v2924
        %v3897 = vpop.f32.mrf.mxu0
        %v3898 = vadd.f32 %v3855, %v3897
        %v3899 = vpop.f32.mrf.mxu0
        %v3900 = vadd.f32 %v3857, %v3899
        %v3901 = vpop.f32.mrf.mxu0
        %v3902 = vadd.f32 %v3859, %v3901
        %v3903 = vpop.f32.mrf.mxu0
        %v3904 = vadd.f32 %v3861, %v3903
        %3905 = vdwg.mxu0
        %3906 = vmatprep.subr.bf16.mxu0 %v2377
        %3907 = vmatpush1.bf16.msra.mxu0 %v2376
        %3908 = vmatprep.subr.bf16.mxu0 %v2369
        %3909 = vmatpush1.bf16.msra.mxu0 %v2368
        %3910 = vmatprep.subr.bf16.mxu0 %v2361
        %3911 = vmatpush1.bf16.msra.mxu0 %v2360
        %3912 = vmatprep.subr.bf16.mxu0 %v2353
        %3913 = vmatpush1.bf16.msra.mxu0 %v2352
        %3914 = vmatprep.subr.bf16.mxu0 %v2345
        %3915 = vmatpush1.bf16.msra.mxu0 %v2344
        %3916 = vmatprep.subr.bf16.mxu0 %v2337
        %3917 = vmatpush1.bf16.msra.mxu0 %v2336
        %3918 = vmatprep.subr.bf16.mxu0 %v2329
        %3919 = vmatpush1.bf16.msra.mxu0 %v2328
        %3920 = vmatprep.subr.bf16.mxu0 %v2321
        %3921 = vmatpush1.bf16.msra.mxu0 %v2320
        %3922 = vmatprep.subr.bf16.mxu0 %v2441
        %3923 = vmatpush2.bf16.msra.mxu0 %v2440
        %3924 = vmatprep.subr.bf16.mxu0 %v2433
        %3925 = vmatpush2.bf16.msra.mxu0 %v2432
        %3926 = vmatprep.subr.bf16.mxu0 %v2425
        %3927 = vmatpush2.bf16.msra.mxu0 %v2424
        %3928 = vmatprep.subr.bf16.mxu0 %v2417
        %3929 = vmatpush2.bf16.msra.mxu0 %v2416
        %3930 = vmatprep.subr.bf16.mxu0 %v2409
        %3931 = vmatpush2.bf16.msra.mxu0 %v2408
        %3932 = vmatprep.subr.bf16.mxu0 %v2401
        %3933 = vmatpush2.bf16.msra.mxu0 %v2400
        %3934 = vmatprep.subr.bf16.mxu0 %v2393
        %3935 = vmatpush2.bf16.msra.mxu0 %v2392
        %3936 = vmatprep.subr.bf16.mxu0 %v2385
        %3937 = vmatpush2.bf16.msra.mxu0 %v2384
        %3938 = vmatprep.mubr.bf16.mxu0 %v2927
        %3939 = vmatmul.mubr.bf16.gmra.mxu0 %v2926
        %v3940 = vpop.f32.mrf.mxu0
        %v3941 = vadd.f32 %v3898, %v3940
        %v3942 = vpop.f32.mrf.mxu0
        %v3943 = vadd.f32 %v3900, %v3942
        %v3944 = vpop.f32.mrf.mxu0
        %v3945 = vadd.f32 %v3902, %v3944
        %v3946 = vpop.f32.mrf.mxu0
        %v3947 = vadd.f32 %v3904, %v3946
        %3948 = vdwg.mxu0
        %3949 = vmatprep.subr.bf16.mxu0 %v2505
        %3950 = vmatpush1.bf16.msra.mxu0 %v2504
        %3951 = vmatprep.subr.bf16.mxu0 %v2497
        %3952 = vmatpush1.bf16.msra.mxu0 %v2496
        %3953 = vmatprep.subr.bf16.mxu0 %v2489
        %3954 = vmatpush1.bf16.msra.mxu0 %v2488
        %3955 = vmatprep.subr.bf16.mxu0 %v2481
        %3956 = vmatpush1.bf16.msra.mxu0 %v2480
        %3957 = vmatprep.subr.bf16.mxu0 %v2473
        %3958 = vmatpush1.bf16.msra.mxu0 %v2472
        %3959 = vmatprep.subr.bf16.mxu0 %v2465
        %3960 = vmatpush1.bf16.msra.mxu0 %v2464
        %3961 = vmatprep.subr.bf16.mxu0 %v2457
        %3962 = vmatpush1.bf16.msra.mxu0 %v2456
        %3963 = vmatprep.subr.bf16.mxu0 %v2449
        %3964 = vmatpush1.bf16.msra.mxu0 %v2448
        %3965 = vmatprep.subr.bf16.mxu0 %v2569
        %3966 = vmatpush2.bf16.msra.mxu0 %v2568
        %3967 = vmatprep.subr.bf16.mxu0 %v2561
        %3968 = vmatpush2.bf16.msra.mxu0 %v2560
        %3969 = vmatprep.subr.bf16.mxu0 %v2553
        %3970 = vmatpush2.bf16.msra.mxu0 %v2552
        %3971 = vmatprep.subr.bf16.mxu0 %v2545
        %3972 = vmatpush2.bf16.msra.mxu0 %v2544
        %3973 = vmatprep.subr.bf16.mxu0 %v2537
        %3974 = vmatpush2.bf16.msra.mxu0 %v2536
        %3975 = vmatprep.subr.bf16.mxu0 %v2529
        %3976 = vmatpush2.bf16.msra.mxu0 %v2528
        %3977 = vmatprep.subr.bf16.mxu0 %v2521
        %3978 = vmatpush2.bf16.msra.mxu0 %v2520
        %3979 = vmatprep.subr.bf16.mxu0 %v2513
        %3980 = vmatpush2.bf16.msra.mxu0 %v2512
        %3981 = vmatprep.mubr.bf16.mxu0 %v2929
        %3982 = vmatmul.mubr.bf16.gmra.mxu0 %v2928
        %v3983 = vpop.f32.mrf.mxu0
        %v3984 = vadd.f32 %v3941, %v3983
        %v3985 = vpop.f32.mrf.mxu0
        %v3986 = vadd.f32 %v3943, %v3985
        %v3987 = vpop.f32.mrf.mxu0
        %v3988 = vadd.f32 %v3945, %v3987
        %v3989 = vpop.f32.mrf.mxu0
        %v3990 = vadd.f32 %v3947, %v3989
        %3991 = vdwg.mxu0
        %3992 = vmatprep.subr.bf16.mxu0 %v2633
        %3993 = vmatpush1.bf16.msra.mxu0 %v2632
        %3994 = vmatprep.subr.bf16.mxu0 %v2625
        %3995 = vmatpush1.bf16.msra.mxu0 %v2624
        %3996 = vmatprep.subr.bf16.mxu0 %v2617
        %3997 = vmatpush1.bf16.msra.mxu0 %v2616
        %3998 = vmatprep.subr.bf16.mxu0 %v2609
        %3999 = vmatpush1.bf16.msra.mxu0 %v2608
        %4000 = vmatprep.subr.bf16.mxu0 %v2601
        %4001 = vmatpush1.bf16.msra.mxu0 %v2600
        %4002 = vmatprep.subr.bf16.mxu0 %v2593
        %4003 = vmatpush1.bf16.msra.mxu0 %v2592
        %4004 = vmatprep.subr.bf16.mxu0 %v2585
        %4005 = vmatpush1.bf16.msra.mxu0 %v2584
        %4006 = vmatprep.subr.bf16.mxu0 %v2577
        %4007 = vmatpush1.bf16.msra.mxu0 %v2576
        %4008 = vmatprep.subr.bf16.mxu0 %v2697
        %4009 = vmatpush2.bf16.msra.mxu0 %v2696
        %4010 = vmatprep.subr.bf16.mxu0 %v2689
        %4011 = vmatpush2.bf16.msra.mxu0 %v2688
        %4012 = vmatprep.subr.bf16.mxu0 %v2681
        %4013 = vmatpush2.bf16.msra.mxu0 %v2680
        %4014 = vmatprep.subr.bf16.mxu0 %v2673
        %4015 = vmatpush2.bf16.msra.mxu0 %v2672
        %4016 = vmatprep.subr.bf16.mxu0 %v2665
        %4017 = vmatpush2.bf16.msra.mxu0 %v2664
        %4018 = vmatprep.subr.bf16.mxu0 %v2657
        %4019 = vmatpush2.bf16.msra.mxu0 %v2656
        %4020 = vmatprep.subr.bf16.mxu0 %v2649
        %4021 = vmatpush2.bf16.msra.mxu0 %v2648
        %4022 = vmatprep.subr.bf16.mxu0 %v2641
        %4023 = vmatpush2.bf16.msra.mxu0 %v2640
        %4024 = vmatprep.mubr.bf16.mxu0 %v2931
        %4025 = vmatmul.mubr.bf16.gmra.mxu0 %v2930
        %v4026 = vpop.f32.mrf.mxu0
        %v4027 = vadd.f32 %v3984, %v4026
        %v4028 = vpop.f32.mrf.mxu0
        %v4029 = vadd.f32 %v3986, %v4028
        %v4030 = vpop.f32.mrf.mxu0
        %v4031 = vadd.f32 %v3988, %v4030
        %v4032 = vpop.f32.mrf.mxu0
        %v4033 = vadd.f32 %v3990, %v4032
        %4034 = vdwg.mxu0
        %4035 = vmatprep.subr.bf16.mxu0 %v2761
        %4036 = vmatpush1.bf16.msra.mxu0 %v2760
        %4037 = vmatprep.subr.bf16.mxu0 %v2753
        %4038 = vmatpush1.bf16.msra.mxu0 %v2752
        %4039 = vmatprep.subr.bf16.mxu0 %v2745
        %4040 = vmatpush1.bf16.msra.mxu0 %v2744
        %4041 = vmatprep.subr.bf16.mxu0 %v2737
        %4042 = vmatpush1.bf16.msra.mxu0 %v2736
        %4043 = vmatprep.subr.bf16.mxu0 %v2729
        %4044 = vmatpush1.bf16.msra.mxu0 %v2728
        %4045 = vmatprep.subr.bf16.mxu0 %v2721
        %4046 = vmatpush1.bf16.msra.mxu0 %v2720
        %4047 = vmatprep.subr.bf16.mxu0 %v2713
        %4048 = vmatpush1.bf16.msra.mxu0 %v2712
        %4049 = vmatprep.subr.bf16.mxu0 %v2705
        %4050 = vmatpush1.bf16.msra.mxu0 %v2704
        %4051 = vmatprep.subr.bf16.mxu0 %v2825
        %4052 = vmatpush2.bf16.msra.mxu0 %v2824
        %4053 = vmatprep.subr.bf16.mxu0 %v2817
        %4054 = vmatpush2.bf16.msra.mxu0 %v2816
        %4055 = vmatprep.subr.bf16.mxu0 %v2809
        %4056 = vmatpush2.bf16.msra.mxu0 %v2808
        %4057 = vmatprep.subr.bf16.mxu0 %v2801
        %4058 = vmatpush2.bf16.msra.mxu0 %v2800
        %4059 = vmatprep.subr.bf16.mxu0 %v2793
        %4060 = vmatpush2.bf16.msra.mxu0 %v2792
        %4061 = vmatprep.subr.bf16.mxu0 %v2785
        %4062 = vmatpush2.bf16.msra.mxu0 %v2784
        %4063 = vmatprep.subr.bf16.mxu0 %v2777
        %4064 = vmatpush2.bf16.msra.mxu0 %v2776
        %4065 = vmatprep.subr.bf16.mxu0 %v2769
        %4066 = vmatpush2.bf16.msra.mxu0 %v2768
        %4067 = vmatprep.mubr.bf16.mxu0 %v2933
        %4068 = vmatmul.mubr.bf16.gmra.mxu0 %v2932
        %v4069 = vpop.f32.mrf.mxu0
        %v4070 = vadd.f32 %v4027, %v4069
        %v4071 = vpop.f32.mrf.mxu0
        %v4072 = vadd.f32 %v4029, %v4071
        %v4073 = vpop.f32.mrf.mxu0
        %v4074 = vadd.f32 %v4031, %v4073
        %v4075 = vpop.f32.mrf.mxu0
        %v4076 = vadd.f32 %v4033, %v4075
        %4077 = vdwg.mxu0
        %4078 = vmatprep.subr.bf16.mxu0 %v1227
        %4079 = vmatpush1.bf16.msra.mxu0 %v1226
        %4080 = vmatprep.subr.bf16.mxu0 %v1219
        %4081 = vmatpush1.bf16.msra.mxu0 %v1218
        %4082 = vmatprep.subr.bf16.mxu0 %v1211
        %4083 = vmatpush1.bf16.msra.mxu0 %v1210
        %4084 = vmatprep.subr.bf16.mxu0 %v1203
        %4085 = vmatpush1.bf16.msra.mxu0 %v1202
        %4086 = vmatprep.subr.bf16.mxu0 %v1195
        %4087 = vmatpush1.bf16.msra.mxu0 %v1194
        %4088 = vmatprep.subr.bf16.mxu0 %v1187
        %4089 = vmatpush1.bf16.msra.mxu0 %v1186
        %4090 = vmatprep.subr.bf16.mxu0 %v1179
        %4091 = vmatpush1.bf16.msra.mxu0 %v1178
        %4092 = vmatprep.subr.bf16.mxu0 %v1171
        %4093 = vmatpush1.bf16.msra.mxu0 %v1170
        %4094 = vmatprep.subr.bf16.mxu0 %v1291
        %4095 = vmatpush2.bf16.msra.mxu0 %v1290
        %4096 = vmatprep.subr.bf16.mxu0 %v1283
        %4097 = vmatpush2.bf16.msra.mxu0 %v1282
        %4098 = vmatprep.subr.bf16.mxu0 %v1275
        %4099 = vmatpush2.bf16.msra.mxu0 %v1274
        %4100 = vmatprep.subr.bf16.mxu0 %v1267
        %4101 = vmatpush2.bf16.msra.mxu0 %v1266
        %4102 = vmatprep.subr.bf16.mxu0 %v1259
        %4103 = vmatpush2.bf16.msra.mxu0 %v1258
        %4104 = vmatprep.subr.bf16.mxu0 %v1251
        %4105 = vmatpush2.bf16.msra.mxu0 %v1250
        %4106 = vmatprep.subr.bf16.mxu0 %v1243
        %4107 = vmatpush2.bf16.msra.mxu0 %v1242
        %4108 = vmatprep.subr.bf16.mxu0 %v1235
        %4109 = vmatpush2.bf16.msra.mxu0 %v1234
        %4110 = vmatprep.mubr.bf16.mxu0 %v2909
        %4111 = vmatmul.mubr.bf16.gmra.mxu0 %v2908
        %v4112 = vpop.f32.mrf.mxu0
        %v4113 = vadd.f32 0.0, %v4112
        %v4114 = vpop.f32.mrf.mxu0
        %v4115 = vadd.f32 0.0, %v4114
        %v4116 = vpop.f32.mrf.mxu0
        %v4117 = vadd.f32 0.0, %v4116
        %v4118 = vpop.f32.mrf.mxu0
        %v4119 = vadd.f32 0.0, %v4118
        %4120 = vdwg.mxu0
        %4121 = vmatprep.subr.bf16.mxu0 %v1355
        %4122 = vmatpush1.bf16.msra.mxu0 %v1354
        %4123 = vmatprep.subr.bf16.mxu0 %v1347
        %4124 = vmatpush1.bf16.msra.mxu0 %v1346
        %4125 = vmatprep.subr.bf16.mxu0 %v1339
        %4126 = vmatpush1.bf16.msra.mxu0 %v1338
        %4127 = vmatprep.subr.bf16.mxu0 %v1331
        %4128 = vmatpush1.bf16.msra.mxu0 %v1330
        %4129 = vmatprep.subr.bf16.mxu0 %v1323
        %4130 = vmatpush1.bf16.msra.mxu0 %v1322
        %4131 = vmatprep.subr.bf16.mxu0 %v1315
        %4132 = vmatpush1.bf16.msra.mxu0 %v1314
        %4133 = vmatprep.subr.bf16.mxu0 %v1307
        %4134 = vmatpush1.bf16.msra.mxu0 %v1306
        %4135 = vmatprep.subr.bf16.mxu0 %v1299
        %4136 = vmatpush1.bf16.msra.mxu0 %v1298
        %4137 = vmatprep.subr.bf16.mxu0 %v1419
        %4138 = vmatpush2.bf16.msra.mxu0 %v1418
        %4139 = vmatprep.subr.bf16.mxu0 %v1411
        %4140 = vmatpush2.bf16.msra.mxu0 %v1410
        %4141 = vmatprep.subr.bf16.mxu0 %v1403
        %4142 = vmatpush2.bf16.msra.mxu0 %v1402
        %4143 = vmatprep.subr.bf16.mxu0 %v1395
        %4144 = vmatpush2.bf16.msra.mxu0 %v1394
        %4145 = vmatprep.subr.bf16.mxu0 %v1387
        %4146 = vmatpush2.bf16.msra.mxu0 %v1386
        %4147 = vmatprep.subr.bf16.mxu0 %v1379
        %4148 = vmatpush2.bf16.msra.mxu0 %v1378
        %4149 = vmatprep.subr.bf16.mxu0 %v1371
        %4150 = vmatpush2.bf16.msra.mxu0 %v1370
        %4151 = vmatprep.subr.bf16.mxu0 %v1363
        %4152 = vmatpush2.bf16.msra.mxu0 %v1362
        %4153 = vmatprep.mubr.bf16.mxu0 %v2911
        %4154 = vmatmul.mubr.bf16.gmra.mxu0 %v2910
        %v4155 = vpop.f32.mrf.mxu0
        %v4156 = vadd.f32 %v4113, %v4155
        %v4157 = vpop.f32.mrf.mxu0
        %v4158 = vadd.f32 %v4115, %v4157
        %v4159 = vpop.f32.mrf.mxu0
        %v4160 = vadd.f32 %v4117, %v4159
        %v4161 = vpop.f32.mrf.mxu0
        %v4162 = vadd.f32 %v4119, %v4161
        %4163 = vdwg.mxu0
        %4164 = vmatprep.subr.bf16.mxu0 %v1483
        %4165 = vmatpush1.bf16.msra.mxu0 %v1482
        %4166 = vmatprep.subr.bf16.mxu0 %v1475
        %4167 = vmatpush1.bf16.msra.mxu0 %v1474
        %4168 = vmatprep.subr.bf16.mxu0 %v1467
        %4169 = vmatpush1.bf16.msra.mxu0 %v1466
        %4170 = vmatprep.subr.bf16.mxu0 %v1459
        %4171 = vmatpush1.bf16.msra.mxu0 %v1458
        %4172 = vmatprep.subr.bf16.mxu0 %v1451
        %4173 = vmatpush1.bf16.msra.mxu0 %v1450
        %4174 = vmatprep.subr.bf16.mxu0 %v1443
        %4175 = vmatpush1.bf16.msra.mxu0 %v1442
        %4176 = vmatprep.subr.bf16.mxu0 %v1435
        %4177 = vmatpush1.bf16.msra.mxu0 %v1434
        %4178 = vmatprep.subr.bf16.mxu0 %v1427
        %4179 = vmatpush1.bf16.msra.mxu0 %v1426
        %4180 = vmatprep.subr.bf16.mxu0 %v1547
        %4181 = vmatpush2.bf16.msra.mxu0 %v1546
        %4182 = vmatprep.subr.bf16.mxu0 %v1539
        %4183 = vmatpush2.bf16.msra.mxu0 %v1538
        %4184 = vmatprep.subr.bf16.mxu0 %v1531
        %4185 = vmatpush2.bf16.msra.mxu0 %v1530
        %4186 = vmatprep.subr.bf16.mxu0 %v1523
        %4187 = vmatpush2.bf16.msra.mxu0 %v1522
        %4188 = vmatprep.subr.bf16.mxu0 %v1515
        %4189 = vmatpush2.bf16.msra.mxu0 %v1514
        %4190 = vmatprep.subr.bf16.mxu0 %v1507
        %4191 = vmatpush2.bf16.msra.mxu0 %v1506
        %4192 = vmatprep.subr.bf16.mxu0 %v1499
        %4193 = vmatpush2.bf16.msra.mxu0 %v1498
        %4194 = vmatprep.subr.bf16.mxu0 %v1491
        %4195 = vmatpush2.bf16.msra.mxu0 %v1490
        %4196 = vmatprep.mubr.bf16.mxu0 %v2913
        %4197 = vmatmul.mubr.bf16.gmra.mxu0 %v2912
        %v4198 = vpop.f32.mrf.mxu0
        %v4199 = vadd.f32 %v4156, %v4198
        %v4200 = vpop.f32.mrf.mxu0
        %v4201 = vadd.f32 %v4158, %v4200
        %v4202 = vpop.f32.mrf.mxu0
        %v4203 = vadd.f32 %v4160, %v4202
        %v4204 = vpop.f32.mrf.mxu0
        %v4205 = vadd.f32 %v4162, %v4204
        %4206 = vdwg.mxu0
        %4207 = vmatprep.subr.bf16.mxu0 %v1611
        %4208 = vmatpush1.bf16.msra.mxu0 %v1610
        %4209 = vmatprep.subr.bf16.mxu0 %v1603
        %4210 = vmatpush1.bf16.msra.mxu0 %v1602
        %4211 = vmatprep.subr.bf16.mxu0 %v1595
        %4212 = vmatpush1.bf16.msra.mxu0 %v1594
        %4213 = vmatprep.subr.bf16.mxu0 %v1587
        %4214 = vmatpush1.bf16.msra.mxu0 %v1586
        %4215 = vmatprep.subr.bf16.mxu0 %v1579
        %4216 = vmatpush1.bf16.msra.mxu0 %v1578
        %4217 = vmatprep.subr.bf16.mxu0 %v1571
        %4218 = vmatpush1.bf16.msra.mxu0 %v1570
        %4219 = vmatprep.subr.bf16.mxu0 %v1563
        %4220 = vmatpush1.bf16.msra.mxu0 %v1562
        %4221 = vmatprep.subr.bf16.mxu0 %v1555
        %4222 = vmatpush1.bf16.msra.mxu0 %v1554
        %4223 = vmatprep.subr.bf16.mxu0 %v1675
        %4224 = vmatpush2.bf16.msra.mxu0 %v1674
        %4225 = vmatprep.subr.bf16.mxu0 %v1667
        %4226 = vmatpush2.bf16.msra.mxu0 %v1666
        %4227 = vmatprep.subr.bf16.mxu0 %v1659
        %4228 = vmatpush2.bf16.msra.mxu0 %v1658
        %4229 = vmatprep.subr.bf16.mxu0 %v1651
        %4230 = vmatpush2.bf16.msra.mxu0 %v1650
        %4231 = vmatprep.subr.bf16.mxu0 %v1643
        %4232 = vmatpush2.bf16.msra.mxu0 %v1642
        %4233 = vmatprep.subr.bf16.mxu0 %v1635
        %4234 = vmatpush2.bf16.msra.mxu0 %v1634
        %4235 = vmatprep.subr.bf16.mxu0 %v1627
        %4236 = vmatpush2.bf16.msra.mxu0 %v1626
        %4237 = vmatprep.subr.bf16.mxu0 %v1619
        %4238 = vmatpush2.bf16.msra.mxu0 %v1618
        %4239 = vmatprep.mubr.bf16.mxu0 %v2915
        %4240 = vmatmul.mubr.bf16.gmra.mxu0 %v2914
        %v4241 = vpop.f32.mrf.mxu0
        %v4242 = vadd.f32 %v4199, %v4241
        %v4243 = vpop.f32.mrf.mxu0
        %v4244 = vadd.f32 %v4201, %v4243
        %v4245 = vpop.f32.mrf.mxu0
        %v4246 = vadd.f32 %v4203, %v4245
        %v4247 = vpop.f32.mrf.mxu0
        %v4248 = vadd.f32 %v4205, %v4247
        %4249 = vdwg.mxu0
        %4250 = vmatprep.subr.bf16.mxu0 %v1739
        %4251 = vmatpush1.bf16.msra.mxu0 %v1738
        %4252 = vmatprep.subr.bf16.mxu0 %v1731
        %4253 = vmatpush1.bf16.msra.mxu0 %v1730
        %4254 = vmatprep.subr.bf16.mxu0 %v1723
        %4255 = vmatpush1.bf16.msra.mxu0 %v1722
        %4256 = vmatprep.subr.bf16.mxu0 %v1715
        %4257 = vmatpush1.bf16.msra.mxu0 %v1714
        %4258 = vmatprep.subr.bf16.mxu0 %v1707
        %4259 = vmatpush1.bf16.msra.mxu0 %v1706
        %4260 = vmatprep.subr.bf16.mxu0 %v1699
        %4261 = vmatpush1.bf16.msra.mxu0 %v1698
        %4262 = vmatprep.subr.bf16.mxu0 %v1691
        %4263 = vmatpush1.bf16.msra.mxu0 %v1690
        %4264 = vmatprep.subr.bf16.mxu0 %v1683
        %4265 = vmatpush1.bf16.msra.mxu0 %v1682
        %4266 = vmatprep.subr.bf16.mxu0 %v1803
        %4267 = vmatpush2.bf16.msra.mxu0 %v1802
        %4268 = vmatprep.subr.bf16.mxu0 %v1795
        %4269 = vmatpush2.bf16.msra.mxu0 %v1794
        %4270 = vmatprep.subr.bf16.mxu0 %v1787
        %4271 = vmatpush2.bf16.msra.mxu0 %v1786
        %4272 = vmatprep.subr.bf16.mxu0 %v1779
        %4273 = vmatpush2.bf16.msra.mxu0 %v1778
        %4274 = vmatprep.subr.bf16.mxu0 %v1771
        %4275 = vmatpush2.bf16.msra.mxu0 %v1770
        %4276 = vmatprep.subr.bf16.mxu0 %v1763
        %4277 = vmatpush2.bf16.msra.mxu0 %v1762
        %4278 = vmatprep.subr.bf16.mxu0 %v1755
        %4279 = vmatpush2.bf16.msra.mxu0 %v1754
        %4280 = vmatprep.subr.bf16.mxu0 %v1747
        %4281 = vmatpush2.bf16.msra.mxu0 %v1746
        %4282 = vmatprep.mubr.bf16.mxu0 %v2917
        %4283 = vmatmul.mubr.bf16.gmra.mxu0 %v2916
        %v4284 = vpop.f32.mrf.mxu0
        %v4285 = vadd.f32 %v4242, %v4284
        %v4286 = vpop.f32.mrf.mxu0
        %v4287 = vadd.f32 %v4244, %v4286
        %v4288 = vpop.f32.mrf.mxu0
        %v4289 = vadd.f32 %v4246, %v4288
        %v4290 = vpop.f32.mrf.mxu0
        %v4291 = vadd.f32 %v4248, %v4290
        %4292 = vdwg.mxu0
        %4293 = vmatprep.subr.bf16.mxu0 %v1867
        %4294 = vmatpush1.bf16.msra.mxu0 %v1866
        %4295 = vmatprep.subr.bf16.mxu0 %v1859
        %4296 = vmatpush1.bf16.msra.mxu0 %v1858
        %4297 = vmatprep.subr.bf16.mxu0 %v1851
        %4298 = vmatpush1.bf16.msra.mxu0 %v1850
        %4299 = vmatprep.subr.bf16.mxu0 %v1843
        %4300 = vmatpush1.bf16.msra.mxu0 %v1842
        %4301 = vmatprep.subr.bf16.mxu0 %v1835
        %4302 = vmatpush1.bf16.msra.mxu0 %v1834
        %4303 = vmatprep.subr.bf16.mxu0 %v1827
        %4304 = vmatpush1.bf16.msra.mxu0 %v1826
        %4305 = vmatprep.subr.bf16.mxu0 %v1819
        %4306 = vmatpush1.bf16.msra.mxu0 %v1818
        %4307 = vmatprep.subr.bf16.mxu0 %v1811
        %4308 = vmatpush1.bf16.msra.mxu0 %v1810
        %4309 = vmatprep.subr.bf16.mxu0 %v1931
        %4310 = vmatpush2.bf16.msra.mxu0 %v1930
        %4311 = vmatprep.subr.bf16.mxu0 %v1923
        %4312 = vmatpush2.bf16.msra.mxu0 %v1922
        %4313 = vmatprep.subr.bf16.mxu0 %v1915
        %4314 = vmatpush2.bf16.msra.mxu0 %v1914
        %4315 = vmatprep.subr.bf16.mxu0 %v1907
        %4316 = vmatpush2.bf16.msra.mxu0 %v1906
        %4317 = vmatprep.subr.bf16.mxu0 %v1899
        %4318 = vmatpush2.bf16.msra.mxu0 %v1898
        %4319 = vmatprep.subr.bf16.mxu0 %v1891
        %4320 = vmatpush2.bf16.msra.mxu0 %v1890
        %4321 = vmatprep.subr.bf16.mxu0 %v1883
        %4322 = vmatpush2.bf16.msra.mxu0 %v1882
        %4323 = vmatprep.subr.bf16.mxu0 %v1875
        %4324 = vmatpush2.bf16.msra.mxu0 %v1874
        %4325 = vmatprep.mubr.bf16.mxu0 %v2919
        %4326 = vmatmul.mubr.bf16.gmra.mxu0 %v2918
        %v4327 = vpop.f32.mrf.mxu0
        %v4328 = vadd.f32 %v4285, %v4327
        %v4329 = vpop.f32.mrf.mxu0
        %v4330 = vadd.f32 %v4287, %v4329
        %v4331 = vpop.f32.mrf.mxu0
        %v4332 = vadd.f32 %v4289, %v4331
        %v4333 = vpop.f32.mrf.mxu0
        %v4334 = vadd.f32 %v4291, %v4333
        %4335 = vdwg.mxu0
        %4336 = vmatprep.subr.bf16.mxu0 %v1995
        %4337 = vmatpush1.bf16.msra.mxu0 %v1994
        %4338 = vmatprep.subr.bf16.mxu0 %v1987
        %4339 = vmatpush1.bf16.msra.mxu0 %v1986
        %4340 = vmatprep.subr.bf16.mxu0 %v1979
        %4341 = vmatpush1.bf16.msra.mxu0 %v1978
        %4342 = vmatprep.subr.bf16.mxu0 %v1971
        %4343 = vmatpush1.bf16.msra.mxu0 %v1970
        %4344 = vmatprep.subr.bf16.mxu0 %v1963
        %4345 = vmatpush1.bf16.msra.mxu0 %v1962
        %4346 = vmatprep.subr.bf16.mxu0 %v1955
        %4347 = vmatpush1.bf16.msra.mxu0 %v1954
        %4348 = vmatprep.subr.bf16.mxu0 %v1947
        %4349 = vmatpush1.bf16.msra.mxu0 %v1946
        %4350 = vmatprep.subr.bf16.mxu0 %v1939
        %4351 = vmatpush1.bf16.msra.mxu0 %v1938
        %4352 = vmatprep.subr.bf16.mxu0 %v2059
        %4353 = vmatpush2.bf16.msra.mxu0 %v2058
        %4354 = vmatprep.subr.bf16.mxu0 %v2051
        %4355 = vmatpush2.bf16.msra.mxu0 %v2050
        %4356 = vmatprep.subr.bf16.mxu0 %v2043
        %4357 = vmatpush2.bf16.msra.mxu0 %v2042
        %4358 = vmatprep.subr.bf16.mxu0 %v2035
        %4359 = vmatpush2.bf16.msra.mxu0 %v2034
        %4360 = vmatprep.subr.bf16.mxu0 %v2027
        %4361 = vmatpush2.bf16.msra.mxu0 %v2026
        %4362 = vmatprep.subr.bf16.mxu0 %v2019
        %4363 = vmatpush2.bf16.msra.mxu0 %v2018
        %4364 = vmatprep.subr.bf16.mxu0 %v2011
        %4365 = vmatpush2.bf16.msra.mxu0 %v2010
        %4366 = vmatprep.subr.bf16.mxu0 %v2003
        %4367 = vmatpush2.bf16.msra.mxu0 %v2002
        %4368 = vmatprep.mubr.bf16.mxu0 %v2921
        %4369 = vmatmul.mubr.bf16.gmra.mxu0 %v2920
        %v4370 = vpop.f32.mrf.mxu0
        %v4371 = vadd.f32 %v4328, %v4370
        %v4372 = vpop.f32.mrf.mxu0
        %v4373 = vadd.f32 %v4330, %v4372
        %v4374 = vpop.f32.mrf.mxu0
        %v4375 = vadd.f32 %v4332, %v4374
        %v4376 = vpop.f32.mrf.mxu0
        %v4377 = vadd.f32 %v4334, %v4376
        %4378 = vdwg.mxu0
        %4379 = vmatprep.subr.bf16.mxu0 %v2123
        %4380 = vmatpush1.bf16.msra.mxu0 %v2122
        %4381 = vmatprep.subr.bf16.mxu0 %v2115
        %4382 = vmatpush1.bf16.msra.mxu0 %v2114
        %4383 = vmatprep.subr.bf16.mxu0 %v2107
        %4384 = vmatpush1.bf16.msra.mxu0 %v2106
        %4385 = vmatprep.subr.bf16.mxu0 %v2099
        %4386 = vmatpush1.bf16.msra.mxu0 %v2098
        %4387 = vmatprep.subr.bf16.mxu0 %v2091
        %4388 = vmatpush1.bf16.msra.mxu0 %v2090
        %4389 = vmatprep.subr.bf16.mxu0 %v2083
        %4390 = vmatpush1.bf16.msra.mxu0 %v2082
        %4391 = vmatprep.subr.bf16.mxu0 %v2075
        %4392 = vmatpush1.bf16.msra.mxu0 %v2074
        %4393 = vmatprep.subr.bf16.mxu0 %v2067
        %4394 = vmatpush1.bf16.msra.mxu0 %v2066
        %4395 = vmatprep.subr.bf16.mxu0 %v2187
        %4396 = vmatpush2.bf16.msra.mxu0 %v2186
        %4397 = vmatprep.subr.bf16.mxu0 %v2179
        %4398 = vmatpush2.bf16.msra.mxu0 %v2178
        %4399 = vmatprep.subr.bf16.mxu0 %v2171
        %4400 = vmatpush2.bf16.msra.mxu0 %v2170
        %4401 = vmatprep.subr.bf16.mxu0 %v2163
        %4402 = vmatpush2.bf16.msra.mxu0 %v2162
        %4403 = vmatprep.subr.bf16.mxu0 %v2155
        %4404 = vmatpush2.bf16.msra.mxu0 %v2154
        %4405 = vmatprep.subr.bf16.mxu0 %v2147
        %4406 = vmatpush2.bf16.msra.mxu0 %v2146
        %4407 = vmatprep.subr.bf16.mxu0 %v2139
        %4408 = vmatpush2.bf16.msra.mxu0 %v2138
        %4409 = vmatprep.subr.bf16.mxu0 %v2131
        %4410 = vmatpush2.bf16.msra.mxu0 %v2130
        %4411 = vmatprep.mubr.bf16.mxu0 %v2923
        %4412 = vmatmul.mubr.bf16.gmra.mxu0 %v2922
        %v4413 = vpop.f32.mrf.mxu0
        %v4414 = vadd.f32 %v4371, %v4413
        %v4415 = vpop.f32.mrf.mxu0
        %v4416 = vadd.f32 %v4373, %v4415
        %v4417 = vpop.f32.mrf.mxu0
        %v4418 = vadd.f32 %v4375, %v4417
        %v4419 = vpop.f32.mrf.mxu0
        %v4420 = vadd.f32 %v4377, %v4419
        %4421 = vdwg.mxu0
        %4422 = vmatprep.subr.bf16.mxu0 %v2251
        %4423 = vmatpush1.bf16.msra.mxu0 %v2250
        %4424 = vmatprep.subr.bf16.mxu0 %v2243
        %4425 = vmatpush1.bf16.msra.mxu0 %v2242
        %4426 = vmatprep.subr.bf16.mxu0 %v2235
        %4427 = vmatpush1.bf16.msra.mxu0 %v2234
        %4428 = vmatprep.subr.bf16.mxu0 %v2227
        %4429 = vmatpush1.bf16.msra.mxu0 %v2226
        %4430 = vmatprep.subr.bf16.mxu0 %v2219
        %4431 = vmatpush1.bf16.msra.mxu0 %v2218
        %4432 = vmatprep.subr.bf16.mxu0 %v2211
        %4433 = vmatpush1.bf16.msra.mxu0 %v2210
        %4434 = vmatprep.subr.bf16.mxu0 %v2203
        %4435 = vmatpush1.bf16.msra.mxu0 %v2202
        %4436 = vmatprep.subr.bf16.mxu0 %v2195
        %4437 = vmatpush1.bf16.msra.mxu0 %v2194
        %4438 = vmatprep.subr.bf16.mxu0 %v2315
        %4439 = vmatpush2.bf16.msra.mxu0 %v2314
        %4440 = vmatprep.subr.bf16.mxu0 %v2307
        %4441 = vmatpush2.bf16.msra.mxu0 %v2306
        %4442 = vmatprep.subr.bf16.mxu0 %v2299
        %4443 = vmatpush2.bf16.msra.mxu0 %v2298
        %4444 = vmatprep.subr.bf16.mxu0 %v2291
        %4445 = vmatpush2.bf16.msra.mxu0 %v2290
        %4446 = vmatprep.subr.bf16.mxu0 %v2283
        %4447 = vmatpush2.bf16.msra.mxu0 %v2282
        %4448 = vmatprep.subr.bf16.mxu0 %v2275
        %4449 = vmatpush2.bf16.msra.mxu0 %v2274
        %4450 = vmatprep.subr.bf16.mxu0 %v2267
        %4451 = vmatpush2.bf16.msra.mxu0 %v2266
        %4452 = vmatprep.subr.bf16.mxu0 %v2259
        %4453 = vmatpush2.bf16.msra.mxu0 %v2258
        %4454 = vmatprep.mubr.bf16.mxu0 %v2925
        %4455 = vmatmul.mubr.bf16.gmra.mxu0 %v2924
        %v4456 = vpop.f32.mrf.mxu0
        %v4457 = vadd.f32 %v4414, %v4456
        %v4458 = vpop.f32.mrf.mxu0
        %v4459 = vadd.f32 %v4416, %v4458
        %v4460 = vpop.f32.mrf.mxu0
        %v4461 = vadd.f32 %v4418, %v4460
        %v4462 = vpop.f32.mrf.mxu0
        %v4463 = vadd.f32 %v4420, %v4462
        %4464 = vdwg.mxu0
        %4465 = vmatprep.subr.bf16.mxu0 %v2379
        %4466 = vmatpush1.bf16.msra.mxu0 %v2378
        %4467 = vmatprep.subr.bf16.mxu0 %v2371
        %4468 = vmatpush1.bf16.msra.mxu0 %v2370
        %4469 = vmatprep.subr.bf16.mxu0 %v2363
        %4470 = vmatpush1.bf16.msra.mxu0 %v2362
        %4471 = vmatprep.subr.bf16.mxu0 %v2355
        %4472 = vmatpush1.bf16.msra.mxu0 %v2354
        %4473 = vmatprep.subr.bf16.mxu0 %v2347
        %4474 = vmatpush1.bf16.msra.mxu0 %v2346
        %4475 = vmatprep.subr.bf16.mxu0 %v2339
        %4476 = vmatpush1.bf16.msra.mxu0 %v2338
        %4477 = vmatprep.subr.bf16.mxu0 %v2331
        %4478 = vmatpush1.bf16.msra.mxu0 %v2330
        %4479 = vmatprep.subr.bf16.mxu0 %v2323
        %4480 = vmatpush1.bf16.msra.mxu0 %v2322
        %4481 = vmatprep.subr.bf16.mxu0 %v2443
        %4482 = vmatpush2.bf16.msra.mxu0 %v2442
        %4483 = vmatprep.subr.bf16.mxu0 %v2435
        %4484 = vmatpush2.bf16.msra.mxu0 %v2434
        %4485 = vmatprep.subr.bf16.mxu0 %v2427
        %4486 = vmatpush2.bf16.msra.mxu0 %v2426
        %4487 = vmatprep.subr.bf16.mxu0 %v2419
        %4488 = vmatpush2.bf16.msra.mxu0 %v2418
        %4489 = vmatprep.subr.bf16.mxu0 %v2411
        %4490 = vmatpush2.bf16.msra.mxu0 %v2410
        %4491 = vmatprep.subr.bf16.mxu0 %v2403
        %4492 = vmatpush2.bf16.msra.mxu0 %v2402
        %4493 = vmatprep.subr.bf16.mxu0 %v2395
        %4494 = vmatpush2.bf16.msra.mxu0 %v2394
        %4495 = vmatprep.subr.bf16.mxu0 %v2387
        %4496 = vmatpush2.bf16.msra.mxu0 %v2386
        %4497 = vmatprep.mubr.bf16.mxu0 %v2927
        %4498 = vmatmul.mubr.bf16.gmra.mxu0 %v2926
        %v4499 = vpop.f32.mrf.mxu0
        %v4500 = vadd.f32 %v4457, %v4499
        %v4501 = vpop.f32.mrf.mxu0
        %v4502 = vadd.f32 %v4459, %v4501
        %v4503 = vpop.f32.mrf.mxu0
        %v4504 = vadd.f32 %v4461, %v4503
        %v4505 = vpop.f32.mrf.mxu0
        %v4506 = vadd.f32 %v4463, %v4505
        %4507 = vdwg.mxu0
        %4508 = vmatprep.subr.bf16.mxu0 %v2507
        %4509 = vmatpush1.bf16.msra.mxu0 %v2506
        %4510 = vmatprep.subr.bf16.mxu0 %v2499
        %4511 = vmatpush1.bf16.msra.mxu0 %v2498
        %4512 = vmatprep.subr.bf16.mxu0 %v2491
        %4513 = vmatpush1.bf16.msra.mxu0 %v2490
        %4514 = vmatprep.subr.bf16.mxu0 %v2483
        %4515 = vmatpush1.bf16.msra.mxu0 %v2482
        %4516 = vmatprep.subr.bf16.mxu0 %v2475
        %4517 = vmatpush1.bf16.msra.mxu0 %v2474
        %4518 = vmatprep.subr.bf16.mxu0 %v2467
        %4519 = vmatpush1.bf16.msra.mxu0 %v2466
        %4520 = vmatprep.subr.bf16.mxu0 %v2459
        %4521 = vmatpush1.bf16.msra.mxu0 %v2458
        %4522 = vmatprep.subr.bf16.mxu0 %v2451
        %4523 = vmatpush1.bf16.msra.mxu0 %v2450
        %4524 = vmatprep.subr.bf16.mxu0 %v2571
        %4525 = vmatpush2.bf16.msra.mxu0 %v2570
        %4526 = vmatprep.subr.bf16.mxu0 %v2563
        %4527 = vmatpush2.bf16.msra.mxu0 %v2562
        %4528 = vmatprep.subr.bf16.mxu0 %v2555
        %4529 = vmatpush2.bf16.msra.mxu0 %v2554
        %4530 = vmatprep.subr.bf16.mxu0 %v2547
        %4531 = vmatpush2.bf16.msra.mxu0 %v2546
        %4532 = vmatprep.subr.bf16.mxu0 %v2539
        %4533 = vmatpush2.bf16.msra.mxu0 %v2538
        %4534 = vmatprep.subr.bf16.mxu0 %v2531
        %4535 = vmatpush2.bf16.msra.mxu0 %v2530
        %4536 = vmatprep.subr.bf16.mxu0 %v2523
        %4537 = vmatpush2.bf16.msra.mxu0 %v2522
        %4538 = vmatprep.subr.bf16.mxu0 %v2515
        %4539 = vmatpush2.bf16.msra.mxu0 %v2514
        %4540 = vmatprep.mubr.bf16.mxu0 %v2929
        %4541 = vmatmul.mubr.bf16.gmra.mxu0 %v2928
        %v4542 = vpop.f32.mrf.mxu0
        %v4543 = vadd.f32 %v4500, %v4542
        %v4544 = vpop.f32.mrf.mxu0
        %v4545 = vadd.f32 %v4502, %v4544
        %v4546 = vpop.f32.mrf.mxu0
        %v4547 = vadd.f32 %v4504, %v4546
        %v4548 = vpop.f32.mrf.mxu0
        %v4549 = vadd.f32 %v4506, %v4548
        %4550 = vdwg.mxu0
        %4551 = vmatprep.subr.bf16.mxu0 %v2635
        %4552 = vmatpush1.bf16.msra.mxu0 %v2634
        %4553 = vmatprep.subr.bf16.mxu0 %v2627
        %4554 = vmatpush1.bf16.msra.mxu0 %v2626
        %4555 = vmatprep.subr.bf16.mxu0 %v2619
        %4556 = vmatpush1.bf16.msra.mxu0 %v2618
        %4557 = vmatprep.subr.bf16.mxu0 %v2611
        %4558 = vmatpush1.bf16.msra.mxu0 %v2610
        %4559 = vmatprep.subr.bf16.mxu0 %v2603
        %4560 = vmatpush1.bf16.msra.mxu0 %v2602
        %4561 = vmatprep.subr.bf16.mxu0 %v2595
        %4562 = vmatpush1.bf16.msra.mxu0 %v2594
        %4563 = vmatprep.subr.bf16.mxu0 %v2587
        %4564 = vmatpush1.bf16.msra.mxu0 %v2586
        %4565 = vmatprep.subr.bf16.mxu0 %v2579
        %4566 = vmatpush1.bf16.msra.mxu0 %v2578
        %4567 = vmatprep.subr.bf16.mxu0 %v2699
        %4568 = vmatpush2.bf16.msra.mxu0 %v2698
        %4569 = vmatprep.subr.bf16.mxu0 %v2691
        %4570 = vmatpush2.bf16.msra.mxu0 %v2690
        %4571 = vmatprep.subr.bf16.mxu0 %v2683
        %4572 = vmatpush2.bf16.msra.mxu0 %v2682
        %4573 = vmatprep.subr.bf16.mxu0 %v2675
        %4574 = vmatpush2.bf16.msra.mxu0 %v2674
        %4575 = vmatprep.subr.bf16.mxu0 %v2667
        %4576 = vmatpush2.bf16.msra.mxu0 %v2666
        %4577 = vmatprep.subr.bf16.mxu0 %v2659
        %4578 = vmatpush2.bf16.msra.mxu0 %v2658
        %4579 = vmatprep.subr.bf16.mxu0 %v2651
        %4580 = vmatpush2.bf16.msra.mxu0 %v2650
        %4581 = vmatprep.subr.bf16.mxu0 %v2643
        %4582 = vmatpush2.bf16.msra.mxu0 %v2642
        %4583 = vmatprep.mubr.bf16.mxu0 %v2931
        %4584 = vmatmul.mubr.bf16.gmra.mxu0 %v2930
        %v4585 = vpop.f32.mrf.mxu0
        %v4586 = vadd.f32 %v4543, %v4585
        %v4587 = vpop.f32.mrf.mxu0
        %v4588 = vadd.f32 %v4545, %v4587
        %v4589 = vpop.f32.mrf.mxu0
        %v4590 = vadd.f32 %v4547, %v4589
        %v4591 = vpop.f32.mrf.mxu0
        %v4592 = vadd.f32 %v4549, %v4591
        %4593 = vdwg.mxu0
        %4594 = vmatprep.subr.bf16.mxu0 %v2763
        %4595 = vmatpush1.bf16.msra.mxu0 %v2762
        %4596 = vmatprep.subr.bf16.mxu0 %v2755
        %4597 = vmatpush1.bf16.msra.mxu0 %v2754
        %4598 = vmatprep.subr.bf16.mxu0 %v2747
        %4599 = vmatpush1.bf16.msra.mxu0 %v2746
        %4600 = vmatprep.subr.bf16.mxu0 %v2739
        %4601 = vmatpush1.bf16.msra.mxu0 %v2738
        %4602 = vmatprep.subr.bf16.mxu0 %v2731
        %4603 = vmatpush1.bf16.msra.mxu0 %v2730
        %4604 = vmatprep.subr.bf16.mxu0 %v2723
        %4605 = vmatpush1.bf16.msra.mxu0 %v2722
        %4606 = vmatprep.subr.bf16.mxu0 %v2715
        %4607 = vmatpush1.bf16.msra.mxu0 %v2714
        %4608 = vmatprep.subr.bf16.mxu0 %v2707
        %4609 = vmatpush1.bf16.msra.mxu0 %v2706
        %4610 = vmatprep.subr.bf16.mxu0 %v2827
        %4611 = vmatpush2.bf16.msra.mxu0 %v2826
        %4612 = vmatprep.subr.bf16.mxu0 %v2819
        %4613 = vmatpush2.bf16.msra.mxu0 %v2818
        %4614 = vmatprep.subr.bf16.mxu0 %v2811
        %4615 = vmatpush2.bf16.msra.mxu0 %v2810
        %4616 = vmatprep.subr.bf16.mxu0 %v2803
        %4617 = vmatpush2.bf16.msra.mxu0 %v2802
        %4618 = vmatprep.subr.bf16.mxu0 %v2795
        %4619 = vmatpush2.bf16.msra.mxu0 %v2794
        %4620 = vmatprep.subr.bf16.mxu0 %v2787
        %4621 = vmatpush2.bf16.msra.mxu0 %v2786
        %4622 = vmatprep.subr.bf16.mxu0 %v2779
        %4623 = vmatpush2.bf16.msra.mxu0 %v2778
        %4624 = vmatprep.subr.bf16.mxu0 %v2771
        %4625 = vmatpush2.bf16.msra.mxu0 %v2770
        %4626 = vmatprep.mubr.bf16.mxu0 %v2933
        %4627 = vmatmul.mubr.bf16.gmra.mxu0 %v2932
        %v4628 = vpop.f32.mrf.mxu0
        %v4629 = vadd.f32 %v4586, %v4628
        %v4630 = vpop.f32.mrf.mxu0
        %v4631 = vadd.f32 %v4588, %v4630
        %v4632 = vpop.f32.mrf.mxu0
        %v4633 = vadd.f32 %v4590, %v4632
        %v4634 = vpop.f32.mrf.mxu0
        %v4635 = vadd.f32 %v4592, %v4634
        %4636 = vdwg.mxu0
        %4637 = vmatprep.subr.bf16.mxu0 %v1229
        %4638 = vmatpush1.bf16.msra.mxu0 %v1228
        %4639 = vmatprep.subr.bf16.mxu0 %v1221
        %4640 = vmatpush1.bf16.msra.mxu0 %v1220
        %4641 = vmatprep.subr.bf16.mxu0 %v1213
        %4642 = vmatpush1.bf16.msra.mxu0 %v1212
        %4643 = vmatprep.subr.bf16.mxu0 %v1205
        %4644 = vmatpush1.bf16.msra.mxu0 %v1204
        %4645 = vmatprep.subr.bf16.mxu0 %v1197
        %4646 = vmatpush1.bf16.msra.mxu0 %v1196
        %4647 = vmatprep.subr.bf16.mxu0 %v1189
        %4648 = vmatpush1.bf16.msra.mxu0 %v1188
        %4649 = vmatprep.subr.bf16.mxu0 %v1181
        %4650 = vmatpush1.bf16.msra.mxu0 %v1180
        %4651 = vmatprep.subr.bf16.mxu0 %v1173
        %4652 = vmatpush1.bf16.msra.mxu0 %v1172
        %4653 = vmatprep.subr.bf16.mxu0 %v1293
        %4654 = vmatpush2.bf16.msra.mxu0 %v1292
        %4655 = vmatprep.subr.bf16.mxu0 %v1285
        %4656 = vmatpush2.bf16.msra.mxu0 %v1284
        %4657 = vmatprep.subr.bf16.mxu0 %v1277
        %4658 = vmatpush2.bf16.msra.mxu0 %v1276
        %4659 = vmatprep.subr.bf16.mxu0 %v1269
        %4660 = vmatpush2.bf16.msra.mxu0 %v1268
        %4661 = vmatprep.subr.bf16.mxu0 %v1261
        %4662 = vmatpush2.bf16.msra.mxu0 %v1260
        %4663 = vmatprep.subr.bf16.mxu0 %v1253
        %4664 = vmatpush2.bf16.msra.mxu0 %v1252
        %4665 = vmatprep.subr.bf16.mxu0 %v1245
        %4666 = vmatpush2.bf16.msra.mxu0 %v1244
        %4667 = vmatprep.subr.bf16.mxu0 %v1237
        %4668 = vmatpush2.bf16.msra.mxu0 %v1236
        %4669 = vmatprep.mubr.bf16.mxu0 %v2909
        %4670 = vmatmul.mubr.bf16.gmra.mxu0 %v2908
        %v4671 = vpop.f32.mrf.mxu0
        %v4672 = vadd.f32 0.0, %v4671
        %v4673 = vpop.f32.mrf.mxu0
        %v4674 = vadd.f32 0.0, %v4673
        %v4675 = vpop.f32.mrf.mxu0
        %v4676 = vadd.f32 0.0, %v4675
        %v4677 = vpop.f32.mrf.mxu0
        %v4678 = vadd.f32 0.0, %v4677
        %4679 = vdwg.mxu0
        %4680 = vmatprep.subr.bf16.mxu0 %v1357
        %4681 = vmatpush1.bf16.msra.mxu0 %v1356
        %4682 = vmatprep.subr.bf16.mxu0 %v1349
        %4683 = vmatpush1.bf16.msra.mxu0 %v1348
        %4684 = vmatprep.subr.bf16.mxu0 %v1341
        %4685 = vmatpush1.bf16.msra.mxu0 %v1340
        %4686 = vmatprep.subr.bf16.mxu0 %v1333
        %4687 = vmatpush1.bf16.msra.mxu0 %v1332
        %4688 = vmatprep.subr.bf16.mxu0 %v1325
        %4689 = vmatpush1.bf16.msra.mxu0 %v1324
        %4690 = vmatprep.subr.bf16.mxu0 %v1317
        %4691 = vmatpush1.bf16.msra.mxu0 %v1316
        %4692 = vmatprep.subr.bf16.mxu0 %v1309
        %4693 = vmatpush1.bf16.msra.mxu0 %v1308
        %4694 = vmatprep.subr.bf16.mxu0 %v1301
        %4695 = vmatpush1.bf16.msra.mxu0 %v1300
        %4696 = vmatprep.subr.bf16.mxu0 %v1421
        %4697 = vmatpush2.bf16.msra.mxu0 %v1420
        %4698 = vmatprep.subr.bf16.mxu0 %v1413
        %4699 = vmatpush2.bf16.msra.mxu0 %v1412
        %4700 = vmatprep.subr.bf16.mxu0 %v1405
        %4701 = vmatpush2.bf16.msra.mxu0 %v1404
        %4702 = vmatprep.subr.bf16.mxu0 %v1397
        %4703 = vmatpush2.bf16.msra.mxu0 %v1396
        %4704 = vmatprep.subr.bf16.mxu0 %v1389
        %4705 = vmatpush2.bf16.msra.mxu0 %v1388
        %4706 = vmatprep.subr.bf16.mxu0 %v1381
        %4707 = vmatpush2.bf16.msra.mxu0 %v1380
        %4708 = vmatprep.subr.bf16.mxu0 %v1373
        %4709 = vmatpush2.bf16.msra.mxu0 %v1372
        %4710 = vmatprep.subr.bf16.mxu0 %v1365
        %4711 = vmatpush2.bf16.msra.mxu0 %v1364
        %4712 = vmatprep.mubr.bf16.mxu0 %v2911
        %4713 = vmatmul.mubr.bf16.gmra.mxu0 %v2910
        %v4714 = vpop.f32.mrf.mxu0
        %v4715 = vadd.f32 %v4672, %v4714
        %v4716 = vpop.f32.mrf.mxu0
        %v4717 = vadd.f32 %v4674, %v4716
        %v4718 = vpop.f32.mrf.mxu0
        %v4719 = vadd.f32 %v4676, %v4718
        %v4720 = vpop.f32.mrf.mxu0
        %v4721 = vadd.f32 %v4678, %v4720
        %4722 = vdwg.mxu0
        %4723 = vmatprep.subr.bf16.mxu0 %v1485
        %4724 = vmatpush1.bf16.msra.mxu0 %v1484
        %4725 = vmatprep.subr.bf16.mxu0 %v1477
        %4726 = vmatpush1.bf16.msra.mxu0 %v1476
        %4727 = vmatprep.subr.bf16.mxu0 %v1469
        %4728 = vmatpush1.bf16.msra.mxu0 %v1468
        %4729 = vmatprep.subr.bf16.mxu0 %v1461
        %4730 = vmatpush1.bf16.msra.mxu0 %v1460
        %4731 = vmatprep.subr.bf16.mxu0 %v1453
        %4732 = vmatpush1.bf16.msra.mxu0 %v1452
        %4733 = vmatprep.subr.bf16.mxu0 %v1445
        %4734 = vmatpush1.bf16.msra.mxu0 %v1444
        %4735 = vmatprep.subr.bf16.mxu0 %v1437
        %4736 = vmatpush1.bf16.msra.mxu0 %v1436
        %4737 = vmatprep.subr.bf16.mxu0 %v1429
        %4738 = vmatpush1.bf16.msra.mxu0 %v1428
        %4739 = vmatprep.subr.bf16.mxu0 %v1549
        %4740 = vmatpush2.bf16.msra.mxu0 %v1548
        %4741 = vmatprep.subr.bf16.mxu0 %v1541
        %4742 = vmatpush2.bf16.msra.mxu0 %v1540
        %4743 = vmatprep.subr.bf16.mxu0 %v1533
        %4744 = vmatpush2.bf16.msra.mxu0 %v1532
        %4745 = vmatprep.subr.bf16.mxu0 %v1525
        %4746 = vmatpush2.bf16.msra.mxu0 %v1524
        %4747 = vmatprep.subr.bf16.mxu0 %v1517
        %4748 = vmatpush2.bf16.msra.mxu0 %v1516
        %4749 = vmatprep.subr.bf16.mxu0 %v1509
        %4750 = vmatpush2.bf16.msra.mxu0 %v1508
        %4751 = vmatprep.subr.bf16.mxu0 %v1501
        %4752 = vmatpush2.bf16.msra.mxu0 %v1500
        %4753 = vmatprep.subr.bf16.mxu0 %v1493
        %4754 = vmatpush2.bf16.msra.mxu0 %v1492
        %4755 = vmatprep.mubr.bf16.mxu0 %v2913
        %4756 = vmatmul.mubr.bf16.gmra.mxu0 %v2912
        %v4757 = vpop.f32.mrf.mxu0
        %v4758 = vadd.f32 %v4715, %v4757
        %v4759 = vpop.f32.mrf.mxu0
        %v4760 = vadd.f32 %v4717, %v4759
        %v4761 = vpop.f32.mrf.mxu0
        %v4762 = vadd.f32 %v4719, %v4761
        %v4763 = vpop.f32.mrf.mxu0
        %v4764 = vadd.f32 %v4721, %v4763
        %4765 = vdwg.mxu0
        %4766 = vmatprep.subr.bf16.mxu0 %v1613
        %4767 = vmatpush1.bf16.msra.mxu0 %v1612
        %4768 = vmatprep.subr.bf16.mxu0 %v1605
        %4769 = vmatpush1.bf16.msra.mxu0 %v1604
        %4770 = vmatprep.subr.bf16.mxu0 %v1597
        %4771 = vmatpush1.bf16.msra.mxu0 %v1596
        %4772 = vmatprep.subr.bf16.mxu0 %v1589
        %4773 = vmatpush1.bf16.msra.mxu0 %v1588
        %4774 = vmatprep.subr.bf16.mxu0 %v1581
        %4775 = vmatpush1.bf16.msra.mxu0 %v1580
        %4776 = vmatprep.subr.bf16.mxu0 %v1573
        %4777 = vmatpush1.bf16.msra.mxu0 %v1572
        %4778 = vmatprep.subr.bf16.mxu0 %v1565
        %4779 = vmatpush1.bf16.msra.mxu0 %v1564
        %4780 = vmatprep.subr.bf16.mxu0 %v1557
        %4781 = vmatpush1.bf16.msra.mxu0 %v1556
        %4782 = vmatprep.subr.bf16.mxu0 %v1677
        %4783 = vmatpush2.bf16.msra.mxu0 %v1676
        %4784 = vmatprep.subr.bf16.mxu0 %v1669
        %4785 = vmatpush2.bf16.msra.mxu0 %v1668
        %4786 = vmatprep.subr.bf16.mxu0 %v1661
        %4787 = vmatpush2.bf16.msra.mxu0 %v1660
        %4788 = vmatprep.subr.bf16.mxu0 %v1653
        %4789 = vmatpush2.bf16.msra.mxu0 %v1652
        %4790 = vmatprep.subr.bf16.mxu0 %v1645
        %4791 = vmatpush2.bf16.msra.mxu0 %v1644
        %4792 = vmatprep.subr.bf16.mxu0 %v1637
        %4793 = vmatpush2.bf16.msra.mxu0 %v1636
        %4794 = vmatprep.subr.bf16.mxu0 %v1629
        %4795 = vmatpush2.bf16.msra.mxu0 %v1628
        %4796 = vmatprep.subr.bf16.mxu0 %v1621
        %4797 = vmatpush2.bf16.msra.mxu0 %v1620
        %4798 = vmatprep.mubr.bf16.mxu0 %v2915
        %4799 = vmatmul.mubr.bf16.gmra.mxu0 %v2914
        %v4800 = vpop.f32.mrf.mxu0
        %v4801 = vadd.f32 %v4758, %v4800
        %v4802 = vpop.f32.mrf.mxu0
        %v4803 = vadd.f32 %v4760, %v4802
        %v4804 = vpop.f32.mrf.mxu0
        %v4805 = vadd.f32 %v4762, %v4804
        %v4806 = vpop.f32.mrf.mxu0
        %v4807 = vadd.f32 %v4764, %v4806
        %4808 = vdwg.mxu0
        %4809 = vmatprep.subr.bf16.mxu0 %v1741
        %4810 = vmatpush1.bf16.msra.mxu0 %v1740
        %4811 = vmatprep.subr.bf16.mxu0 %v1733
        %4812 = vmatpush1.bf16.msra.mxu0 %v1732
        %4813 = vmatprep.subr.bf16.mxu0 %v1725
        %4814 = vmatpush1.bf16.msra.mxu0 %v1724
        %4815 = vmatprep.subr.bf16.mxu0 %v1717
        %4816 = vmatpush1.bf16.msra.mxu0 %v1716
        %4817 = vmatprep.subr.bf16.mxu0 %v1709
        %4818 = vmatpush1.bf16.msra.mxu0 %v1708
        %4819 = vmatprep.subr.bf16.mxu0 %v1701
        %4820 = vmatpush1.bf16.msra.mxu0 %v1700
        %4821 = vmatprep.subr.bf16.mxu0 %v1693
        %4822 = vmatpush1.bf16.msra.mxu0 %v1692
        %4823 = vmatprep.subr.bf16.mxu0 %v1685
        %4824 = vmatpush1.bf16.msra.mxu0 %v1684
        %4825 = vmatprep.subr.bf16.mxu0 %v1805
        %4826 = vmatpush2.bf16.msra.mxu0 %v1804
        %4827 = vmatprep.subr.bf16.mxu0 %v1797
        %4828 = vmatpush2.bf16.msra.mxu0 %v1796
        %4829 = vmatprep.subr.bf16.mxu0 %v1789
        %4830 = vmatpush2.bf16.msra.mxu0 %v1788
        %4831 = vmatprep.subr.bf16.mxu0 %v1781
        %4832 = vmatpush2.bf16.msra.mxu0 %v1780
        %4833 = vmatprep.subr.bf16.mxu0 %v1773
        %4834 = vmatpush2.bf16.msra.mxu0 %v1772
        %4835 = vmatprep.subr.bf16.mxu0 %v1765
        %4836 = vmatpush2.bf16.msra.mxu0 %v1764
        %4837 = vmatprep.subr.bf16.mxu0 %v1757
        %4838 = vmatpush2.bf16.msra.mxu0 %v1756
        %4839 = vmatprep.subr.bf16.mxu0 %v1749
        %4840 = vmatpush2.bf16.msra.mxu0 %v1748
        %4841 = vmatprep.mubr.bf16.mxu0 %v2917
        %4842 = vmatmul.mubr.bf16.gmra.mxu0 %v2916
        %v4843 = vpop.f32.mrf.mxu0
        %v4844 = vadd.f32 %v4801, %v4843
        %v4845 = vpop.f32.mrf.mxu0
        %v4846 = vadd.f32 %v4803, %v4845
        %v4847 = vpop.f32.mrf.mxu0
        %v4848 = vadd.f32 %v4805, %v4847
        %v4849 = vpop.f32.mrf.mxu0
        %v4850 = vadd.f32 %v4807, %v4849
        %4851 = vdwg.mxu0
        %4852 = vmatprep.subr.bf16.mxu0 %v1869
        %4853 = vmatpush1.bf16.msra.mxu0 %v1868
        %4854 = vmatprep.subr.bf16.mxu0 %v1861
        %4855 = vmatpush1.bf16.msra.mxu0 %v1860
        %4856 = vmatprep.subr.bf16.mxu0 %v1853
        %4857 = vmatpush1.bf16.msra.mxu0 %v1852
        %4858 = vmatprep.subr.bf16.mxu0 %v1845
        %4859 = vmatpush1.bf16.msra.mxu0 %v1844
        %4860 = vmatprep.subr.bf16.mxu0 %v1837
        %4861 = vmatpush1.bf16.msra.mxu0 %v1836
        %4862 = vmatprep.subr.bf16.mxu0 %v1829
        %4863 = vmatpush1.bf16.msra.mxu0 %v1828
        %4864 = vmatprep.subr.bf16.mxu0 %v1821
        %4865 = vmatpush1.bf16.msra.mxu0 %v1820
        %4866 = vmatprep.subr.bf16.mxu0 %v1813
        %4867 = vmatpush1.bf16.msra.mxu0 %v1812
        %4868 = vmatprep.subr.bf16.mxu0 %v1933
        %4869 = vmatpush2.bf16.msra.mxu0 %v1932
        %4870 = vmatprep.subr.bf16.mxu0 %v1925
        %4871 = vmatpush2.bf16.msra.mxu0 %v1924
        %4872 = vmatprep.subr.bf16.mxu0 %v1917
        %4873 = vmatpush2.bf16.msra.mxu0 %v1916
        %4874 = vmatprep.subr.bf16.mxu0 %v1909
        %4875 = vmatpush2.bf16.msra.mxu0 %v1908
        %4876 = vmatprep.subr.bf16.mxu0 %v1901
        %4877 = vmatpush2.bf16.msra.mxu0 %v1900
        %4878 = vmatprep.subr.bf16.mxu0 %v1893
        %4879 = vmatpush2.bf16.msra.mxu0 %v1892
        %4880 = vmatprep.subr.bf16.mxu0 %v1885
        %4881 = vmatpush2.bf16.msra.mxu0 %v1884
        %4882 = vmatprep.subr.bf16.mxu0 %v1877
        %4883 = vmatpush2.bf16.msra.mxu0 %v1876
        %4884 = vmatprep.mubr.bf16.mxu0 %v2919
        %4885 = vmatmul.mubr.bf16.gmra.mxu0 %v2918
        %v4886 = vpop.f32.mrf.mxu0
        %v4887 = vadd.f32 %v4844, %v4886
        %v4888 = vpop.f32.mrf.mxu0
        %v4889 = vadd.f32 %v4846, %v4888
        %v4890 = vpop.f32.mrf.mxu0
        %v4891 = vadd.f32 %v4848, %v4890
        %v4892 = vpop.f32.mrf.mxu0
        %v4893 = vadd.f32 %v4850, %v4892
        %4894 = vdwg.mxu0
        %4895 = vmatprep.subr.bf16.mxu0 %v1997
        %4896 = vmatpush1.bf16.msra.mxu0 %v1996
        %4897 = vmatprep.subr.bf16.mxu0 %v1989
        %4898 = vmatpush1.bf16.msra.mxu0 %v1988
        %4899 = vmatprep.subr.bf16.mxu0 %v1981
        %4900 = vmatpush1.bf16.msra.mxu0 %v1980
        %4901 = vmatprep.subr.bf16.mxu0 %v1973
        %4902 = vmatpush1.bf16.msra.mxu0 %v1972
        %4903 = vmatprep.subr.bf16.mxu0 %v1965
        %4904 = vmatpush1.bf16.msra.mxu0 %v1964
        %4905 = vmatprep.subr.bf16.mxu0 %v1957
        %4906 = vmatpush1.bf16.msra.mxu0 %v1956
        %4907 = vmatprep.subr.bf16.mxu0 %v1949
        %4908 = vmatpush1.bf16.msra.mxu0 %v1948
        %4909 = vmatprep.subr.bf16.mxu0 %v1941
        %4910 = vmatpush1.bf16.msra.mxu0 %v1940
        %4911 = vmatprep.subr.bf16.mxu0 %v2061
        %4912 = vmatpush2.bf16.msra.mxu0 %v2060
        %4913 = vmatprep.subr.bf16.mxu0 %v2053
        %4914 = vmatpush2.bf16.msra.mxu0 %v2052
        %4915 = vmatprep.subr.bf16.mxu0 %v2045
        %4916 = vmatpush2.bf16.msra.mxu0 %v2044
        %4917 = vmatprep.subr.bf16.mxu0 %v2037
        %4918 = vmatpush2.bf16.msra.mxu0 %v2036
        %4919 = vmatprep.subr.bf16.mxu0 %v2029
        %4920 = vmatpush2.bf16.msra.mxu0 %v2028
        %4921 = vmatprep.subr.bf16.mxu0 %v2021
        %4922 = vmatpush2.bf16.msra.mxu0 %v2020
        %4923 = vmatprep.subr.bf16.mxu0 %v2013
        %4924 = vmatpush2.bf16.msra.mxu0 %v2012
        %4925 = vmatprep.subr.bf16.mxu0 %v2005
        %4926 = vmatpush2.bf16.msra.mxu0 %v2004
        %4927 = vmatprep.mubr.bf16.mxu0 %v2921
        %4928 = vmatmul.mubr.bf16.gmra.mxu0 %v2920
        %v4929 = vpop.f32.mrf.mxu0
        %v4930 = vadd.f32 %v4887, %v4929
        %v4931 = vpop.f32.mrf.mxu0
        %v4932 = vadd.f32 %v4889, %v4931
        %v4933 = vpop.f32.mrf.mxu0
        %v4934 = vadd.f32 %v4891, %v4933
        %v4935 = vpop.f32.mrf.mxu0
        %v4936 = vadd.f32 %v4893, %v4935
        %4937 = vdwg.mxu0
        %4938 = vmatprep.subr.bf16.mxu0 %v2125
        %4939 = vmatpush1.bf16.msra.mxu0 %v2124
        %4940 = vmatprep.subr.bf16.mxu0 %v2117
        %4941 = vmatpush1.bf16.msra.mxu0 %v2116
        %4942 = vmatprep.subr.bf16.mxu0 %v2109
        %4943 = vmatpush1.bf16.msra.mxu0 %v2108
        %4944 = vmatprep.subr.bf16.mxu0 %v2101
        %4945 = vmatpush1.bf16.msra.mxu0 %v2100
        %4946 = vmatprep.subr.bf16.mxu0 %v2093
        %4947 = vmatpush1.bf16.msra.mxu0 %v2092
        %4948 = vmatprep.subr.bf16.mxu0 %v2085
        %4949 = vmatpush1.bf16.msra.mxu0 %v2084
        %4950 = vmatprep.subr.bf16.mxu0 %v2077
        %4951 = vmatpush1.bf16.msra.mxu0 %v2076
        %4952 = vmatprep.subr.bf16.mxu0 %v2069
        %4953 = vmatpush1.bf16.msra.mxu0 %v2068
        %4954 = vmatprep.subr.bf16.mxu0 %v2189
        %4955 = vmatpush2.bf16.msra.mxu0 %v2188
        %4956 = vmatprep.subr.bf16.mxu0 %v2181
        %4957 = vmatpush2.bf16.msra.mxu0 %v2180
        %4958 = vmatprep.subr.bf16.mxu0 %v2173
        %4959 = vmatpush2.bf16.msra.mxu0 %v2172
        %4960 = vmatprep.subr.bf16.mxu0 %v2165
        %4961 = vmatpush2.bf16.msra.mxu0 %v2164
        %4962 = vmatprep.subr.bf16.mxu0 %v2157
        %4963 = vmatpush2.bf16.msra.mxu0 %v2156
        %4964 = vmatprep.subr.bf16.mxu0 %v2149
        %4965 = vmatpush2.bf16.msra.mxu0 %v2148
        %4966 = vmatprep.subr.bf16.mxu0 %v2141
        %4967 = vmatpush2.bf16.msra.mxu0 %v2140
        %4968 = vmatprep.subr.bf16.mxu0 %v2133
        %4969 = vmatpush2.bf16.msra.mxu0 %v2132
        %4970 = vmatprep.mubr.bf16.mxu0 %v2923
        %4971 = vmatmul.mubr.bf16.gmra.mxu0 %v2922
        %v4972 = vpop.f32.mrf.mxu0
        %v4973 = vadd.f32 %v4930, %v4972
        %v4974 = vpop.f32.mrf.mxu0
        %v4975 = vadd.f32 %v4932, %v4974
        %v4976 = vpop.f32.mrf.mxu0
        %v4977 = vadd.f32 %v4934, %v4976
        %v4978 = vpop.f32.mrf.mxu0
        %v4979 = vadd.f32 %v4936, %v4978
        %4980 = vdwg.mxu0
        %4981 = vmatprep.subr.bf16.mxu0 %v2253
        %4982 = vmatpush1.bf16.msra.mxu0 %v2252
        %4983 = vmatprep.subr.bf16.mxu0 %v2245
        %4984 = vmatpush1.bf16.msra.mxu0 %v2244
        %4985 = vmatprep.subr.bf16.mxu0 %v2237
        %4986 = vmatpush1.bf16.msra.mxu0 %v2236
        %4987 = vmatprep.subr.bf16.mxu0 %v2229
        %4988 = vmatpush1.bf16.msra.mxu0 %v2228
        %4989 = vmatprep.subr.bf16.mxu0 %v2221
        %4990 = vmatpush1.bf16.msra.mxu0 %v2220
        %4991 = vmatprep.subr.bf16.mxu0 %v2213
        %4992 = vmatpush1.bf16.msra.mxu0 %v2212
        %4993 = vmatprep.subr.bf16.mxu0 %v2205
        %4994 = vmatpush1.bf16.msra.mxu0 %v2204
        %4995 = vmatprep.subr.bf16.mxu0 %v2197
        %4996 = vmatpush1.bf16.msra.mxu0 %v2196
        %4997 = vmatprep.subr.bf16.mxu0 %v2317
        %4998 = vmatpush2.bf16.msra.mxu0 %v2316
        %4999 = vmatprep.subr.bf16.mxu0 %v2309
        %5000 = vmatpush2.bf16.msra.mxu0 %v2308
        %5001 = vmatprep.subr.bf16.mxu0 %v2301
        %5002 = vmatpush2.bf16.msra.mxu0 %v2300
        %5003 = vmatprep.subr.bf16.mxu0 %v2293
        %5004 = vmatpush2.bf16.msra.mxu0 %v2292
        %5005 = vmatprep.subr.bf16.mxu0 %v2285
        %5006 = vmatpush2.bf16.msra.mxu0 %v2284
        %5007 = vmatprep.subr.bf16.mxu0 %v2277
        %5008 = vmatpush2.bf16.msra.mxu0 %v2276
        %5009 = vmatprep.subr.bf16.mxu0 %v2269
        %5010 = vmatpush2.bf16.msra.mxu0 %v2268
        %5011 = vmatprep.subr.bf16.mxu0 %v2261
        %5012 = vmatpush2.bf16.msra.mxu0 %v2260
        %5013 = vmatprep.mubr.bf16.mxu0 %v2925
        %5014 = vmatmul.mubr.bf16.gmra.mxu0 %v2924
        %v5015 = vpop.f32.mrf.mxu0
        %v5016 = vadd.f32 %v4973, %v5015
        %v5017 = vpop.f32.mrf.mxu0
        %v5018 = vadd.f32 %v4975, %v5017
        %v5019 = vpop.f32.mrf.mxu0
        %v5020 = vadd.f32 %v4977, %v5019
        %v5021 = vpop.f32.mrf.mxu0
        %v5022 = vadd.f32 %v4979, %v5021
        %5023 = vdwg.mxu0
        %5024 = vmatprep.subr.bf16.mxu0 %v2381
        %5025 = vmatpush1.bf16.msra.mxu0 %v2380
        %5026 = vmatprep.subr.bf16.mxu0 %v2373
        %5027 = vmatpush1.bf16.msra.mxu0 %v2372
        %5028 = vmatprep.subr.bf16.mxu0 %v2365
        %5029 = vmatpush1.bf16.msra.mxu0 %v2364
        %5030 = vmatprep.subr.bf16.mxu0 %v2357
        %5031 = vmatpush1.bf16.msra.mxu0 %v2356
        %5032 = vmatprep.subr.bf16.mxu0 %v2349
        %5033 = vmatpush1.bf16.msra.mxu0 %v2348
        %5034 = vmatprep.subr.bf16.mxu0 %v2341
        %5035 = vmatpush1.bf16.msra.mxu0 %v2340
        %5036 = vmatprep.subr.bf16.mxu0 %v2333
        %5037 = vmatpush1.bf16.msra.mxu0 %v2332
        %5038 = vmatprep.subr.bf16.mxu0 %v2325
        %5039 = vmatpush1.bf16.msra.mxu0 %v2324
        %5040 = vmatprep.subr.bf16.mxu0 %v2445
        %5041 = vmatpush2.bf16.msra.mxu0 %v2444
        %5042 = vmatprep.subr.bf16.mxu0 %v2437
        %5043 = vmatpush2.bf16.msra.mxu0 %v2436
        %5044 = vmatprep.subr.bf16.mxu0 %v2429
        %5045 = vmatpush2.bf16.msra.mxu0 %v2428
        %5046 = vmatprep.subr.bf16.mxu0 %v2421
        %5047 = vmatpush2.bf16.msra.mxu0 %v2420
        %5048 = vmatprep.subr.bf16.mxu0 %v2413
        %5049 = vmatpush2.bf16.msra.mxu0 %v2412
        %5050 = vmatprep.subr.bf16.mxu0 %v2405
        %5051 = vmatpush2.bf16.msra.mxu0 %v2404
        %5052 = vmatprep.subr.bf16.mxu0 %v2397
        %5053 = vmatpush2.bf16.msra.mxu0 %v2396
        %5054 = vmatprep.subr.bf16.mxu0 %v2389
        %5055 = vmatpush2.bf16.msra.mxu0 %v2388
        %5056 = vmatprep.mubr.bf16.mxu0 %v2927
        %5057 = vmatmul.mubr.bf16.gmra.mxu0 %v2926
        %v5058 = vpop.f32.mrf.mxu0
        %v5059 = vadd.f32 %v5016, %v5058
        %v5060 = vpop.f32.mrf.mxu0
        %v5061 = vadd.f32 %v5018, %v5060
        %v5062 = vpop.f32.mrf.mxu0
        %v5063 = vadd.f32 %v5020, %v5062
        %v5064 = vpop.f32.mrf.mxu0
        %v5065 = vadd.f32 %v5022, %v5064
        %5066 = vdwg.mxu0
        %5067 = vmatprep.subr.bf16.mxu0 %v2509
        %5068 = vmatpush1.bf16.msra.mxu0 %v2508
        %5069 = vmatprep.subr.bf16.mxu0 %v2501
        %5070 = vmatpush1.bf16.msra.mxu0 %v2500
        %5071 = vmatprep.subr.bf16.mxu0 %v2493
        %5072 = vmatpush1.bf16.msra.mxu0 %v2492
        %5073 = vmatprep.subr.bf16.mxu0 %v2485
        %5074 = vmatpush1.bf16.msra.mxu0 %v2484
        %5075 = vmatprep.subr.bf16.mxu0 %v2477
        %5076 = vmatpush1.bf16.msra.mxu0 %v2476
        %5077 = vmatprep.subr.bf16.mxu0 %v2469
        %5078 = vmatpush1.bf16.msra.mxu0 %v2468
        %5079 = vmatprep.subr.bf16.mxu0 %v2461
        %5080 = vmatpush1.bf16.msra.mxu0 %v2460
        %5081 = vmatprep.subr.bf16.mxu0 %v2453
        %5082 = vmatpush1.bf16.msra.mxu0 %v2452
        %5083 = vmatprep.subr.bf16.mxu0 %v2573
        %5084 = vmatpush2.bf16.msra.mxu0 %v2572
        %5085 = vmatprep.subr.bf16.mxu0 %v2565
        %5086 = vmatpush2.bf16.msra.mxu0 %v2564
        %5087 = vmatprep.subr.bf16.mxu0 %v2557
        %5088 = vmatpush2.bf16.msra.mxu0 %v2556
        %5089 = vmatprep.subr.bf16.mxu0 %v2549
        %5090 = vmatpush2.bf16.msra.mxu0 %v2548
        %5091 = vmatprep.subr.bf16.mxu0 %v2541
        %5092 = vmatpush2.bf16.msra.mxu0 %v2540
        %5093 = vmatprep.subr.bf16.mxu0 %v2533
        %5094 = vmatpush2.bf16.msra.mxu0 %v2532
        %5095 = vmatprep.subr.bf16.mxu0 %v2525
        %5096 = vmatpush2.bf16.msra.mxu0 %v2524
        %5097 = vmatprep.subr.bf16.mxu0 %v2517
        %5098 = vmatpush2.bf16.msra.mxu0 %v2516
        %5099 = vmatprep.mubr.bf16.mxu0 %v2929
        %5100 = vmatmul.mubr.bf16.gmra.mxu0 %v2928
        %v5101 = vpop.f32.mrf.mxu0
        %v5102 = vadd.f32 %v5059, %v5101
        %v5103 = vpop.f32.mrf.mxu0
        %v5104 = vadd.f32 %v5061, %v5103
        %v5105 = vpop.f32.mrf.mxu0
        %v5106 = vadd.f32 %v5063, %v5105
        %v5107 = vpop.f32.mrf.mxu0
        %v5108 = vadd.f32 %v5065, %v5107
        %5109 = vdwg.mxu0
        %5110 = vmatprep.subr.bf16.mxu0 %v2637
        %5111 = vmatpush1.bf16.msra.mxu0 %v2636
        %5112 = vmatprep.subr.bf16.mxu0 %v2629
        %5113 = vmatpush1.bf16.msra.mxu0 %v2628
        %5114 = vmatprep.subr.bf16.mxu0 %v2621
        %5115 = vmatpush1.bf16.msra.mxu0 %v2620
        %5116 = vmatprep.subr.bf16.mxu0 %v2613
        %5117 = vmatpush1.bf16.msra.mxu0 %v2612
        %5118 = vmatprep.subr.bf16.mxu0 %v2605
        %5119 = vmatpush1.bf16.msra.mxu0 %v2604
        %5120 = vmatprep.subr.bf16.mxu0 %v2597
        %5121 = vmatpush1.bf16.msra.mxu0 %v2596
        %5122 = vmatprep.subr.bf16.mxu0 %v2589
        %5123 = vmatpush1.bf16.msra.mxu0 %v2588
        %5124 = vmatprep.subr.bf16.mxu0 %v2581
        %5125 = vmatpush1.bf16.msra.mxu0 %v2580
        %5126 = vmatprep.subr.bf16.mxu0 %v2701
        %5127 = vmatpush2.bf16.msra.mxu0 %v2700
        %5128 = vmatprep.subr.bf16.mxu0 %v2693
        %5129 = vmatpush2.bf16.msra.mxu0 %v2692
        %5130 = vmatprep.subr.bf16.mxu0 %v2685
        %5131 = vmatpush2.bf16.msra.mxu0 %v2684
        %5132 = vmatprep.subr.bf16.mxu0 %v2677
        %5133 = vmatpush2.bf16.msra.mxu0 %v2676
        %5134 = vmatprep.subr.bf16.mxu0 %v2669
        %5135 = vmatpush2.bf16.msra.mxu0 %v2668
        %5136 = vmatprep.subr.bf16.mxu0 %v2661
        %5137 = vmatpush2.bf16.msra.mxu0 %v2660
        %5138 = vmatprep.subr.bf16.mxu0 %v2653
        %5139 = vmatpush2.bf16.msra.mxu0 %v2652
        %5140 = vmatprep.subr.bf16.mxu0 %v2645
        %5141 = vmatpush2.bf16.msra.mxu0 %v2644
        %5142 = vmatprep.mubr.bf16.mxu0 %v2931
        %5143 = vmatmul.mubr.bf16.gmra.mxu0 %v2930
        %v5144 = vpop.f32.mrf.mxu0
        %v5145 = vadd.f32 %v5102, %v5144
        %v5146 = vpop.f32.mrf.mxu0
        %v5147 = vadd.f32 %v5104, %v5146
        %v5148 = vpop.f32.mrf.mxu0
        %v5149 = vadd.f32 %v5106, %v5148
        %v5150 = vpop.f32.mrf.mxu0
        %v5151 = vadd.f32 %v5108, %v5150
        %5152 = vdwg.mxu0
        %5153 = vmatprep.subr.bf16.mxu0 %v2765
        %5154 = vmatpush1.bf16.msra.mxu0 %v2764
        %5155 = vmatprep.subr.bf16.mxu0 %v2757
        %5156 = vmatpush1.bf16.msra.mxu0 %v2756
        %5157 = vmatprep.subr.bf16.mxu0 %v2749
        %5158 = vmatpush1.bf16.msra.mxu0 %v2748
        %5159 = vmatprep.subr.bf16.mxu0 %v2741
        %5160 = vmatpush1.bf16.msra.mxu0 %v2740
        %5161 = vmatprep.subr.bf16.mxu0 %v2733
        %5162 = vmatpush1.bf16.msra.mxu0 %v2732
        %5163 = vmatprep.subr.bf16.mxu0 %v2725
        %5164 = vmatpush1.bf16.msra.mxu0 %v2724
        %5165 = vmatprep.subr.bf16.mxu0 %v2717
        %5166 = vmatpush1.bf16.msra.mxu0 %v2716
        %5167 = vmatprep.subr.bf16.mxu0 %v2709
        %5168 = vmatpush1.bf16.msra.mxu0 %v2708
        %5169 = vmatprep.subr.bf16.mxu0 %v2829
        %5170 = vmatpush2.bf16.msra.mxu0 %v2828
        %5171 = vmatprep.subr.bf16.mxu0 %v2821
        %5172 = vmatpush2.bf16.msra.mxu0 %v2820
        %5173 = vmatprep.subr.bf16.mxu0 %v2813
        %5174 = vmatpush2.bf16.msra.mxu0 %v2812
        %5175 = vmatprep.subr.bf16.mxu0 %v2805
        %5176 = vmatpush2.bf16.msra.mxu0 %v2804
        %5177 = vmatprep.subr.bf16.mxu0 %v2797
        %5178 = vmatpush2.bf16.msra.mxu0 %v2796
        %5179 = vmatprep.subr.bf16.mxu0 %v2789
        %5180 = vmatpush2.bf16.msra.mxu0 %v2788
        %5181 = vmatprep.subr.bf16.mxu0 %v2781
        %5182 = vmatpush2.bf16.msra.mxu0 %v2780
        %5183 = vmatprep.subr.bf16.mxu0 %v2773
        %5184 = vmatpush2.bf16.msra.mxu0 %v2772
        %5185 = vmatprep.mubr.bf16.mxu0 %v2933
        %5186 = vmatmul.mubr.bf16.gmra.mxu0 %v2932
        %v5187 = vpop.f32.mrf.mxu0
        %v5188 = vadd.f32 %v5145, %v5187
        %v5189 = vpop.f32.mrf.mxu0
        %v5190 = vadd.f32 %v5147, %v5189
        %v5191 = vpop.f32.mrf.mxu0
        %v5192 = vadd.f32 %v5149, %v5191
        %v5193 = vpop.f32.mrf.mxu0
        %v5194 = vadd.f32 %v5151, %v5193
        %5195 = vdwg.mxu0
        %v5196 = vld [vmem:[%s260] sm:$0xff]
        %v5198 = vlaneseq
        %v5199 = vshrl.u32 %v5198, 7
        %v5200 = vsub.s32 0, %v5199
        %v5201 = vrot.slane %v5196, %v5200
        %v5202 = vlaneseq
        %v5203 = vshrl.u32 %v5202, 7
        %v5204 = vsub.s32 1, %v5203
        %v5205 = vrot.slane %v5196, %v5204
        %v5206 = vlaneseq
        %v5207 = vshrl.u32 %v5206, 7
        %v5208 = vsub.s32 2, %v5207
        %v5209 = vrot.slane %v5196, %v5208
        %v5210 = vlaneseq
        %v5211 = vshrl.u32 %v5210, 7
        %v5212 = vsub.s32 3, %v5211
        %v5213 = vrot.slane %v5196, %v5212
        %v5214 = vlaneseq
        %v5215 = vshrl.u32 %v5214, 7
        %v5216 = vsub.s32 4, %v5215
        %v5217 = vrot.slane %v5196, %v5216
        %v5218 = vlaneseq
        %v5219 = vshrl.u32 %v5218, 7
        %v5220 = vsub.s32 5, %v5219
        %v5221 = vrot.slane %v5196, %v5220
        %v5222 = vlaneseq
        %v5223 = vshrl.u32 %v5222, 7
        %v5224 = vsub.s32 6, %v5223
        %v5225 = vrot.slane %v5196, %v5224
        %v5226 = vlaneseq
        %v5227 = vshrl.u32 %v5226, 7
        %v5228 = vsub.s32 7, %v5227
        %v5229 = vrot.slane %v5196, %v5228
        %v5238 = vmul.f32 %v3511, %v5201
        %v5239 = vmul.f32 %v3513, %v5205
        %v5240 = vmul.f32 %v4070, %v5209
        %v5241 = vmul.f32 %v4072, %v5213
        %v5242 = vmul.f32 %v4629, %v5217
        %v5243 = vmul.f32 %v4631, %v5221
        %v5244 = vmul.f32 %v5188, %v5225
        %v5245 = vmul.f32 %v5190, %v5229
        %v5246 = vmul.f32 %v3515, %v5201
        %v5247 = vmul.f32 %v3517, %v5205
        %v5248 = vmul.f32 %v4074, %v5209
        %v5249 = vmul.f32 %v4076, %v5213
        %v5250 = vmul.f32 %v4633, %v5217
        %v5251 = vmul.f32 %v4635, %v5221
        %v5252 = vmul.f32 %v5192, %v5225
        %v5253 = vmul.f32 %v5194, %v5229
        %v5254 = vld [vmem:[%s269] sm:$0xff]
        %v5256 = vlaneseq
        %v5257 = vshrl.u32 %v5256, 7
        %v5258 = vsub.s32 0, %v5257
        %v5259 = vrot.slane %v5254, %v5258
        %v5260 = vlaneseq
        %v5261 = vshrl.u32 %v5260, 7
        %v5262 = vsub.s32 1, %v5261
        %v5263 = vrot.slane %v5254, %v5262
        %v5264 = vlaneseq
        %v5265 = vshrl.u32 %v5264, 7
        %v5266 = vsub.s32 2, %v5265
        %v5267 = vrot.slane %v5254, %v5266
        %v5268 = vlaneseq
        %v5269 = vshrl.u32 %v5268, 7
        %v5270 = vsub.s32 3, %v5269
        %v5271 = vrot.slane %v5254, %v5270
        %v5272 = vlaneseq
        %v5273 = vshrl.u32 %v5272, 7
        %v5274 = vsub.s32 4, %v5273
        %v5275 = vrot.slane %v5254, %v5274
        %v5276 = vlaneseq
        %v5277 = vshrl.u32 %v5276, 7
        %v5278 = vsub.s32 5, %v5277
        %v5279 = vrot.slane %v5254, %v5278
        %v5280 = vlaneseq
        %v5281 = vshrl.u32 %v5280, 7
        %v5282 = vsub.s32 6, %v5281
        %v5283 = vrot.slane %v5254, %v5282
        %v5284 = vlaneseq
        %v5285 = vshrl.u32 %v5284, 7
        %v5286 = vsub.s32 7, %v5285
        %v5287 = vrot.slane %v5254, %v5286
        %v5296 = vadd.f32 %v5238, %v5259
        %v5297 = vadd.f32 %v5239, %v5263
        %v5298 = vadd.f32 %v5240, %v5267
        %v5299 = vadd.f32 %v5241, %v5271
        %v5300 = vadd.f32 %v5242, %v5275
        %v5301 = vadd.f32 %v5243, %v5279
        %v5302 = vadd.f32 %v5244, %v5283
        %v5303 = vadd.f32 %v5245, %v5287
        %v5304 = vadd.f32 %v5246, %v5259
        %v5305 = vadd.f32 %v5247, %v5263
        %v5306 = vadd.f32 %v5248, %v5267
        %v5307 = vadd.f32 %v5249, %v5271
        %v5308 = vadd.f32 %v5250, %v5275
        %v5309 = vadd.f32 %v5251, %v5279
        %v5310 = vadd.f32 %v5252, %v5283
        %v5311 = vadd.f32 %v5253, %v5287
        %v5312 = vpack.c.bf16 %v5304, %v5296
        %v5313 = vpack.c.bf16 %v5305, %v5297
        %v5314 = vpack.c.bf16 %v5306, %v5298
        %v5315 = vpack.c.bf16 %v5307, %v5299
        %v5316 = vpack.c.bf16 %v5308, %v5300
        %v5317 = vpack.c.bf16 %v5309, %v5301
        %v5318 = vpack.c.bf16 %v5310, %v5302
        %v5319 = vpack.c.bf16 %v5311, %v5303
        %v5328 = vunpack.c.l.b16 %v5312
        %v5329 = vunpack.c.l.b16 %v5313
        %v5330 = vunpack.c.l.b16 %v5314
        %v5331 = vunpack.c.l.b16 %v5315
        %v5332 = vunpack.c.l.b16 %v5316
        %v5333 = vunpack.c.l.b16 %v5317
        %v5334 = vunpack.c.l.b16 %v5318
        %v5335 = vunpack.c.l.b16 %v5319
        %v5336 = vunpack.c.h.b16 %v5312
        %v5337 = vunpack.c.h.b16 %v5313
        %v5338 = vunpack.c.h.b16 %v5314
        %v5339 = vunpack.c.h.b16 %v5315
        %v5340 = vunpack.c.h.b16 %v5316
        %v5341 = vunpack.c.h.b16 %v5317
        %v5342 = vunpack.c.h.b16 %v5318
        %v5343 = vunpack.c.h.b16 %v5319
        %v5344 = vpack.c.b16 %v5329, %v5328
        %v5345 = vpack.c.b16 %v5331, %v5330
        %v5346 = vpack.c.b16 %v5333, %v5332
        %v5347 = vpack.c.b16 %v5335, %v5334
        %v5348 = vpack.c.b16 %v5337, %v5336
        %v5349 = vpack.c.b16 %v5339, %v5338
        %v5350 = vpack.c.b16 %v5341, %v5340
        %v5351 = vpack.c.b16 %v5343, %v5342
        %5360 = vst [vmem:[%s303] sm:$0xff] %v5344
        %5361 = vst [vmem:[%s303 + $0x8] sm:$0xff] %v5345
        %5362 = vst [vmem:[%s303 + $0x10] sm:$0xff] %v5346
        %5363 = vst [vmem:[%s303 + $0x18] sm:$0xff] %v5347
        %5364 = vst [vmem:[%s303 + $0x20] sm:$0xff] %v5348
        %5365 = vst [vmem:[%s303 + $0x28] sm:$0xff] %v5349
        %5366 = vst [vmem:[%s303 + $0x30] sm:$0xff] %v5350
        %5367 = vst [vmem:[%s303 + $0x38] sm:$0xff] %v5351
        %s5368 = sand.u32 %s132, 1
        %s5369 = scalar_lea.sflag [#allocation4], %s5368
        %s5370 = sand.u32 %s132, 1
        %s5371 = smul.addr %s5370, 64
        %s5372 = scalar_lea.vmem [#allocation10], %s5371
        // Predicated region
        $region53: #{tpu_custom_call.1} parent=35 // pred_check
          %p5373 = pneg %p142
        $region54: #{tpu_custom_call.1} parent=35 // pred_check_branch
          %5375 = sbr.rel (%p5373) target = $region56
        $region55: #{tpu_custom_call.1} parent=35 // pred_region
          %s5376 = smul.u32 8, %s25
          %s5378 = ssub.s32 1024, 1024
          %5379 = vsyncadd %s5369, %s5378
          %s5380 = smul.addr %s5376, 64
          %s5381 = scalar_lea.hbm %s4, %s5380
          %s5382 = sshll.u32 %s5372, 4
          %s5383 = int_to_ptr.vmem [resolvable:$true] %s5382
          %5388 = dma.vmem_to_hbm [thread:$0]  %s5383, 1024, %s5381, %s5369, 512, 1536, 32
        $region56: #{tpu_custom_call.1} parent=35 // pred_fallthru
          _
      $region36: #{tpu_custom_call.1} parent=5 // pred_fallthru
        _
      %p5389 = scmp.le.s32.totalorder 2, %s20
      // Predicated region
      $region57: #{tpu_custom_call.1} parent=5 // pred_check
        %p5390 = pneg %p5389
      $region58: #{tpu_custom_call.1} parent=5 // pred_check_branch
        %5392 = sbr.rel (%p5390) target = $region60
      $region59: #{tpu_custom_call.1} parent=5 // pred_region
        %s5393 = ssub.s32 %s20, 2
        // Predicated region
        $region61: #{tpu_custom_call.1} parent=59 // pred_check
          %p5394 = pneg %p148
        $region62: #{tpu_custom_call.1} parent=59 // pred_check_branch
          %5396 = sbr.rel (%p5394) target = $region64
        $region63: #{tpu_custom_call.1} parent=59 // pred_region
          %s5397 = sand.u32 %s133, 1
          %s5398 = scalar_lea.sflag [#allocation4], %s5397
          %s5399 = sand.u32 %s133, 1
          %s5400 = smul.addr %s5399, 64
          %s5401 = scalar_lea.vmem [#allocation10], %s5400
          %5402 = dma.done %s5398, 1024
        $region64: #{tpu_custom_call.1} parent=59 // pred_fallthru
          _
      $region60: #{tpu_custom_call.1} parent=5 // pred_fallthru
        _
    $region6: #{tpu_custom_call.1} parent=1 // loop_footer
      %s24 = sadd.s32 1, %s20
    $region7: #{tpu_custom_call.1} parent=1 // loop_footer_branch
      %19 = sbr.rel target = $region3
    $region8: #{tpu_custom_call.1} parent=1 // loop_exit
      _
    %5403 = vsyncpa [#allocation3], 1
    %s5404 = scalar_lea.sflag [#allocation3], 1
    %5405 = vsyncpa %s5404, 1
    %5406 = vsyncpa [#allocation6], 1
    %s5407 = scalar_lea.sflag [#allocation6], 1
    %5408 = vsyncpa %s5407, 1
    %5409 = vsyncpa [#allocation9], 1
    %s5410 = scalar_lea.sflag [#allocation9], 1
    %5411 = vsyncpa %s5410, 1
    %5412 = vsyncpa [#allocation4], 1
    %s5413 = scalar_lea.sflag [#allocation4], 1
    %5414 = vsyncpa %s5413, 1

</llo_original>
